<compile_context>
chip_gen: v5e
topology: v5e:2x2
jax: 0.10.0
libtpu: 0.0.40
codegen_flags: <defaults>
</compile_context>

<pallas_src>
import jax
import jax.numpy as jnp
from jax.experimental import pallas as pl
from jax.experimental.pallas import tpu as pltpu

LANE = 128                  # TPU vreg lane width; out-channel dim padded to this
MM_DTYPE = jnp.bfloat16     # MXU operand dtype (accumulation stays f32)
GN_EPS = 1e-5               # matches torch.nn.GroupNorm default


def _round_up(x, m):
    return ((x + m - 1) // m) * m


# ------------------------------ fused kernel -------------------------------


def _make_conv_block_kernel(H, W, stride, in_c, out_c, Cp, cpg, has_skip):
    Ho, Wo = H // stride, W // stride
    Mo = Ho * Wo
    inv_count = 1.0 / float(Mo * cpg)

    def _zero_halo(xp_ref):
        # Zero only the 1-pixel border; the interior is fully rewritten below.
        R, C, cc = xp_ref.shape
        zrow = jnp.zeros((1, C, cc), xp_ref.dtype)
        zcol = jnp.zeros((R - 2, 1, cc), xp_ref.dtype)
        xp_ref[pl.ds(0, 1), :, :] = zrow
        xp_ref[pl.ds(R - 1, 1), :, :] = zrow
        xp_ref[pl.ds(1, R - 2), pl.ds(0, 1), :] = zcol
        xp_ref[pl.ds(1, R - 2), pl.ds(C - 1, 1), :] = zcol

    def _conv3x3(xp_ref, rows, cols, s, src, w_ref):
        """'same' 3x3 conv (stride s) as 9 per-tap MXU dots, f32 accumulation.

        xp_ref: (rows+2, cols+2, cin) VMEM scratch (halo zeroed here)
        src:    (rows, cols, cin) f32 input value
        w_ref:  (9, cin, Cp) bf16 weights, taps ordered (dy, dx)
        returns (rows//s * cols//s, Cp) f32
        """
        ro, co = rows // s, cols // s
        cin = src.shape[-1]
        _zero_halo(xp_ref)
        xp_ref[pl.ds(1, rows), pl.ds(1, cols), :] = src
        acc = jnp.zeros((ro * co, Cp), jnp.float32)
        t = 0
        for dy in range(3):
            for dx in range(3):
                if s == 1:
                    tap = xp_ref[pl.ds(dy, rows), pl.ds(dx, cols), :]
                else:  # read only the stride-s output positions
                    tap = xp_ref[pl.ds(dy, ro, stride=s),
                                 pl.ds(dx, co, stride=s), :]
                tap = tap.reshape(ro * co, cin).astype(MM_DTYPE)
                acc = acc + jnp.dot(tap, w_ref[t],
                                    preferred_element_type=jnp.float32)
                t += 1
        return acc

    def kernel(*refs):
        if has_skip:
            (x_ref, w1_ref, g1_ref, b1_ref, w2_ref, g2_ref, b2_ref,
             gm_ref, gmt_ref, ws_ref, gs_ref, bs_ref,
             o_ref, xp1_ref, xp2_ref) = refs
        else:
            (x_ref, w1_ref, g1_ref, b1_ref, w2_ref, g2_ref, b2_ref,
             gm_ref, gmt_ref, o_ref, xp1_ref, xp2_ref) = refs

        gm = gm_ref[...]      # (Cp, GP) one-hot channel -> group
        gmt = gmt_ref[...]    # (GP, Cp)

        def group_norm(y, gamma, beta):
            # y: (Mo, Cp) f32.  Group stats via two stacked lane-dense matmuls.
            stats = jnp.concatenate(
                [jnp.sum(y, axis=0, keepdims=True),
                 jnp.sum(y * y, axis=0, keepdims=True)], axis=0)      # (2, Cp)
            stats_g = jnp.dot(stats, gm,
                              preferred_element_type=jnp.float32) * inv_count
            mean_g = stats_g[0:1]                                     # (1, GP)
            var_g = jnp.maximum(stats_g[1:2] - mean_g * mean_g, 0.0)
            inv_std_g = jax.lax.rsqrt(var_g + GN_EPS)
            back = jnp.dot(jnp.concatenate([mean_g, inv_std_g], axis=0), gmt,
                           preferred_element_type=jnp.float32)        # (2, Cp)
            scale = gamma * back[1:2]
            shift = beta - back[0:1] * scale
            return y * scale + shift

        x3 = x_ref[0]                                    # (H, W, in_c) f32

        # conv1 (stride handled by strided tap reads) -> GN1 -> ReLU
        y = _conv3x3(xp1_ref, H, W, stride, x3, w1_ref)  # (Mo, Cp)
        y = jnp.maximum(group_norm(y, g1_ref[...], b1_ref[...]), 0.0)

        # conv2 -> GN2
        z = _conv3x3(xp2_ref, Ho, Wo, 1, y.reshape(Ho, Wo, Cp), w2_ref)
        z = group_norm(z, g2_ref[...], b2_ref[...])

        # skip branch: (1x1 conv stride s + GN) or identity
        if stride == 2:
            # reuse the already-populated conv1 scratch for the strided read
            xs3 = xp1_ref[pl.ds(1, Ho, stride=2), pl.ds(1, Wo, stride=2), :]
        else:
            xs3 = x3
        xs = xs3.reshape(Mo, in_c)
        if has_skip:
            s = jnp.dot(xs.astype(MM_DTYPE), ws_ref[...],
                        preferred_element_type=jnp.float32)           # (Mo, Cp)
            s = group_norm(s, gs_ref[...], bs_ref[...])
            out = jnp.maximum(z + s, 0.0)[:, :out_c]
        else:
            out = jnp.maximum(z[:, :out_c] + xs, 0.0)    # in_c == out_c here
        o_ref[0] = out.reshape(Ho, Wo, out_c)

    return kernel


# ------------------------------ python wrapper ------------------------------


def conv_block_forward(x_nchw, params, *, groups=8, downsample=False):
    """ConvBlock.forward (NCHW in / NCHW out) as one fused Pallas TPU kernel."""
    N, in_c, H, W = x_nchw.shape
    out_c = params["w1"].shape[-1]
    stride = 2 if downsample else 1
    assert out_c % groups == 0
    assert groups <= LANE
    assert H % stride == 0 and W % stride == 0
    Ho, Wo = H // stride, W // stride
    cpg = out_c // groups
    Cp = _round_up(out_c, LANE)            # padded output-channel lane width
    GP = LANE                              # padded group axis (groups <= 128)
    has_skip = params["skip_w"] is not None
    if not has_skip:
        assert in_c == out_c               # identity skip requires matching C

    # ---- MXU-friendly parameter views (tiny, done per call) ----
    def pad_w3x3(w, k_pad):                # (3,3,ci,co) -> (9, k_pad, Cp) bf16
        kh, kw, ci, co = w.shape
        wp = jnp.zeros((kh * kw, k_pad, Cp), jnp.float32)
        wp = wp.at[:, :ci, :co].set(w.reshape(kh * kw, ci, co))
        return wp.astype(MM_DTYPE)

    def pad_vec(v):                        # (co,) -> (1, Cp) f32
        return jnp.zeros((1, Cp), jnp.float32).at[0, :v.shape[0]].set(v)

    w1p = pad_w3x3(params["w1"], in_c)                    # (9, in_c, Cp)
    w2p = pad_w3x3(params["w2"], Cp)                      # (9, Cp,   Cp)
    g1p, b1p = pad_vec(params["gn1_w"]), pad_vec(params["gn1_b"])
    g2p, b2p = pad_vec(params["gn2_w"]), pad_vec(params["gn2_b"])

    # one-hot channel->group matrix for matmul-based GroupNorm statistics
    c_idx = jnp.arange(Cp)
    g_idx = jnp.arange(GP)
    gm = (((c_idx[:, None] // cpg) == g_idx[None, :])
          & (c_idx[:, None] < out_c)).astype(jnp.float32)  # (Cp, GP)
    gmt = gm.T                                             # (GP, Cp)

    extra_in, extra_specs = [], []
    if has_skip:
        ws = params["skip_w"].reshape(in_c, out_c)
        wsp = (jnp.zeros((in_c, Cp), jnp.float32)
               .at[:, :out_c].set(ws).astype(MM_DTYPE))
        extra_in = [wsp, pad_vec(params["skip_gn_w"]),
                    pad_vec(params["skip_gn_b"])]
        extra_specs = [pl.BlockSpec((in_c, Cp), lambda n: (0, 0)),
                       pl.BlockSpec((1, Cp), lambda n: (0, 0)),
                       pl.BlockSpec((1, Cp), lambda n: (0, 0))]

    # NCHW -> NHWC; channels stay UNPADDED in HBM (padding happens only on the
    # weight/out-channel side, and spatial halo padding happens in VMEM).
    x_nhwc = jnp.transpose(x_nchw, (0, 2, 3, 1))

    kernel = _make_conv_block_kernel(H, W, stride, in_c, out_c, Cp, cpg,
                                     has_skip)

    out = pl.pallas_call(
        kernel,
        out_shape=jax.ShapeDtypeStruct((N, Ho, Wo, out_c), jnp.float32),
        grid=(N,),
        in_specs=[
            pl.BlockSpec((1, H, W, in_c), lambda n: (n, 0, 0, 0)),
            pl.BlockSpec((9, in_c, Cp), lambda n: (0, 0, 0)),
            pl.BlockSpec((1, Cp), lambda n: (0, 0)),
            pl.BlockSpec((1, Cp), lambda n: (0, 0)),
            pl.BlockSpec((9, Cp, Cp), lambda n: (0, 0, 0)),
            pl.BlockSpec((1, Cp), lambda n: (0, 0)),
            pl.BlockSpec((1, Cp), lambda n: (0, 0)),
            pl.BlockSpec((Cp, GP), lambda n: (0, 0)),
            pl.BlockSpec((GP, Cp), lambda n: (0, 0)),
        ] + extra_specs,
        out_specs=pl.BlockSpec((1, Ho, Wo, out_c), lambda n: (n, 0, 0, 0)),
        scratch_shapes=[
            pltpu.VMEM((H + 2, W + 2, in_c), jnp.float32),   # conv1 padded in
            pltpu.VMEM((Ho + 2, Wo + 2, Cp), jnp.float32),   # conv2 padded in
        ],
        compiler_params=pltpu.CompilerParams(
            dimension_semantics=("parallel",),
            vmem_limit_bytes=32 * 1024 * 1024),
    )(x_nhwc, w1p, g1p, b1p, w2p, g2p, b2p, gm, gmt, *extra_in)

    # NHWC -> NCHW only at the module boundary (chained blocks should stay NHWC).
    return jnp.transpose(out, (0, 3, 1, 2))


# ------------------------------ params / reference ---------------------------


def init_conv_block_params(key, in_c, out_c, groups=8, downsample=False):
    ks = jax.random.split(key, 9)

    def conv_w(k, kh, kw, ci, co):
        fan_in = ci * kh * kw
        return (jax.random.normal(k, (kh, kw, ci, co), jnp.float32)
                * (2.0 / fan_in) ** 0.5)

    has_skip = (in_c != out_c) or downsample
    return {
        "w1": conv_w(ks[0], 3, 3, in_c, out_c),
        "gn1_w": 1.0 + 0.1 * jax.random.normal(ks[1], (out_c,), jnp.float32),
        "gn1_b": 0.1 * jax.random.normal(ks[2], (out_c,), jnp.float32),
        "w2": conv_w(ks[3], 3, 3, out_c, out_c),
        "gn2_w": 1.0 + 0.1 * jax.random.normal(ks[4], (out_c,), jnp.float32),
        "gn2_b": 0.1 * jax.random.normal(ks[5], (out_c,), jnp.float32),
        "skip_w": conv_w(ks[6], 1, 1, in_c, out_c) if has_skip else None,
        "skip_gn_w": (1.0 + 0.1 * jax.random.normal(ks[7], (out_c,), jnp.float32))
                     if has_skip else None,
        "skip_gn_b": (0.1 * jax.random.normal(ks[8], (out_c,), jnp.float32))
                     if has_skip else None,
    }


def _reference_conv_block(x_nchw, params, groups, downsample):
    stride = 2 if downsample else 1
    x = jnp.transpose(x_nchw, (0, 2, 3, 1))

    def conv(v, w, s, pad):
        return jax.lax.conv_general_dilated(
            v, w, window_strides=(s, s), padding=((pad, pad), (pad, pad)),
            dimension_numbers=("NHWC", "HWIO", "NHWC"))

    def gn(v, gamma, beta):
        n, h, w_, c = v.shape
        vg = v.reshape(n, h, w_, groups, c // groups)
        mean = vg.mean(axis=(1, 2, 4), keepdims=True)
        var = vg.var(axis=(1, 2, 4), keepdims=True)
        vg = (vg - mean) * jax.lax.rsqrt(var + GN_EPS)
        v = vg.reshape(n, h, w_, c)
        return v * gamma.reshape(1, 1, 1, c) + beta.reshape(1, 1, 1, c)

    out = jnp.maximum(gn(conv(x, params["w1"], stride, 1),
                         params["gn1_w"], params["gn1_b"]), 0.0)
    out = gn(conv(out, params["w2"], 1, 1), params["gn2_w"], params["gn2_b"])
    if params["skip_w"] is not None:
        idn = gn(conv(x, params["skip_w"], stride, 0),
                 params["skip_gn_w"], params["skip_gn_b"])
    else:
        idn = x
    out = jnp.maximum(out + idn, 0.0)
    return jnp.transpose(out, (0, 3, 1, 2))


# ---------------------------------- main ------------------------------------


if __name__ == "__main__":
    key = jax.random.PRNGKey(0)
    k_x1, k_x2, k_p1, k_p2, k_p3 = jax.random.split(key, 5)

    N, H, W = 2, 16, 16
    groups = 8

    # (in_c, out_c, downsample, input key, param key)
    cases = [
        (4, 32, False, k_x1, k_p1),    # projection skip (in_c != out_c), stride 1
        (4, 32, True, k_x1, k_p2),     # projection skip + stride-2 downsample
        (32, 32, False, k_x2, k_p3),   # identity skip
    ]
    for in_c, out_c, downsample, kx, kp in cases:
        x = jax.random.normal(kx, (N, in_c, H, W), jnp.float32)
        params = init_conv_block_params(kp, in_c, out_c, groups, downsample)

        out = jax.block_until_ready(
            conv_block_forward(x, params, groups=groups, downsample=downsample))
        s = 2 if downsample else 1
        assert out.shape == (N, out_c, H // s, W // s), out.shape

        ref = jax.block_until_ready(
            _reference_conv_block(x, params, groups, downsample))
        # bf16 MXU operands (with f32 accumulation) -> slightly looser tolerance
        assert jnp.allclose(out, ref, atol=3e-2, rtol=3e-2), (
            in_c, out_c, downsample, float(jnp.max(jnp.abs(out - ref))))

    print("KERNEL_OK")
</pallas_src>

<mosaic_0001>
module attributes {stable_mosaic.version = 11 : i64} {
  func.func @kernel(%arg0: i32, %arg1: memref<1x16x16x4xf32, #tpu.memory_space<vmem>>, %arg2: memref<9x4x128xbf16, #tpu.memory_space<vmem>>, %arg3: memref<1x128xf32, #tpu.memory_space<vmem>>, %arg4: memref<1x128xf32, #tpu.memory_space<vmem>>, %arg5: memref<9x128x128xbf16, #tpu.memory_space<vmem>>, %arg6: memref<1x128xf32, #tpu.memory_space<vmem>>, %arg7: memref<1x128xf32, #tpu.memory_space<vmem>>, %arg8: memref<128x128xf32, #tpu.memory_space<vmem>>, %arg9: memref<128x128xf32, #tpu.memory_space<vmem>>, %arg10: memref<4x128xbf16, #tpu.memory_space<vmem>>, %arg11: memref<1x128xf32, #tpu.memory_space<vmem>>, %arg12: memref<1x128xf32, #tpu.memory_space<vmem>>, %arg13: memref<1x16x16x32xf32, #tpu.memory_space<vmem>>, %arg14: memref<18x18x4xf32, #tpu.memory_space<vmem>>, %arg15: memref<18x18x128xf32, #tpu.memory_space<vmem>>) attributes {dimension_semantics = [#tpu.dimension_semantics<parallel>], iteration_bounds = array<i64: 2>, scalar_prefetch = 0 : i64, scratch_operands = 2 : i64, tpu.core_type = #tpu.core_type<tc>, window_params = [{transform_indices = @transform_0, window_bounds = array<i64: 1, 16, 16, 4>}, {pipeline_mode = #tpu.pipeline_mode<synchronous>, transform_indices = @transform_1, window_bounds = array<i64: 9, 4, 128>}, {pipeline_mode = #tpu.pipeline_mode<synchronous>, transform_indices = @transform_2, window_bounds = array<i64: 1, 128>}, {pipeline_mode = #tpu.pipeline_mode<synchronous>, transform_indices = @transform_3, window_bounds = array<i64: 1, 128>}, {pipeline_mode = #tpu.pipeline_mode<synchronous>, transform_indices = @transform_4, window_bounds = array<i64: 9, 128, 128>}, {pipeline_mode = #tpu.pipeline_mode<synchronous>, transform_indices = @transform_5, window_bounds = array<i64: 1, 128>}, {pipeline_mode = #tpu.pipeline_mode<synchronous>, transform_indices = @transform_6, window_bounds = array<i64: 1, 128>}, {pipeline_mode = #tpu.pipeline_mode<synchronous>, transform_indices = @transform_7, window_bounds = array<i64: 128, 128>}, {pipeline_mode = #tpu.pipeline_mode<synchronous>, transform_indices = @transform_8, window_bounds = array<i64: 128, 128>}, {pipeline_mode = #tpu.pipeline_mode<synchronous>, transform_indices = @transform_9, window_bounds = array<i64: 4, 128>}, {pipeline_mode = #tpu.pipeline_mode<synchronous>, transform_indices = @transform_10, window_bounds = array<i64: 1, 128>}, {pipeline_mode = #tpu.pipeline_mode<synchronous>, transform_indices = @transform_11, window_bounds = array<i64: 1, 128>}, {transform_indices = @transform_12, window_bounds = array<i64: 1, 16, 16, 32>}]} {
    %c0 = arith.constant 0 : index
    %c0_0 = arith.constant 0 : index
    %0 = vector.load %arg8[%c0, %c0_0] : memref<128x128xf32, #tpu.memory_space<vmem>>, vector<128x128xf32>
    %c0_1 = arith.constant 0 : index
    %c0_2 = arith.constant 0 : index
    %1 = vector.load %arg9[%c0_1, %c0_2] : memref<128x128xf32, #tpu.memory_space<vmem>>, vector<128x128xf32>
    %c0_3 = arith.constant 0 : index
    %c0_4 = arith.constant 0 : index
    %c0_5 = arith.constant 0 : index
    %c0_6 = arith.constant 0 : index
    %2 = vector.load %arg1[%c0_3, %c0_4, %c0_5, %c0_6] : memref<1x16x16x4xf32, #tpu.memory_space<vmem>>, vector<1x16x16x4xf32>
    %3 = vector.shape_cast %2 : vector<1x16x16x4xf32> to vector<16x16x4xf32>
    %cst = arith.constant 0.000000e+00 : f32
    %4 = vector.broadcast %cst : f32 to vector<1x18x4xf32>
    %cst_7 = arith.constant 0.000000e+00 : f32
    %5 = vector.broadcast %cst_7 : f32 to vector<16x1x4xf32>
    %c0_8 = arith.constant 0 : index
    %c0_9 = arith.constant 0 : index
    %c0_10 = arith.constant 0 : index
    %6 = vector.load %arg14[%c0_8, %c0_9, %c0_10] : memref<18x18x4xf32, #tpu.memory_space<vmem>>, vector<1x18x4xf32>
    tpu.vector_store %arg14[%c0_8, %c0_9, %c0_10], %4 {strides = array<i32>} : memref<18x18x4xf32, #tpu.memory_space<vmem>>, vector<1x18x4xf32>,
    %c17 = arith.constant 17 : index
    %c0_11 = arith.constant 0 : index
    %c0_12 = arith.constant 0 : index
    %7 = vector.load %arg14[%c17, %c0_11, %c0_12] : memref<18x18x4xf32, #tpu.memory_space<vmem>>, vector<1x18x4xf32>
    tpu.vector_store %arg14[%c17, %c0_11, %c0_12], %4 {strides = array<i32>} : memref<18x18x4xf32, #tpu.memory_space<vmem>>, vector<1x18x4xf32>,
    %c1 = arith.constant 1 : index
    %c0_13 = arith.constant 0 : index
    %c0_14 = arith.constant 0 : index
    %8 = vector.load %arg14[%c1, %c0_13, %c0_14] : memref<18x18x4xf32, #tpu.memory_space<vmem>>, vector<16x1x4xf32>
    tpu.vector_store %arg14[%c1, %c0_13, %c0_14], %5 {strides = array<i32>} : memref<18x18x4xf32, #tpu.memory_space<vmem>>, vector<16x1x4xf32>,
    %c1_15 = arith.constant 1 : index
    %c17_16 = arith.constant 17 : index
    %c0_17 = arith.constant 0 : index
    %9 = vector.load %arg14[%c1_15, %c17_16, %c0_17] : memref<18x18x4xf32, #tpu.memory_space<vmem>>, vector<16x1x4xf32>
    tpu.vector_store %arg14[%c1_15, %c17_16, %c0_17], %5 {strides = array<i32>} : memref<18x18x4xf32, #tpu.memory_space<vmem>>, vector<16x1x4xf32>,
    %c1_18 = arith.constant 1 : index
    %c1_19 = arith.constant 1 : index
    %c0_20 = arith.constant 0 : index
    %10 = vector.load %arg14[%c1_18, %c1_19, %c0_20] : memref<18x18x4xf32, #tpu.memory_space<vmem>>, vector<16x16x4xf32>
    tpu.vector_store %arg14[%c1_18, %c1_19, %c0_20], %3 {strides = array<i32>} : memref<18x18x4xf32, #tpu.memory_space<vmem>>, vector<16x16x4xf32>,
    %cst_21 = arith.constant 0.000000e+00 : f32
    %11 = vector.broadcast %cst_21 : f32 to vector<256x128xf32>
    %c0_22 = arith.constant 0 : index
    %c0_23 = arith.constant 0 : index
    %c0_24 = arith.constant 0 : index
    %12 = vector.load %arg14[%c0_22, %c0_23, %c0_24] : memref<18x18x4xf32, #tpu.memory_space<vmem>>, vector<16x16x4xf32>
    %13 = vector.shape_cast %12 : vector<16x16x4xf32> to vector<256x4xf32>
    %14 = arith.truncf %13 : vector<256x4xf32> to vector<256x4xbf16>
    %c0_25 = arith.constant 0 : index
    %c0_26 = arith.constant 0 : index
    %c0_27 = arith.constant 0 : index
    %15 = vector.load %arg2[%c0_25, %c0_26, %c0_27] : memref<9x4x128xbf16, #tpu.memory_space<vmem>>, vector<1x4x128xbf16>
    %16 = vector.shape_cast %15 : vector<1x4x128xbf16> to vector<4x128xbf16>
    %cst_28 = arith.constant dense<0.000000e+00> : vector<256x128xf32>
    %17 = tpu.matmul %14, %16, %cst_28 {dimension_numbers = #tpu.dot_dimension_numbers<[1], [0], [0], [1], [0, 0, 1, 1], [], []>} : vector<256x4xbf16>, vector<4x128xbf16>, vector<256x128xf32> -> vector<256x128xf32>
    %18 = arith.addf %11, %17 : vector<256x128xf32>
    %c0_29 = arith.constant 0 : index
    %c1_30 = arith.constant 1 : index
    %c0_31 = arith.constant 0 : index
    %19 = vector.load %arg14[%c0_29, %c1_30, %c0_31] : memref<18x18x4xf32, #tpu.memory_space<vmem>>, vector<16x16x4xf32>
    %20 = vector.shape_cast %19 : vector<16x16x4xf32> to vector<256x4xf32>
    %21 = arith.truncf %20 : vector<256x4xf32> to vector<256x4xbf16>
    %c1_32 = arith.constant 1 : index
    %c0_33 = arith.constant 0 : index
    %c0_34 = arith.constant 0 : index
    %22 = vector.load %arg2[%c1_32, %c0_33, %c0_34] : memref<9x4x128xbf16, #tpu.memory_space<vmem>>, vector<1x4x128xbf16>
    %23 = vector.shape_cast %22 : vector<1x4x128xbf16> to vector<4x128xbf16>
    %cst_35 = arith.constant dense<0.000000e+00> : vector<256x128xf32>
    %24 = tpu.matmul %21, %23, %cst_35 {dimension_numbers = #tpu.dot_dimension_numbers<[1], [0], [0], [1], [0, 0, 1, 1], [], []>} : vector<256x4xbf16>, vector<4x128xbf16>, vector<256x128xf32> -> vector<256x128xf32>
    %25 = arith.addf %18, %24 : vector<256x128xf32>
    %c0_36 = arith.constant 0 : index
    %c2 = arith.constant 2 : index
    %c0_37 = arith.constant 0 : index
    %26 = vector.load %arg14[%c0_36, %c2, %c0_37] : memref<18x18x4xf32, #tpu.memory_space<vmem>>, vector<16x16x4xf32>
    %27 = vector.shape_cast %26 : vector<16x16x4xf32> to vector<256x4xf32>
    %28 = arith.truncf %27 : vector<256x4xf32> to vector<256x4xbf16>
    %c2_38 = arith.constant 2 : index
    %c0_39 = arith.constant 0 : index
    %c0_40 = arith.constant 0 : index
    %29 = vector.load %arg2[%c2_38, %c0_39, %c0_40] : memref<9x4x128xbf16, #tpu.memory_space<vmem>>, vector<1x4x128xbf16>
    %30 = vector.shape_cast %29 : vector<1x4x128xbf16> to vector<4x128xbf16>
    %cst_41 = arith.constant dense<0.000000e+00> : vector<256x128xf32>
    %31 = tpu.matmul %28, %30, %cst_41 {dimension_numbers = #tpu.dot_dimension_numbers<[1], [0], [0], [1], [0, 0, 1, 1], [], []>} : vector<256x4xbf16>, vector<4x128xbf16>, vector<256x128xf32> -> vector<256x128xf32>
    %32 = arith.addf %25, %31 : vector<256x128xf32>
    %c1_42 = arith.constant 1 : index
    %c0_43 = arith.constant 0 : index
    %c0_44 = arith.constant 0 : index
    %33 = vector.load %arg14[%c1_42, %c0_43, %c0_44] : memref<18x18x4xf32, #tpu.memory_space<vmem>>, vector<16x16x4xf32>
    %34 = vector.shape_cast %33 : vector<16x16x4xf32> to vector<256x4xf32>
    %35 = arith.truncf %34 : vector<256x4xf32> to vector<256x4xbf16>
    %c3 = arith.constant 3 : index
    %c0_45 = arith.constant 0 : index
    %c0_46 = arith.constant 0 : index
    %36 = vector.load %arg2[%c3, %c0_45, %c0_46] : memref<9x4x128xbf16, #tpu.memory_space<vmem>>, vector<1x4x128xbf16>
    %37 = vector.shape_cast %36 : vector<1x4x128xbf16> to vector<4x128xbf16>
    %cst_47 = arith.constant dense<0.000000e+00> : vector<256x128xf32>
    %38 = tpu.matmul %35, %37, %cst_47 {dimension_numbers = #tpu.dot_dimension_numbers<[1], [0], [0], [1], [0, 0, 1, 1], [], []>} : vector<256x4xbf16>, vector<4x128xbf16>, vector<256x128xf32> -> vector<256x128xf32>
    %39 = arith.addf %32, %38 : vector<256x128xf32>
    %c1_48 = arith.constant 1 : index
    %c1_49 = arith.constant 1 : index
    %c0_50 = arith.constant 0 : index
    %40 = vector.load %arg14[%c1_48, %c1_49, %c0_50] : memref<18x18x4xf32, #tpu.memory_space<vmem>>, vector<16x16x4xf32>
    %41 = vector.shape_cast %40 : vector<16x16x4xf32> to vector<256x4xf32>
    %42 = arith.truncf %41 : vector<256x4xf32> to vector<256x4xbf16>
    %c4 = arith.constant 4 : index
    %c0_51 = arith.constant 0 : index
    %c0_52 = arith.constant 0 : index
    %43 = vector.load %arg2[%c4, %c0_51, %c0_52] : memref<9x4x128xbf16, #tpu.memory_space<vmem>>, vector<1x4x128xbf16>
    %44 = vector.shape_cast %43 : vector<1x4x128xbf16> to vector<4x128xbf16>
    %cst_53 = arith.constant dense<0.000000e+00> : vector<256x128xf32>
    %45 = tpu.matmul %42, %44, %cst_53 {dimension_numbers = #tpu.dot_dimension_numbers<[1], [0], [0], [1], [0, 0, 1, 1], [], []>} : vector<256x4xbf16>, vector<4x128xbf16>, vector<256x128xf32> -> vector<256x128xf32>
    %46 = arith.addf %39, %45 : vector<256x128xf32>
    %c1_54 = arith.constant 1 : index
    %c2_55 = arith.constant 2 : index
    %c0_56 = arith.constant 0 : index
    %47 = vector.load %arg14[%c1_54, %c2_55, %c0_56] : memref<18x18x4xf32, #tpu.memory_space<vmem>>, vector<16x16x4xf32>
    %48 = vector.shape_cast %47 : vector<16x16x4xf32> to vector<256x4xf32>
    %49 = arith.truncf %48 : vector<256x4xf32> to vector<256x4xbf16>
    %c5 = arith.constant 5 : index
    %c0_57 = arith.constant 0 : index
    %c0_58 = arith.constant 0 : index
    %50 = vector.load %arg2[%c5, %c0_57, %c0_58] : memref<9x4x128xbf16, #tpu.memory_space<vmem>>, vector<1x4x128xbf16>
    %51 = vector.shape_cast %50 : vector<1x4x128xbf16> to vector<4x128xbf16>
    %cst_59 = arith.constant dense<0.000000e+00> : vector<256x128xf32>
    %52 = tpu.matmul %49, %51, %cst_59 {dimension_numbers = #tpu.dot_dimension_numbers<[1], [0], [0], [1], [0, 0, 1, 1], [], []>} : vector<256x4xbf16>, vector<4x128xbf16>, vector<256x128xf32> -> vector<256x128xf32>
    %53 = arith.addf %46, %52 : vector<256x128xf32>
    %c2_60 = arith.constant 2 : index
    %c0_61 = arith.constant 0 : index
    %c0_62 = arith.constant 0 : index
    %54 = vector.load %arg14[%c2_60, %c0_61, %c0_62] : memref<18x18x4xf32, #tpu.memory_space<vmem>>, vector<16x16x4xf32>
    %55 = vector.shape_cast %54 : vector<16x16x4xf32> to vector<256x4xf32>
    %56 = arith.truncf %55 : vector<256x4xf32> to vector<256x4xbf16>
    %c6 = arith.constant 6 : index
    %c0_63 = arith.constant 0 : index
    %c0_64 = arith.constant 0 : index
    %57 = vector.load %arg2[%c6, %c0_63, %c0_64] : memref<9x4x128xbf16, #tpu.memory_space<vmem>>, vector<1x4x128xbf16>
    %58 = vector.shape_cast %57 : vector<1x4x128xbf16> to vector<4x128xbf16>
    %cst_65 = arith.constant dense<0.000000e+00> : vector<256x128xf32>
    %59 = tpu.matmul %56, %58, %cst_65 {dimension_numbers = #tpu.dot_dimension_numbers<[1], [0], [0], [1], [0, 0, 1, 1], [], []>} : vector<256x4xbf16>, vector<4x128xbf16>, vector<256x128xf32> -> vector<256x128xf32>
    %60 = arith.addf %53, %59 : vector<256x128xf32>
    %c2_66 = arith.constant 2 : index
    %c1_67 = arith.constant 1 : index
    %c0_68 = arith.constant 0 : index
    %61 = vector.load %arg14[%c2_66, %c1_67, %c0_68] : memref<18x18x4xf32, #tpu.memory_space<vmem>>, vector<16x16x4xf32>
    %62 = vector.shape_cast %61 : vector<16x16x4xf32> to vector<256x4xf32>
    %63 = arith.truncf %62 : vector<256x4xf32> to vector<256x4xbf16>
    %c7 = arith.constant 7 : index
    %c0_69 = arith.constant 0 : index
    %c0_70 = arith.constant 0 : index
    %64 = vector.load %arg2[%c7, %c0_69, %c0_70] : memref<9x4x128xbf16, #tpu.memory_space<vmem>>, vector<1x4x128xbf16>
    %65 = vector.shape_cast %64 : vector<1x4x128xbf16> to vector<4x128xbf16>
    %cst_71 = arith.constant dense<0.000000e+00> : vector<256x128xf32>
    %66 = tpu.matmul %63, %65, %cst_71 {dimension_numbers = #tpu.dot_dimension_numbers<[1], [0], [0], [1], [0, 0, 1, 1], [], []>} : vector<256x4xbf16>, vector<4x128xbf16>, vector<256x128xf32> -> vector<256x128xf32>
    %67 = arith.addf %60, %66 : vector<256x128xf32>
    %c2_72 = arith.constant 2 : index
    %c2_73 = arith.constant 2 : index
    %c0_74 = arith.constant 0 : index
    %68 = vector.load %arg14[%c2_72, %c2_73, %c0_74] : memref<18x18x4xf32, #tpu.memory_space<vmem>>, vector<16x16x4xf32>
    %69 = vector.shape_cast %68 : vector<16x16x4xf32> to vector<256x4xf32>
    %70 = arith.truncf %69 : vector<256x4xf32> to vector<256x4xbf16>
    %c8 = arith.constant 8 : index
    %c0_75 = arith.constant 0 : index
    %c0_76 = arith.constant 0 : index
    %71 = vector.load %arg2[%c8, %c0_75, %c0_76] : memref<9x4x128xbf16, #tpu.memory_space<vmem>>, vector<1x4x128xbf16>
    %72 = vector.shape_cast %71 : vector<1x4x128xbf16> to vector<4x128xbf16>
    %cst_77 = arith.constant dense<0.000000e+00> : vector<256x128xf32>
    %73 = tpu.matmul %70, %72, %cst_77 {dimension_numbers = #tpu.dot_dimension_numbers<[1], [0], [0], [1], [0, 0, 1, 1], [], []>} : vector<256x4xbf16>, vector<4x128xbf16>, vector<256x128xf32> -> vector<256x128xf32>
    %74 = arith.addf %67, %73 : vector<256x128xf32>
    %c0_78 = arith.constant 0 : index
    %c0_79 = arith.constant 0 : index
    %75 = vector.load %arg3[%c0_78, %c0_79] : memref<1x128xf32, #tpu.memory_space<vmem>>, vector<1x128xf32>
    %c0_80 = arith.constant 0 : index
    %c0_81 = arith.constant 0 : index
    %76 = vector.load %arg4[%c0_80, %c0_81] : memref<1x128xf32, #tpu.memory_space<vmem>>, vector<1x128xf32>
    %cst_82 = arith.constant dense<0.000000e+00> : vector<128xf32>
    %77 = vector.multi_reduction <add>, %74, %cst_82 [0] : vector<256x128xf32> to vector<128xf32>
    %78 = vector.shape_cast %77 : vector<128xf32> to vector<1x128xf32>
    %79 = arith.mulf %74, %74 : vector<256x128xf32>
    %cst_83 = arith.constant dense<0.000000e+00> : vector<128xf32>
    %80 = vector.multi_reduction <add>, %79, %cst_83 [0] : vector<256x128xf32> to vector<128xf32>
    %81 = vector.shape_cast %80 : vector<128xf32> to vector<1x128xf32>
    %82 = tpu.concatenate %78, %81 in 0 : vector<1x128xf32>, vector<1x128xf32> -> vector<2x128xf32>
    %cst_84 = arith.constant dense<0.000000e+00> : vector<2x128xf32>
    %83 = tpu.matmul %82, %0, %cst_84 {dimension_numbers = #tpu.dot_dimension_numbers<[1], [0], [0], [1], [0, 0, 1, 1], [], []>} : vector<2x128xf32>, vector<128x128xf32>, vector<2x128xf32> -> vector<2x128xf32>
    %cst_85 = arith.constant 9.765625E-4 : f32
    %84 = vector.broadcast %cst_85 : f32 to vector<2x128xf32>
    %85 = arith.mulf %83, %84 : vector<2x128xf32>
    %86 = vector.extract_strided_slice %85 {offsets = [0, 0], sizes = [1, 128], strides = [1, 1]} : vector<2x128xf32> to vector<1x128xf32>
    %87 = vector.extract_strided_slice %85 {offsets = [1, 0], sizes = [1, 128], strides = [1, 1]} : vector<2x128xf32> to vector<1x128xf32>
    %88 = arith.mulf %86, %86 : vector<1x128xf32>
    %89 = arith.subf %87, %88 : vector<1x128xf32>
    %cst_86 = arith.constant 0.000000e+00 : f32
    %90 = vector.broadcast %cst_86 : f32 to vector<1x128xf32>
    %91 = arith.maximumf %89, %90 : vector<1x128xf32>
    %cst_87 = arith.constant 9.99999974E-6 : f32
    %92 = vector.broadcast %cst_87 : f32 to vector<1x128xf32>
    %93 = arith.addf %91, %92 : vector<1x128xf32>
    %94 = math.rsqrt %93 : vector<1x128xf32>
    %95 = tpu.concatenate %86, %94 in 0 : vector<1x128xf32>, vector<1x128xf32> -> vector<2x128xf32>
    %cst_88 = arith.constant dense<0.000000e+00> : vector<2x128xf32>
    %96 = tpu.matmul %95, %1, %cst_88 {dimension_numbers = #tpu.dot_dimension_numbers<[1], [0], [0], [1], [0, 0, 1, 1], [], []>} : vector<2x128xf32>, vector<128x128xf32>, vector<2x128xf32> -> vector<2x128xf32>
    %97 = vector.extract_strided_slice %96 {offsets = [1, 0], sizes = [1, 128], strides = [1, 1]} : vector<2x128xf32> to vector<1x128xf32>
    %98 = arith.mulf %75, %97 : vector<1x128xf32>
    %99 = vector.extract_strided_slice %96 {offsets = [0, 0], sizes = [1, 128], strides = [1, 1]} : vector<2x128xf32> to vector<1x128xf32>
    %100 = arith.mulf %99, %98 : vector<1x128xf32>
    %101 = arith.subf %76, %100 : vector<1x128xf32>
    %102 = vector.broadcast %98 : vector<1x128xf32> to vector<256x128xf32>
    %103 = arith.mulf %74, %102 : vector<256x128xf32>
    %104 = vector.broadcast %101 : vector<1x128xf32> to vector<256x128xf32>
    %105 = arith.addf %103, %104 : vector<256x128xf32>
    %cst_89 = arith.constant 0.000000e+00 : f32
    %106 = vector.broadcast %cst_89 : f32 to vector<256x128xf32>
    %107 = arith.maximumf %105, %106 : vector<256x128xf32>
    %108 = vector.shape_cast %107 : vector<256x128xf32> to vector<16x16x128xf32>
    %cst_90 = arith.constant 0.000000e+00 : f32
    %109 = vector.broadcast %cst_90 : f32 to vector<1x18x128xf32>
    %cst_91 = arith.constant 0.000000e+00 : f32
    %110 = vector.broadcast %cst_91 : f32 to vector<16x1x128xf32>
    %c0_92 = arith.constant 0 : index
    %c0_93 = arith.constant 0 : index
    %c0_94 = arith.constant 0 : index
    %111 = vector.load %arg15[%c0_92, %c0_93, %c0_94] : memref<18x18x128xf32, #tpu.memory_space<vmem>>, vector<1x18x128xf32>
    tpu.vector_store %arg15[%c0_92, %c0_93, %c0_94], %109 {strides = array<i32>} : memref<18x18x128xf32, #tpu.memory_space<vmem>>, vector<1x18x128xf32>,
    %c17_95 = arith.constant 17 : index
    %c0_96 = arith.constant 0 : index
    %c0_97 = arith.constant 0 : index
    %112 = vector.load %arg15[%c17_95, %c0_96, %c0_97] : memref<18x18x128xf32, #tpu.memory_space<vmem>>, vector<1x18x128xf32>
    tpu.vector_store %arg15[%c17_95, %c0_96, %c0_97], %109 {strides = array<i32>} : memref<18x18x128xf32, #tpu.memory_space<vmem>>, vector<1x18x128xf32>,
    %c1_98 = arith.constant 1 : index
    %c0_99 = arith.constant 0 : index
    %c0_100 = arith.constant 0 : index
    %113 = vector.load %arg15[%c1_98, %c0_99, %c0_100] : memref<18x18x128xf32, #tpu.memory_space<vmem>>, vector<16x1x128xf32>
    tpu.vector_store %arg15[%c1_98, %c0_99, %c0_100], %110 {strides = array<i32>} : memref<18x18x128xf32, #tpu.memory_space<vmem>>, vector<16x1x128xf32>,
    %c1_101 = arith.constant 1 : index
    %c17_102 = arith.constant 17 : index
    %c0_103 = arith.constant 0 : index
    %114 = vector.load %arg15[%c1_101, %c17_102, %c0_103] : memref<18x18x128xf32, #tpu.memory_space<vmem>>, vector<16x1x128xf32>
    tpu.vector_store %arg15[%c1_101, %c17_102, %c0_103], %110 {strides = array<i32>} : memref<18x18x128xf32, #tpu.memory_space<vmem>>, vector<16x1x128xf32>,
    %c1_104 = arith.constant 1 : index
    %c1_105 = arith.constant 1 : index
    %c0_106 = arith.constant 0 : index
    %115 = vector.load %arg15[%c1_104, %c1_105, %c0_106] : memref<18x18x128xf32, #tpu.memory_space<vmem>>, vector<16x16x128xf32>
    tpu.vector_store %arg15[%c1_104, %c1_105, %c0_106], %108 {strides = array<i32>} : memref<18x18x128xf32, #tpu.memory_space<vmem>>, vector<16x16x128xf32>,
    %cst_107 = arith.constant 0.000000e+00 : f32
    %116 = vector.broadcast %cst_107 : f32 to vector<256x128xf32>
    %c0_108 = arith.constant 0 : index
    %c0_109 = arith.constant 0 : index
    %c0_110 = arith.constant 0 : index
    %117 = vector.load %arg15[%c0_108, %c0_109, %c0_110] : memref<18x18x128xf32, #tpu.memory_space<vmem>>, vector<16x16x128xf32>
    %118 = vector.shape_cast %117 : vector<16x16x128xf32> to vector<256x128xf32>
    %119 = arith.truncf %118 : vector<256x128xf32> to vector<256x128xbf16>
    %c0_111 = arith.constant 0 : index
    %c0_112 = arith.constant 0 : index
    %c0_113 = arith.constant 0 : index
    %120 = vector.load %arg5[%c0_111, %c0_112, %c0_113] : memref<9x128x128xbf16, #tpu.memory_space<vmem>>, vector<1x128x128xbf16>
    %121 = vector.shape_cast %120 : vector<1x128x128xbf16> to vector<128x128xbf16>
    %cst_114 = arith.constant dense<0.000000e+00> : vector<256x128xf32>
    %122 = tpu.matmul %119, %121, %cst_114 {dimension_numbers = #tpu.dot_dimension_numbers<[1], [0], [0], [1], [0, 0, 1, 1], [], []>} : vector<256x128xbf16>, vector<128x128xbf16>, vector<256x128xf32> -> vector<256x128xf32>
    %123 = arith.addf %116, %122 : vector<256x128xf32>
    %c0_115 = arith.constant 0 : index
    %c1_116 = arith.constant 1 : index
    %c0_117 = arith.constant 0 : index
    %124 = vector.load %arg15[%c0_115, %c1_116, %c0_117] : memref<18x18x128xf32, #tpu.memory_space<vmem>>, vector<16x16x128xf32>
    %125 = vector.shape_cast %124 : vector<16x16x128xf32> to vector<256x128xf32>
    %126 = arith.truncf %125 : vector<256x128xf32> to vector<256x128xbf16>
    %c1_118 = arith.constant 1 : index
    %c0_119 = arith.constant 0 : index
    %c0_120 = arith.constant 0 : index
    %127 = vector.load %arg5[%c1_118, %c0_119, %c0_120] : memref<9x128x128xbf16, #tpu.memory_space<vmem>>, vector<1x128x128xbf16>
    %128 = vector.shape_cast %127 : vector<1x128x128xbf16> to vector<128x128xbf16>
    %cst_121 = arith.constant dense<0.000000e+00> : vector<256x128xf32>
    %129 = tpu.matmul %126, %128, %cst_121 {dimension_numbers = #tpu.dot_dimension_numbers<[1], [0], [0], [1], [0, 0, 1, 1], [], []>} : vector<256x128xbf16>, vector<128x128xbf16>, vector<256x128xf32> -> vector<256x128xf32>
    %130 = arith.addf %123, %129 : vector<256x128xf32>
    %c0_122 = arith.constant 0 : index
    %c2_123 = arith.constant 2 : index
    %c0_124 = arith.constant 0 : index
    %131 = vector.load %arg15[%c0_122, %c2_123, %c0_124] : memref<18x18x128xf32, #tpu.memory_space<vmem>>, vector<16x16x128xf32>
    %132 = vector.shape_cast %131 : vector<16x16x128xf32> to vector<256x128xf32>
    %133 = arith.truncf %132 : vector<256x128xf32> to vector<256x128xbf16>
    %c2_125 = arith.constant 2 : index
    %c0_126 = arith.constant 0 : index
    %c0_127 = arith.constant 0 : index
    %134 = vector.load %arg5[%c2_125, %c0_126, %c0_127] : memref<9x128x128xbf16, #tpu.memory_space<vmem>>, vector<1x128x128xbf16>
    %135 = vector.shape_cast %134 : vector<1x128x128xbf16> to vector<128x128xbf16>
    %cst_128 = arith.constant dense<0.000000e+00> : vector<256x128xf32>
    %136 = tpu.matmul %133, %135, %cst_128 {dimension_numbers = #tpu.dot_dimension_numbers<[1], [0], [0], [1], [0, 0, 1, 1], [], []>} : vector<256x128xbf16>, vector<128x128xbf16>, vector<256x128xf32> -> vector<256x128xf32>
    %137 = arith.addf %130, %136 : vector<256x128xf32>
    %c1_129 = arith.constant 1 : index
    %c0_130 = arith.constant 0 : index
    %c0_131 = arith.constant 0 : index
    %138 = vector.load %arg15[%c1_129, %c0_130, %c0_131] : memref<18x18x128xf32, #tpu.memory_space<vmem>>, vector<16x16x128xf32>
    %139 = vector.shape_cast %138 : vector<16x16x128xf32> to vector<256x128xf32>
    %140 = arith.truncf %139 : vector<256x128xf32> to vector<256x128xbf16>
    %c3_132 = arith.constant 3 : index
    %c0_133 = arith.constant 0 : index
    %c0_134 = arith.constant 0 : index
    %141 = vector.load %arg5[%c3_132, %c0_133, %c0_134] : memref<9x128x128xbf16, #tpu.memory_space<vmem>>, vector<1x128x128xbf16>
    %142 = vector.shape_cast %141 : vector<1x128x128xbf16> to vector<128x128xbf16>
    %cst_135 = arith.constant dense<0.000000e+00> : vector<256x128xf32>
    %143 = tpu.matmul %140, %142, %cst_135 {dimension_numbers = #tpu.dot_dimension_numbers<[1], [0], [0], [1], [0, 0, 1, 1], [], []>} : vector<256x128xbf16>, vector<128x128xbf16>, vector<256x128xf32> -> vector<256x128xf32>
    %144 = arith.addf %137, %143 : vector<256x128xf32>
    %c1_136 = arith.constant 1 : index
    %c1_137 = arith.constant 1 : index
    %c0_138 = arith.constant 0 : index
    %145 = vector.load %arg15[%c1_136, %c1_137, %c0_138] : memref<18x18x128xf32, #tpu.memory_space<vmem>>, vector<16x16x128xf32>
    %146 = vector.shape_cast %145 : vector<16x16x128xf32> to vector<256x128xf32>
    %147 = arith.truncf %146 : vector<256x128xf32> to vector<256x128xbf16>
    %c4_139 = arith.constant 4 : index
    %c0_140 = arith.constant 0 : index
    %c0_141 = arith.constant 0 : index
    %148 = vector.load %arg5[%c4_139, %c0_140, %c0_141] : memref<9x128x128xbf16, #tpu.memory_space<vmem>>, vector<1x128x128xbf16>
    %149 = vector.shape_cast %148 : vector<1x128x128xbf16> to vector<128x128xbf16>
    %cst_142 = arith.constant dense<0.000000e+00> : vector<256x128xf32>
    %150 = tpu.matmul %147, %149, %cst_142 {dimension_numbers = #tpu.dot_dimension_numbers<[1], [0], [0], [1], [0, 0, 1, 1], [], []>} : vector<256x128xbf16>, vector<128x128xbf16>, vector<256x128xf32> -> vector<256x128xf32>
    %151 = arith.addf %144, %150 : vector<256x128xf32>
    %c1_143 = arith.constant 1 : index
    %c2_144 = arith.constant 2 : index
    %c0_145 = arith.constant 0 : index
    %152 = vector.load %arg15[%c1_143, %c2_144, %c0_145] : memref<18x18x128xf32, #tpu.memory_space<vmem>>, vector<16x16x128xf32>
    %153 = vector.shape_cast %152 : vector<16x16x128xf32> to vector<256x128xf32>
    %154 = arith.truncf %153 : vector<256x128xf32> to vector<256x128xbf16>
    %c5_146 = arith.constant 5 : index
    %c0_147 = arith.constant 0 : index
    %c0_148 = arith.constant 0 : index
    %155 = vector.load %arg5[%c5_146, %c0_147, %c0_148] : memref<9x128x128xbf16, #tpu.memory_space<vmem>>, vector<1x128x128xbf16>
    %156 = vector.shape_cast %155 : vector<1x128x128xbf16> to vector<128x128xbf16>
    %cst_149 = arith.constant dense<0.000000e+00> : vector<256x128xf32>
    %157 = tpu.matmul %154, %156, %cst_149 {dimension_numbers = #tpu.dot_dimension_numbers<[1], [0], [0], [1], [0, 0, 1, 1], [], []>} : vector<256x128xbf16>, vector<128x128xbf16>, vector<256x128xf32> -> vector<256x128xf32>
    %158 = arith.addf %151, %157 : vector<256x128xf32>
    %c2_150 = arith.constant 2 : index
    %c0_151 = arith.constant 0 : index
    %c0_152 = arith.constant 0 : index
    %159 = vector.load %arg15[%c2_150, %c0_151, %c0_152] : memref<18x18x128xf32, #tpu.memory_space<vmem>>, vector<16x16x128xf32>
    %160 = vector.shape_cast %159 : vector<16x16x128xf32> to vector<256x128xf32>
    %161 = arith.truncf %160 : vector<256x128xf32> to vector<256x128xbf16>
    %c6_153 = arith.constant 6 : index
    %c0_154 = arith.constant 0 : index
    %c0_155 = arith.constant 0 : index
    %162 = vector.load %arg5[%c6_153, %c0_154, %c0_155] : memref<9x128x128xbf16, #tpu.memory_space<vmem>>, vector<1x128x128xbf16>
    %163 = vector.shape_cast %162 : vector<1x128x128xbf16> to vector<128x128xbf16>
    %cst_156 = arith.constant dense<0.000000e+00> : vector<256x128xf32>
    %164 = tpu.matmul %161, %163, %cst_156 {dimension_numbers = #tpu.dot_dimension_numbers<[1], [0], [0], [1], [0, 0, 1, 1], [], []>} : vector<256x128xbf16>, vector<128x128xbf16>, vector<256x128xf32> -> vector<256x128xf32>
    %165 = arith.addf %158, %164 : vector<256x128xf32>
    %c2_157 = arith.constant 2 : index
    %c1_158 = arith.constant 1 : index
    %c0_159 = arith.constant 0 : index
    %166 = vector.load %arg15[%c2_157, %c1_158, %c0_159] : memref<18x18x128xf32, #tpu.memory_space<vmem>>, vector<16x16x128xf32>
    %167 = vector.shape_cast %166 : vector<16x16x128xf32> to vector<256x128xf32>
    %168 = arith.truncf %167 : vector<256x128xf32> to vector<256x128xbf16>
    %c7_160 = arith.constant 7 : index
    %c0_161 = arith.constant 0 : index
    %c0_162 = arith.constant 0 : index
    %169 = vector.load %arg5[%c7_160, %c0_161, %c0_162] : memref<9x128x128xbf16, #tpu.memory_space<vmem>>, vector<1x128x128xbf16>
    %170 = vector.shape_cast %169 : vector<1x128x128xbf16> to vector<128x128xbf16>
    %cst_163 = arith.constant dense<0.000000e+00> : vector<256x128xf32>
    %171 = tpu.matmul %168, %170, %cst_163 {dimension_numbers = #tpu.dot_dimension_numbers<[1], [0], [0], [1], [0, 0, 1, 1], [], []>} : vector<256x128xbf16>, vector<128x128xbf16>, vector<256x128xf32> -> vector<256x128xf32>
    %172 = arith.addf %165, %171 : vector<256x128xf32>
    %c2_164 = arith.constant 2 : index
    %c2_165 = arith.constant 2 : index
    %c0_166 = arith.constant 0 : index
    %173 = vector.load %arg15[%c2_164, %c2_165, %c0_166] : memref<18x18x128xf32, #tpu.memory_space<vmem>>, vector<16x16x128xf32>
    %174 = vector.shape_cast %173 : vector<16x16x128xf32> to vector<256x128xf32>
    %175 = arith.truncf %174 : vector<256x128xf32> to vector<256x128xbf16>
    %c8_167 = arith.constant 8 : index
    %c0_168 = arith.constant 0 : index
    %c0_169 = arith.constant 0 : index
    %176 = vector.load %arg5[%c8_167, %c0_168, %c0_169] : memref<9x128x128xbf16, #tpu.memory_space<vmem>>, vector<1x128x128xbf16>
    %177 = vector.shape_cast %176 : vector<1x128x128xbf16> to vector<128x128xbf16>
    %cst_170 = arith.constant dense<0.000000e+00> : vector<256x128xf32>
    %178 = tpu.matmul %175, %177, %cst_170 {dimension_numbers = #tpu.dot_dimension_numbers<[1], [0], [0], [1], [0, 0, 1, 1], [], []>} : vector<256x128xbf16>, vector<128x128xbf16>, vector<256x128xf32> -> vector<256x128xf32>
    %179 = arith.addf %172, %178 : vector<256x128xf32>
    %c0_171 = arith.constant 0 : index
    %c0_172 = arith.constant 0 : index
    %180 = vector.load %arg6[%c0_171, %c0_172] : memref<1x128xf32, #tpu.memory_space<vmem>>, vector<1x128xf32>
    %c0_173 = arith.constant 0 : index
    %c0_174 = arith.constant 0 : index
    %181 = vector.load %arg7[%c0_173, %c0_174] : memref<1x128xf32, #tpu.memory_space<vmem>>, vector<1x128xf32>
    %cst_175 = arith.constant dense<0.000000e+00> : vector<128xf32>
    %182 = vector.multi_reduction <add>, %179, %cst_175 [0] : vector<256x128xf32> to vector<128xf32>
    %183 = vector.shape_cast %182 : vector<128xf32> to vector<1x128xf32>
    %184 = arith.mulf %179, %179 : vector<256x128xf32>
    %cst_176 = arith.constant dense<0.000000e+00> : vector<128xf32>
    %185 = vector.multi_reduction <add>, %184, %cst_176 [0] : vector<256x128xf32> to vector<128xf32>
    %186 = vector.shape_cast %185 : vector<128xf32> to vector<1x128xf32>
    %187 = tpu.concatenate %183, %186 in 0 : vector<1x128xf32>, vector<1x128xf32> -> vector<2x128xf32>
    %cst_177 = arith.constant dense<0.000000e+00> : vector<2x128xf32>
    %188 = tpu.matmul %187, %0, %cst_177 {dimension_numbers = #tpu.dot_dimension_numbers<[1], [0], [0], [1], [0, 0, 1, 1], [], []>} : vector<2x128xf32>, vector<128x128xf32>, vector<2x128xf32> -> vector<2x128xf32>
    %cst_178 = arith.constant 9.765625E-4 : f32
    %189 = vector.broadcast %cst_178 : f32 to vector<2x128xf32>
    %190 = arith.mulf %188, %189 : vector<2x128xf32>
    %191 = vector.extract_strided_slice %190 {offsets = [0, 0], sizes = [1, 128], strides = [1, 1]} : vector<2x128xf32> to vector<1x128xf32>
    %192 = vector.extract_strided_slice %190 {offsets = [1, 0], sizes = [1, 128], strides = [1, 1]} : vector<2x128xf32> to vector<1x128xf32>
    %193 = arith.mulf %191, %191 : vector<1x128xf32>
    %194 = arith.subf %192, %193 : vector<1x128xf32>
    %cst_179 = arith.constant 0.000000e+00 : f32
    %195 = vector.broadcast %cst_179 : f32 to vector<1x128xf32>
    %196 = arith.maximumf %194, %195 : vector<1x128xf32>
    %cst_180 = arith.constant 9.99999974E-6 : f32
    %197 = vector.broadcast %cst_180 : f32 to vector<1x128xf32>
    %198 = arith.addf %196, %197 : vector<1x128xf32>
    %199 = math.rsqrt %198 : vector<1x128xf32>
    %200 = tpu.concatenate %191, %199 in 0 : vector<1x128xf32>, vector<1x128xf32> -> vector<2x128xf32>
    %cst_181 = arith.constant dense<0.000000e+00> : vector<2x128xf32>
    %201 = tpu.matmul %200, %1, %cst_181 {dimension_numbers = #tpu.dot_dimension_numbers<[1], [0], [0], [1], [0, 0, 1, 1], [], []>} : vector<2x128xf32>, vector<128x128xf32>, vector<2x128xf32> -> vector<2x128xf32>
    %202 = vector.extract_strided_slice %201 {offsets = [1, 0], sizes = [1, 128], strides = [1, 1]} : vector<2x128xf32> to vector<1x128xf32>
    %203 = arith.mulf %180, %202 : vector<1x128xf32>
    %204 = vector.extract_strided_slice %201 {offsets = [0, 0], sizes = [1, 128], strides = [1, 1]} : vector<2x128xf32> to vector<1x128xf32>
    %205 = arith.mulf %204, %203 : vector<1x128xf32>
    %206 = arith.subf %181, %205 : vector<1x128xf32>
    %207 = vector.broadcast %203 : vector<1x128xf32> to vector<256x128xf32>
    %208 = arith.mulf %179, %207 : vector<256x128xf32>
    %209 = vector.broadcast %206 : vector<1x128xf32> to vector<256x128xf32>
    %210 = arith.addf %208, %209 : vector<256x128xf32>
    %211 = vector.shape_cast %3 : vector<16x16x4xf32> to vector<256x4xf32>
    %212 = arith.truncf %211 : vector<256x4xf32> to vector<256x4xbf16>
    %c0_182 = arith.constant 0 : index
    %c0_183 = arith.constant 0 : index
    %213 = vector.load %arg10[%c0_182, %c0_183] : memref<4x128xbf16, #tpu.memory_space<vmem>>, vector<4x128xbf16>
    %cst_184 = arith.constant dense<0.000000e+00> : vector<256x128xf32>
    %214 = tpu.matmul %212, %213, %cst_184 {dimension_numbers = #tpu.dot_dimension_numbers<[1], [0], [0], [1], [0, 0, 1, 1], [], []>} : vector<256x4xbf16>, vector<4x128xbf16>, vector<256x128xf32> -> vector<256x128xf32>
    %c0_185 = arith.constant 0 : index
    %c0_186 = arith.constant 0 : index
    %215 = vector.load %arg11[%c0_185, %c0_186] : memref<1x128xf32, #tpu.memory_space<vmem>>, vector<1x128xf32>
    %c0_187 = arith.constant 0 : index
    %c0_188 = arith.constant 0 : index
    %216 = vector.load %arg12[%c0_187, %c0_188] : memref<1x128xf32, #tpu.memory_space<vmem>>, vector<1x128xf32>
    %cst_189 = arith.constant dense<0.000000e+00> : vector<128xf32>
    %217 = vector.multi_reduction <add>, %214, %cst_189 [0] : vector<256x128xf32> to vector<128xf32>
    %218 = vector.shape_cast %217 : vector<128xf32> to vector<1x128xf32>
    %219 = arith.mulf %214, %214 : vector<256x128xf32>
    %cst_190 = arith.constant dense<0.000000e+00> : vector<128xf32>
    %220 = vector.multi_reduction <add>, %219, %cst_190 [0] : vector<256x128xf32> to vector<128xf32>
    %221 = vector.shape_cast %220 : vector<128xf32> to vector<1x128xf32>
    %222 = tpu.concatenate %218, %221 in 0 : vector<1x128xf32>, vector<1x128xf32> -> vector<2x128xf32>
    %cst_191 = arith.constant dense<0.000000e+00> : vector<2x128xf32>
    %223 = tpu.matmul %222, %0, %cst_191 {dimension_numbers = #tpu.dot_dimension_numbers<[1], [0], [0], [1], [0, 0, 1, 1], [], []>} : vector<2x128xf32>, vector<128x128xf32>, vector<2x128xf32> -> vector<2x128xf32>
    %cst_192 = arith.constant 9.765625E-4 : f32
    %224 = vector.broadcast %cst_192 : f32 to vector<2x128xf32>
    %225 = arith.mulf %223, %224 : vector<2x128xf32>
    %226 = vector.extract_strided_slice %225 {offsets = [0, 0], sizes = [1, 128], strides = [1, 1]} : vector<2x128xf32> to vector<1x128xf32>
    %227 = vector.extract_strided_slice %225 {offsets = [1, 0], sizes = [1, 128], strides = [1, 1]} : vector<2x128xf32> to vector<1x128xf32>
    %228 = arith.mulf %226, %226 : vector<1x128xf32>
    %229 = arith.subf %227, %228 : vector<1x128xf32>
    %cst_193 = arith.constant 0.000000e+00 : f32
    %230 = vector.broadcast %cst_193 : f32 to vector<1x128xf32>
    %231 = arith.maximumf %229, %230 : vector<1x128xf32>
    %cst_194 = arith.constant 9.99999974E-6 : f32
    %232 = vector.broadcast %cst_194 : f32 to vector<1x128xf32>
    %233 = arith.addf %231, %232 : vector<1x128xf32>
    %234 = math.rsqrt %233 : vector<1x128xf32>
    %235 = tpu.concatenate %226, %234 in 0 : vector<1x128xf32>, vector<1x128xf32> -> vector<2x128xf32>
    %cst_195 = arith.constant dense<0.000000e+00> : vector<2x128xf32>
    %236 = tpu.matmul %235, %1, %cst_195 {dimension_numbers = #tpu.dot_dimension_numbers<[1], [0], [0], [1], [0, 0, 1, 1], [], []>} : vector<2x128xf32>, vector<128x128xf32>, vector<2x128xf32> -> vector<2x128xf32>
    %237 = vector.extract_strided_slice %236 {offsets = [1, 0], sizes = [1, 128], strides = [1, 1]} : vector<2x128xf32> to vector<1x128xf32>
    %238 = arith.mulf %215, %237 : vector<1x128xf32>
    %239 = vector.extract_strided_slice %236 {offsets = [0, 0], sizes = [1, 128], strides = [1, 1]} : vector<2x128xf32> to vector<1x128xf32>
    %240 = arith.mulf %239, %238 : vector<1x128xf32>
    %241 = arith.subf %216, %240 : vector<1x128xf32>
    %242 = vector.broadcast %238 : vector<1x128xf32> to vector<256x128xf32>
    %243 = arith.mulf %214, %242 : vector<256x128xf32>
    %244 = vector.broadcast %241 : vector<1x128xf32> to vector<256x128xf32>
    %245 = arith.addf %243, %244 : vector<256x128xf32>
    %246 = arith.addf %210, %245 : vector<256x128xf32>
    %cst_196 = arith.constant 0.000000e+00 : f32
    %247 = vector.broadcast %cst_196 : f32 to vector<256x128xf32>
    %248 = arith.maximumf %246, %247 : vector<256x128xf32>
    %249 = vector.extract_strided_slice %248 {offsets = [0, 0], sizes = [256, 32], strides = [1, 1]} : vector<256x128xf32> to vector<256x32xf32>
    %250 = vector.shape_cast %249 : vector<256x32xf32> to vector<16x16x32xf32>
    %c0_197 = arith.constant 0 : index
    %c0_198 = arith.constant 0 : index
    %c0_199 = arith.constant 0 : index
    %c0_200 = arith.constant 0 : index
    %251 = vector.load %arg13[%c0_197, %c0_198, %c0_199, %c0_200] : memref<1x16x16x32xf32, #tpu.memory_space<vmem>>, vector<1x16x16x32xf32>
    %252 = vector.shape_cast %251 : vector<1x16x16x32xf32> to vector<16x16x32xf32>
    %253 = vector.shape_cast %250 : vector<16x16x32xf32> to vector<1x16x16x32xf32>
    tpu.vector_store %arg13[%c0_197, %c0_198, %c0_199, %c0_200], %253 {strides = array<i32>} : memref<1x16x16x32xf32, #tpu.memory_space<vmem>>, vector<1x16x16x32xf32>,
    return
  }
  func.func @transform_0(%arg0: i32) -> (i32, i32, i32, i32) {
    %c0_i32 = arith.constant 0 : i32
    %c0_i32_0 = arith.constant 0 : i32
    %c0_i32_1 = arith.constant 0 : i32
    %c0_i32_2 = arith.constant 0 : i32
    return %arg0, %c0_i32, %c0_i32_0, %c0_i32_1 : i32, i32, i32, i32
  }
  func.func @transform_1(%arg0: i32) -> (i32, i32, i32) {
    %c0_i32 = arith.constant 0 : i32
    %c0_i32_0 = arith.constant 0 : i32
    %c0_i32_1 = arith.constant 0 : i32
    %c0_i32_2 = arith.constant 0 : i32
    return %c0_i32, %c0_i32_0, %c0_i32_1 : i32, i32, i32
  }
  func.func @transform_2(%arg0: i32) -> (i32, i32) {
    %c0_i32 = arith.constant 0 : i32
    %c0_i32_0 = arith.constant 0 : i32
    %c0_i32_1 = arith.constant 0 : i32
    return %c0_i32, %c0_i32_0 : i32, i32
  }
  func.func @transform_3(%arg0: i32) -> (i32, i32) {
    %c0_i32 = arith.constant 0 : i32
    %c0_i32_0 = arith.constant 0 : i32
    %c0_i32_1 = arith.constant 0 : i32
    return %c0_i32, %c0_i32_0 : i32, i32
  }
  func.func @transform_4(%arg0: i32) -> (i32, i32, i32) {
    %c0_i32 = arith.constant 0 : i32
    %c0_i32_0 = arith.constant 0 : i32
    %c0_i32_1 = arith.constant 0 : i32
    %c0_i32_2 = arith.constant 0 : i32
    return %c0_i32, %c0_i32_0, %c0_i32_1 : i32, i32, i32
  }
  func.func @transform_5(%arg0: i32) -> (i32, i32) {
    %c0_i32 = arith.constant 0 : i32
    %c0_i32_0 = arith.constant 0 : i32
    %c0_i32_1 = arith.constant 0 : i32
    return %c0_i32, %c0_i32_0 : i32, i32
  }
  func.func @transform_6(%arg0: i32) -> (i32, i32) {
    %c0_i32 = arith.constant 0 : i32
    %c0_i32_0 = arith.constant 0 : i32
    %c0_i32_1 = arith.constant 0 : i32
    return %c0_i32, %c0_i32_0 : i32, i32
  }
  func.func @transform_7(%arg0: i32) -> (i32, i32) {
    %c0_i32 = arith.constant 0 : i32
    %c0_i32_0 = arith.constant 0 : i32
    %c0_i32_1 = arith.constant 0 : i32
    return %c0_i32, %c0_i32_0 : i32, i32
  }
  func.func @transform_8(%arg0: i32) -> (i32, i32) {
    %c0_i32 = arith.constant 0 : i32
    %c0_i32_0 = arith.constant 0 : i32
    %c0_i32_1 = arith.constant 0 : i32
    return %c0_i32, %c0_i32_0 : i32, i32
  }
  func.func @transform_9(%arg0: i32) -> (i32, i32) {
    %c0_i32 = arith.constant 0 : i32
    %c0_i32_0 = arith.constant 0 : i32
    %c0_i32_1 = arith.constant 0 : i32
    return %c0_i32, %c0_i32_0 : i32, i32
  }
  func.func @transform_10(%arg0: i32) -> (i32, i32) {
    %c0_i32 = arith.constant 0 : i32
    %c0_i32_0 = arith.constant 0 : i32
    %c0_i32_1 = arith.constant 0 : i32
    return %c0_i32, %c0_i32_0 : i32, i32
  }
  func.func @transform_11(%arg0: i32) -> (i32, i32) {
    %c0_i32 = arith.constant 0 : i32
    %c0_i32_0 = arith.constant 0 : i32
    %c0_i32_1 = arith.constant 0 : i32
    return %c0_i32, %c0_i32_0 : i32, i32
  }
  func.func @transform_12(%arg0: i32) -> (i32, i32, i32, i32) {
    %c0_i32 = arith.constant 0 : i32
    %c0_i32_0 = arith.constant 0 : i32
    %c0_i32_1 = arith.constant 0 : i32
    %c0_i32_2 = arith.constant 0 : i32
    return %arg0, %c0_i32, %c0_i32_0, %c0_i32_1 : i32, i32, i32, i32
  }
}

</mosaic_0001>

<llo_original>
// kernel: tpu_custom_call.1
$region0: #{tpu_custom_call.1}
  #allocation0 [shape = 'u32[]', space=smem, size = 0x4, offset = 0x4, fixed_abs, tag = 'smem constant byte address 0x4 - core index']
  #allocation1 [shape = 'u32[72,128]{1,0:T(1,128)}', space=vmem, size = 0x9000, scoped, tag = 'internal scratch']
  #allocation2 [shape = 'f32[18,18,4]{2,1,0:T(8,128)}', space=vmem, size = 0x36000, scoped, tag = 'scratch operand']
  #allocation3 [shape = 'f32[18,18,128]{2,1,0:T(8,128)}', space=vmem, size = 0x36000, scoped, tag = 'scratch operand']
  %s0 = inlined_call_operand.vmem [shape: f32[2,16,16,4], index: 0, kind: input, shape index: {}]
  %s1 = inlined_call_operand.vmem [shape: bf16[9,4,128], index: 1, kind: input, shape index: {}]
  %s2 = inlined_call_operand.vmem [shape: f32[1,128], index: 2, kind: input, shape index: {}]
  %s3 = inlined_call_operand.vmem [shape: f32[1,128], index: 3, kind: input, shape index: {}]
  %s4 = inlined_call_operand.vmem [shape: bf16[9,128,128], index: 4, kind: input, shape index: {}]
  %s5 = inlined_call_operand.vmem [shape: f32[1,128], index: 5, kind: input, shape index: {}]
  %s6 = inlined_call_operand.vmem [shape: f32[1,128], index: 6, kind: input, shape index: {}]
  %s7 = inlined_call_operand.hbm [shape: f32[128,128], index: 7, kind: input, shape index: {}]
  %s8 = inlined_call_operand.hbm [shape: f32[128,128], index: 8, kind: input, shape index: {}]
  %s9 = inlined_call_operand.vmem [shape: bf16[4,128], index: 9, kind: input, shape index: {}]
  %s10 = inlined_call_operand.vmem [shape: f32[1,128], index: 10, kind: input, shape index: {}]
  %s11 = inlined_call_operand.vmem [shape: f32[1,128], index: 11, kind: input, shape index: {}]
  %s12 = inlined_call_operand.hbm [shape: f32[2,16,16,32], index: 12, kind: output, shape index: {}]
  %s13 = sld [smem:[#allocation0]]
  $region89: #{tpu_custom_call.1} parent=0
    _
  %s15 = ssub.s32 1, %s13
  %s16 = scalar_select 0, %s15, %s13
  $region1: #{tpu_custom_call.1} parent=0
    #allocation4 [shape = 'u8[65536]{0}', space=vmem, size = 0x10000, scoped, tag = 'input window, operand 7, single buffered']
    #allocation5 [shape = 's32[2]{0}', space=sflag, size = 0x8, scoped, tag = 'scoped memory for tpu_custom_call.1']
    #allocation6 [shape = 's32[2]{0}', space=sflag, size = 0x8, scoped, tag = 'scoped memory for tpu_custom_call.1']
    #allocation7 [shape = 'u8[65536]{0}', space=vmem, size = 0x10000, scoped, tag = 'input window, operand 8, single buffered']
    #allocation8 [shape = 's32[1]{0}', space=sflag, size = 0x4, scoped, tag = 'scoped memory for tpu_custom_call.1']
    #allocation9 [shape = 'u8[262144]{0}', space=vmem, size = 0x40000, scoped, tag = 'output window, operand 0']
    %17 = vsyncpa [#allocation5], 0
    %18 = vsyncpa [#allocation8], 0
    %19 = vsyncpa [#allocation6], 0
    %s20 = scalar_lea.sflag [#allocation6], 1
    %21 = vsyncpa %s20, 0
    loop: start=0, step=1, limit=4
    $region2: #{tpu_custom_call.1} parent=1 // loop_pre_header
      _
    $region3: #{tpu_custom_call.1} parent=1 // loop_header
      %s23 = sphi 0, %s27
      %p24 = scmp.ge.s32.totalorder %s23, 4
      %s33 = sphi 0, %s35
      %s36 = sphi 0, %s33
      %s37 = sphi 0, %s36
      %s53 = sphi 0, %s37
      %s57 = sphi 0, %s57
      %s59 = sphi 0, %s57
      %s60 = sphi 0, %s59
      %s74 = sphi 0, %s60
      %s78 = sphi 0, %s78
      %s80 = sphi 0, %s78
      %s81 = sphi 0, %s80
      %s95 = sphi 0, %s81
      %s99 = sphi 0, %s99
      %s101 = sphi 0, %s99
      %s102 = sphi 0, %s101
      %s116 = sphi 0, %s102
      %s120 = sphi 0, %s120
      %s122 = sphi 0, %s120
      %s123 = sphi 0, %s122
      %s137 = sphi 0, %s123
      %s141 = sphi 0, %s141
      %s143 = sphi 0, %s141
      %s144 = sphi 0, %s143
      %s158 = sphi 0, %s144
      %s162 = sphi 0, %s162
      %s164 = sphi 0, %s162
      %s165 = sphi 0, %s164
      %s179 = sphi 0, %s165
      %s183 = sphi 0, %s183
      %s185 = sphi 0, %s183
      %s186 = sphi 0, %s185
      %s200 = sphi 0, %s186
      %s204 = sphi 0, %s204
      %s206 = sphi 0, %s204
      %s207 = sphi 0, %s206
      %s221 = sphi 0, %s207
      %s225 = sphi 0, %s225
      %s227 = sphi 0, %s225
      %s228 = sphi 0, %s227
      %s242 = sphi 0, %s228
      %s246 = sphi 0, %s246
      %s248 = sphi 0, %s246
      %s249 = sphi 0, %s248
      %s263 = sphi 0, %s249
      %s267 = sphi 0, %s267
      %s269 = sphi 0, %s267
      %s270 = sphi 0, %s269
      %s284 = sphi 0, %s270
      %s290 = sphi 0, %s292
      %s293 = sphi 0, %s290
      %s294 = sphi 0, %s293
      %s310 = sphi 0, %s294
    $region4: #{tpu_custom_call.1} parent=1 // loop_header_branch
      %26 = sbr.rel (%p24) target = $region8
    $region5: #{tpu_custom_call.1} parent=1 // loop_body
      %s28 = ssub.s32 %s23, 1
      %s29 = ssub.s32 %s23, 2
      %s30 = sadd.s32 %s23, 1
      %s31 = ssub.s32 %s23, %s30
      %p32 = scmp.eq.s32.totalorder %s31, 0
      %s34 = sadd.s32 %s33, 1
      %s35 = scalar_select %p32, %s33, %s34
      %p38 = pneg %p32
      %p39 = scmp.eq.s32.totalorder %s23, 1
      %p40 = por %p38, %p39
      %p41 = scmp.ne.s32.totalorder %s33, %s36
      %p42 = scmp.eq.s32.totalorder %s23, 0
      %p43 = por %p41, %p42
      %p44 = scmp.ne.s32.totalorder %s33, %s36
      %p45 = scmp.eq.s32.totalorder %s28, 1
      %p46 = por %p44, %p45
      %p47 = scmp.ne.s32.totalorder %s36, %s37
      %p48 = scmp.eq.s32.totalorder %s28, 0
      %p49 = por %p47, %p48
      %p50 = scmp.ne.s32.totalorder %s36, %s37
      %p51 = scmp.eq.s32.totalorder %s29, 1
      %p52 = por %p50, %p51
      %p54 = scmp.ne.s32.totalorder %s37, %s53
      %p55 = scmp.eq.s32.totalorder %s29, 0
      %p56 = por %p54, %p55
      %s58 = sadd.s32 %s57, 1
      %p61 = scmp.eq.s32.totalorder %s23, 1
      %p62 = scmp.ne.s32.totalorder %s57, %s59
      %p63 = scmp.eq.s32.totalorder %s23, 0
      %p64 = por %p62, %p63
      %p65 = scmp.ne.s32.totalorder %s57, %s59
      %p66 = scmp.eq.s32.totalorder %s28, 1
      %p67 = por %p65, %p66
      %p68 = scmp.ne.s32.totalorder %s59, %s60
      %p69 = scmp.eq.s32.totalorder %s28, 0
      %p70 = por %p68, %p69
      %p71 = scmp.ne.s32.totalorder %s59, %s60
      %p72 = scmp.eq.s32.totalorder %s29, 1
      %p73 = por %p71, %p72
      %p75 = scmp.ne.s32.totalorder %s60, %s74
      %p76 = scmp.eq.s32.totalorder %s29, 0
      %p77 = por %p75, %p76
      %s79 = sadd.s32 %s78, 1
      %p82 = scmp.eq.s32.totalorder %s23, 1
      %p83 = scmp.ne.s32.totalorder %s78, %s80
      %p84 = scmp.eq.s32.totalorder %s23, 0
      %p85 = por %p83, %p84
      %p86 = scmp.ne.s32.totalorder %s78, %s80
      %p87 = scmp.eq.s32.totalorder %s28, 1
      %p88 = por %p86, %p87
      %p89 = scmp.ne.s32.totalorder %s80, %s81
      %p90 = scmp.eq.s32.totalorder %s28, 0
      %p91 = por %p89, %p90
      %p92 = scmp.ne.s32.totalorder %s80, %s81
      %p93 = scmp.eq.s32.totalorder %s29, 1
      %p94 = por %p92, %p93
      %p96 = scmp.ne.s32.totalorder %s81, %s95
      %p97 = scmp.eq.s32.totalorder %s29, 0
      %p98 = por %p96, %p97
      %s100 = sadd.s32 %s99, 1
      %p103 = scmp.eq.s32.totalorder %s23, 1
      %p104 = scmp.ne.s32.totalorder %s99, %s101
      %p105 = scmp.eq.s32.totalorder %s23, 0
      %p106 = por %p104, %p105
      %p107 = scmp.ne.s32.totalorder %s99, %s101
      %p108 = scmp.eq.s32.totalorder %s28, 1
      %p109 = por %p107, %p108
      %p110 = scmp.ne.s32.totalorder %s101, %s102
      %p111 = scmp.eq.s32.totalorder %s28, 0
      %p112 = por %p110, %p111
      %p113 = scmp.ne.s32.totalorder %s101, %s102
      %p114 = scmp.eq.s32.totalorder %s29, 1
      %p115 = por %p113, %p114
      %p117 = scmp.ne.s32.totalorder %s102, %s116
      %p118 = scmp.eq.s32.totalorder %s29, 0
      %p119 = por %p117, %p118
      %s121 = sadd.s32 %s120, 1
      %p124 = scmp.eq.s32.totalorder %s23, 1
      %p125 = scmp.ne.s32.totalorder %s120, %s122
      %p126 = scmp.eq.s32.totalorder %s23, 0
      %p127 = por %p125, %p126
      %p128 = scmp.ne.s32.totalorder %s120, %s122
      %p129 = scmp.eq.s32.totalorder %s28, 1
      %p130 = por %p128, %p129
      %p131 = scmp.ne.s32.totalorder %s122, %s123
      %p132 = scmp.eq.s32.totalorder %s28, 0
      %p133 = por %p131, %p132
      %p134 = scmp.ne.s32.totalorder %s122, %s123
      %p135 = scmp.eq.s32.totalorder %s29, 1
      %p136 = por %p134, %p135
      %p138 = scmp.ne.s32.totalorder %s123, %s137
      %p139 = scmp.eq.s32.totalorder %s29, 0
      %p140 = por %p138, %p139
      %s142 = sadd.s32 %s141, 1
      %p145 = scmp.eq.s32.totalorder %s23, 1
      %p146 = scmp.ne.s32.totalorder %s141, %s143
      %p147 = scmp.eq.s32.totalorder %s23, 0
      %p148 = por %p146, %p147
      %p149 = scmp.ne.s32.totalorder %s141, %s143
      %p150 = scmp.eq.s32.totalorder %s28, 1
      %p151 = por %p149, %p150
      %p152 = scmp.ne.s32.totalorder %s143, %s144
      %p153 = scmp.eq.s32.totalorder %s28, 0
      %p154 = por %p152, %p153
      %p155 = scmp.ne.s32.totalorder %s143, %s144
      %p156 = scmp.eq.s32.totalorder %s29, 1
      %p157 = por %p155, %p156
      %p159 = scmp.ne.s32.totalorder %s144, %s158
      %p160 = scmp.eq.s32.totalorder %s29, 0
      %p161 = por %p159, %p160
      %s163 = sadd.s32 %s162, 1
      %p166 = scmp.eq.s32.totalorder %s23, 1
      %p167 = scmp.ne.s32.totalorder %s162, %s164
      %p168 = scmp.eq.s32.totalorder %s23, 0
      %p169 = por %p167, %p168
      %p170 = scmp.ne.s32.totalorder %s162, %s164
      %p171 = scmp.eq.s32.totalorder %s28, 1
      %p172 = por %p170, %p171
      %p173 = scmp.ne.s32.totalorder %s164, %s165
      %p174 = scmp.eq.s32.totalorder %s28, 0
      %p175 = por %p173, %p174
      %p176 = scmp.ne.s32.totalorder %s164, %s165
      %p177 = scmp.eq.s32.totalorder %s29, 1
      %p178 = por %p176, %p177
      %p180 = scmp.ne.s32.totalorder %s165, %s179
      %p181 = scmp.eq.s32.totalorder %s29, 0
      %p182 = por %p180, %p181
      %s184 = sadd.s32 %s183, 1
      %p187 = scmp.eq.s32.totalorder %s23, 1
      %p188 = scmp.ne.s32.totalorder %s183, %s185
      %p189 = scmp.eq.s32.totalorder %s23, 0
      %p190 = por %p188, %p189
      %p191 = scmp.ne.s32.totalorder %s183, %s185
      %p192 = scmp.eq.s32.totalorder %s28, 1
      %p193 = por %p191, %p192
      %p194 = scmp.ne.s32.totalorder %s185, %s186
      %p195 = scmp.eq.s32.totalorder %s28, 0
      %p196 = por %p194, %p195
      %p197 = scmp.ne.s32.totalorder %s185, %s186
      %p198 = scmp.eq.s32.totalorder %s29, 1
      %p199 = por %p197, %p198
      %p201 = scmp.ne.s32.totalorder %s186, %s200
      %p202 = scmp.eq.s32.totalorder %s29, 0
      %p203 = por %p201, %p202
      %s205 = sadd.s32 %s204, 1
      %p208 = scmp.eq.s32.totalorder %s23, 1
      %p209 = scmp.ne.s32.totalorder %s204, %s206
      %p210 = scmp.eq.s32.totalorder %s23, 0
      %p211 = por %p209, %p210
      %p212 = scmp.ne.s32.totalorder %s204, %s206
      %p213 = scmp.eq.s32.totalorder %s28, 1
      %p214 = por %p212, %p213
      %p215 = scmp.ne.s32.totalorder %s206, %s207
      %p216 = scmp.eq.s32.totalorder %s28, 0
      %p217 = por %p215, %p216
      %p218 = scmp.ne.s32.totalorder %s206, %s207
      %p219 = scmp.eq.s32.totalorder %s29, 1
      %p220 = por %p218, %p219
      %p222 = scmp.ne.s32.totalorder %s207, %s221
      %p223 = scmp.eq.s32.totalorder %s29, 0
      %p224 = por %p222, %p223
      %s226 = sadd.s32 %s225, 1
      %p229 = scmp.eq.s32.totalorder %s23, 1
      %p230 = scmp.ne.s32.totalorder %s225, %s227
      %p231 = scmp.eq.s32.totalorder %s23, 0
      %p232 = por %p230, %p231
      %p233 = scmp.ne.s32.totalorder %s225, %s227
      %p234 = scmp.eq.s32.totalorder %s28, 1
      %p235 = por %p233, %p234
      %p236 = scmp.ne.s32.totalorder %s227, %s228
      %p237 = scmp.eq.s32.totalorder %s28, 0
      %p238 = por %p236, %p237
      %p239 = scmp.ne.s32.totalorder %s227, %s228
      %p240 = scmp.eq.s32.totalorder %s29, 1
      %p241 = por %p239, %p240
      %p243 = scmp.ne.s32.totalorder %s228, %s242
      %p244 = scmp.eq.s32.totalorder %s29, 0
      %p245 = por %p243, %p244
      %s247 = sadd.s32 %s246, 1
      %p250 = scmp.eq.s32.totalorder %s23, 1
      %p251 = scmp.ne.s32.totalorder %s246, %s248
      %p252 = scmp.eq.s32.totalorder %s23, 0
      %p253 = por %p251, %p252
      %p254 = scmp.ne.s32.totalorder %s246, %s248
      %p255 = scmp.eq.s32.totalorder %s28, 1
      %p256 = por %p254, %p255
      %p257 = scmp.ne.s32.totalorder %s248, %s249
      %p258 = scmp.eq.s32.totalorder %s28, 0
      %p259 = por %p257, %p258
      %p260 = scmp.ne.s32.totalorder %s248, %s249
      %p261 = scmp.eq.s32.totalorder %s29, 1
      %p262 = por %p260, %p261
      %p264 = scmp.ne.s32.totalorder %s249, %s263
      %p265 = scmp.eq.s32.totalorder %s29, 0
      %p266 = por %p264, %p265
      %s268 = sadd.s32 %s267, 1
      %p271 = scmp.eq.s32.totalorder %s23, 1
      %p272 = scmp.ne.s32.totalorder %s267, %s269
      %p273 = scmp.eq.s32.totalorder %s23, 0
      %p274 = por %p272, %p273
      %p275 = scmp.ne.s32.totalorder %s267, %s269
      %p276 = scmp.eq.s32.totalorder %s28, 1
      %p277 = por %p275, %p276
      %p278 = scmp.ne.s32.totalorder %s269, %s270
      %p279 = scmp.eq.s32.totalorder %s28, 0
      %p280 = por %p278, %p279
      %p281 = scmp.ne.s32.totalorder %s269, %s270
      %p282 = scmp.eq.s32.totalorder %s29, 1
      %p283 = por %p281, %p282
      %p285 = scmp.ne.s32.totalorder %s270, %s284
      %p286 = scmp.eq.s32.totalorder %s29, 0
      %p287 = por %p285, %p286
      %s288 = ssub.s32 %s23, %s30
      %p289 = scmp.eq.s32.totalorder %s288, 0
      %s291 = sadd.s32 %s290, 1
      %s292 = scalar_select %p289, %s290, %s291
      %p295 = pneg %p289
      %p296 = scmp.eq.s32.totalorder %s23, 1
      %p297 = por %p295, %p296
      %p298 = scmp.ne.s32.totalorder %s290, %s293
      %p299 = scmp.eq.s32.totalorder %s23, 0
      %p300 = por %p298, %p299
      %p301 = scmp.ne.s32.totalorder %s290, %s293
      %p302 = scmp.eq.s32.totalorder %s28, 1
      %p303 = por %p301, %p302
      %p304 = scmp.ne.s32.totalorder %s293, %s294
      %p305 = scmp.eq.s32.totalorder %s28, 0
      %p306 = por %p304, %p305
      %p307 = scmp.ne.s32.totalorder %s293, %s294
      %p308 = scmp.eq.s32.totalorder %s29, 1
      %p309 = por %p307, %p308
      %p311 = scmp.ne.s32.totalorder %s294, %s310
      %p312 = scmp.eq.s32.totalorder %s29, 0
      %p313 = por %p311, %p312
      %p314 = scmp.le.s32.totalorder 1, %s23
      %p315 = scmp.lt.s32.totalorder %s23, 3
      %p316 = pnand %p314, %p315
      %p317 = pneg %p316
      // Predicated region
      $region9: #{tpu_custom_call.1} parent=5 // pred_check
        _
      $region10: #{tpu_custom_call.1} parent=5 // pred_check_branch
        %319 = sbr.rel (%p316) target = $region12
      $region11: #{tpu_custom_call.1} parent=5 // pred_region
        %s320 = ssub.s32 %s23, 1
        // Predicated region
        $region13: #{tpu_custom_call.1} parent=11 // pred_check
          %p321 = pneg %p70
        $region14: #{tpu_custom_call.1} parent=11 // pred_check_branch
          %323 = sbr.rel (%p321) target = $region16
        $region15: #{tpu_custom_call.1} parent=11 // pred_region
          _
        $region16: #{tpu_custom_call.1} parent=11 // pred_fallthru
          _
        // Predicated region
        $region17: #{tpu_custom_call.1} parent=11 // pred_check
          %p324 = pneg %p91
        $region18: #{tpu_custom_call.1} parent=11 // pred_check_branch
          %326 = sbr.rel (%p324) target = $region20
        $region19: #{tpu_custom_call.1} parent=11 // pred_region
          _
        $region20: #{tpu_custom_call.1} parent=11 // pred_fallthru
          _
        // Predicated region
        $region21: #{tpu_custom_call.1} parent=11 // pred_check
          %p327 = pneg %p112
        $region22: #{tpu_custom_call.1} parent=11 // pred_check_branch
          %329 = sbr.rel (%p327) target = $region24
        $region23: #{tpu_custom_call.1} parent=11 // pred_region
          _
        $region24: #{tpu_custom_call.1} parent=11 // pred_fallthru
          _
        // Predicated region
        $region25: #{tpu_custom_call.1} parent=11 // pred_check
          %p330 = pneg %p133
        $region26: #{tpu_custom_call.1} parent=11 // pred_check_branch
          %332 = sbr.rel (%p330) target = $region28
        $region27: #{tpu_custom_call.1} parent=11 // pred_region
          _
        $region28: #{tpu_custom_call.1} parent=11 // pred_fallthru
          _
        // Predicated region
        $region29: #{tpu_custom_call.1} parent=11 // pred_check
          %p333 = pneg %p154
        $region30: #{tpu_custom_call.1} parent=11 // pred_check_branch
          %335 = sbr.rel (%p333) target = $region32
        $region31: #{tpu_custom_call.1} parent=11 // pred_region
          _
        $region32: #{tpu_custom_call.1} parent=11 // pred_fallthru
          _
        // Predicated region
        $region33: #{tpu_custom_call.1} parent=11 // pred_check
          %p336 = pneg %p175
        $region34: #{tpu_custom_call.1} parent=11 // pred_check_branch
          %338 = sbr.rel (%p336) target = $region36
        $region35: #{tpu_custom_call.1} parent=11 // pred_region
          _
        $region36: #{tpu_custom_call.1} parent=11 // pred_fallthru
          _
        // Predicated region
        $region37: #{tpu_custom_call.1} parent=11 // pred_check
          %p339 = pneg %p196
        $region38: #{tpu_custom_call.1} parent=11 // pred_check_branch
          %341 = sbr.rel (%p339) target = $region40
        $region39: #{tpu_custom_call.1} parent=11 // pred_region
          %343 = vsyncadd [#allocation5], 0
          %s344 = sshll.u32 %s7, 4
          %s345 = int_to_ptr.hbm [resolvable:$true] %s344
          %s346 = sshll.u32 [#allocation4], 4
          %s347 = int_to_ptr.vmem [resolvable:$true] %s346
          %352 = dma.hbm_to_vmem [thread:$0]  %s345, 2048, %s347, [#allocation5], 128, 128, 8
        $region40: #{tpu_custom_call.1} parent=11 // pred_fallthru
          _
        // Predicated region
        $region41: #{tpu_custom_call.1} parent=11 // pred_check
          %p353 = pneg %p217
        $region42: #{tpu_custom_call.1} parent=11 // pred_check_branch
          %355 = sbr.rel (%p353) target = $region44
        $region43: #{tpu_custom_call.1} parent=11 // pred_region
          %357 = vsyncadd [#allocation8], 0
          %s358 = sshll.u32 %s8, 4
          %s359 = int_to_ptr.hbm [resolvable:$true] %s358
          %s360 = sshll.u32 [#allocation7], 4
          %s361 = int_to_ptr.vmem [resolvable:$true] %s360
          %366 = dma.hbm_to_vmem [thread:$0]  %s359, 2048, %s361, [#allocation8], 128, 128, 8
        $region44: #{tpu_custom_call.1} parent=11 // pred_fallthru
          _
        // Predicated region
        $region45: #{tpu_custom_call.1} parent=11 // pred_check
          %p367 = pneg %p238
        $region46: #{tpu_custom_call.1} parent=11 // pred_check_branch
          %369 = sbr.rel (%p367) target = $region48
        $region47: #{tpu_custom_call.1} parent=11 // pred_region
          _
        $region48: #{tpu_custom_call.1} parent=11 // pred_fallthru
          _
        // Predicated region
        $region49: #{tpu_custom_call.1} parent=11 // pred_check
          %p370 = pneg %p259
        $region50: #{tpu_custom_call.1} parent=11 // pred_check_branch
          %372 = sbr.rel (%p370) target = $region52
        $region51: #{tpu_custom_call.1} parent=11 // pred_region
          _
        $region52: #{tpu_custom_call.1} parent=11 // pred_fallthru
          _
        // Predicated region
        $region53: #{tpu_custom_call.1} parent=11 // pred_check
          %p373 = pneg %p280
        $region54: #{tpu_custom_call.1} parent=11 // pred_check_branch
          %375 = sbr.rel (%p373) target = $region56
        $region55: #{tpu_custom_call.1} parent=11 // pred_region
          _
        $region56: #{tpu_custom_call.1} parent=11 // pred_fallthru
          _
      $region12: #{tpu_custom_call.1} parent=5 // pred_fallthru
        _
      %p376 = scmp.lt.s32.totalorder %s23, 2
      // Predicated region
      $region57: #{tpu_custom_call.1} parent=5 // pred_check
        %p377 = pneg %p376
      $region58: #{tpu_custom_call.1} parent=5 // pred_check_branch
        %379 = sbr.rel (%p377) target = $region60
      $region59: #{tpu_custom_call.1} parent=5 // pred_region
        // Predicated region
        $region61: #{tpu_custom_call.1} parent=59 // pred_check
          %p380 = pneg %p43
        $region62: #{tpu_custom_call.1} parent=59 // pred_check_branch
          %382 = sbr.rel (%p380) target = $region64
        $region63: #{tpu_custom_call.1} parent=59 // pred_region
          %p383 = scmp.lt.s32.totalorder %s23, 1
          %s384 = scalar_select %p383, %s23, 1
          %s385 = smul.addr %s384, 32
          %s386 = smul.addr %s385, 8
          %s387 = scalar_lea.vmem %s0, %s386
        $region64: #{tpu_custom_call.1} parent=59 // pred_fallthru
          _
      $region60: #{tpu_custom_call.1} parent=5 // pred_fallthru
        _
      %p388 = scmp.le.s32.totalorder 1, %s23
      %p389 = scmp.lt.s32.totalorder %s23, 3
      %p390 = pnand %p388, %p389
      %p391 = pneg %p390
      // Predicated region
      $region65: #{tpu_custom_call.1} parent=5 // pred_check
        _
      $region66: #{tpu_custom_call.1} parent=5 // pred_check_branch
        %393 = sbr.rel (%p390) target = $region68
      $region67: #{tpu_custom_call.1} parent=5 // pred_region
        %s394 = ssub.s32 %s23, 1
        // Predicated region
        $region69: #{tpu_custom_call.1} parent=67 // pred_check
          %p395 = pneg %p196
        $region70: #{tpu_custom_call.1} parent=67 // pred_check_branch
          %397 = sbr.rel (%p395) target = $region72
        $region71: #{tpu_custom_call.1} parent=67 // pred_region
          %399 = dma.done [#allocation5], 2048
        $region72: #{tpu_custom_call.1} parent=67 // pred_fallthru
          _
        // Predicated region
        $region73: #{tpu_custom_call.1} parent=67 // pred_check
          %p400 = pneg %p217
        $region74: #{tpu_custom_call.1} parent=67 // pred_check_branch
          %402 = sbr.rel (%p400) target = $region76
        $region75: #{tpu_custom_call.1} parent=67 // pred_region
          %404 = dma.done [#allocation8], 2048
        $region76: #{tpu_custom_call.1} parent=67 // pred_fallthru
          _
        %p405 = scmp.lt.s32.totalorder %s28, 1
        %s406 = scalar_select %p405, %s28, 1
        %s407 = smul.addr %s406, 32
        %s408 = smul.addr %s407, 8
        %s409 = scalar_lea.vmem %s0, %s408
        %p410 = pneg %p49
        %p411 = pneg %p46
        %p412 = pneg %p70
        %p413 = pneg %p67
        %p414 = pneg %p91
        %p415 = pneg %p88
        %p416 = pneg %p112
        %p417 = pneg %p109
        %p418 = pneg %p133
        %p419 = pneg %p130
        %p420 = pneg %p154
        %p421 = pneg %p151
        %p422 = pneg %p175
        %p423 = pneg %p172
        %p424 = pneg %p196
        %p425 = pneg %p193
        %p426 = pneg %p217
        %p427 = pneg %p214
        %p428 = pneg %p238
        %p429 = pneg %p235
        %p430 = pneg %p259
        %p431 = pneg %p256
        %p432 = pneg %p280
        %p433 = pneg %p277
        %p434 = pneg %p306
        %p435 = pneg %p303
        %s436 = sand.u32 %s293, 1
        %s437 = scalar_lea.sflag [#allocation6], %s436
        %s438 = sand.u32 %s293, 1
        %s439 = smul.addr %s438, 256
        %s440 = scalar_lea.vmem [#allocation9], %s439
        %p441 = scmp.lt.s32.totalorder %s28, 1
        %s442 = scalar_select %p441, %s28, 1
        %s443 = smul.addr %s442, 32
        %s444 = smul.addr %s443, 8
        %s445 = scalar_lea.vmem %s0, %s444
        %v447 = vld [vmem:[#allocation4] sm:$0xff]
        %v448 = vld [vmem:[#allocation4 + $0x8] sm:$0xff]
        %v449 = vld [vmem:[#allocation4 + $0x10] sm:$0xff]
        %v450 = vld [vmem:[#allocation4 + $0x18] sm:$0xff]
        %v451 = vld [vmem:[#allocation4 + $0x20] sm:$0xff]
        %v452 = vld [vmem:[#allocation4 + $0x28] sm:$0xff]
        %v453 = vld [vmem:[#allocation4 + $0x30] sm:$0xff]
        %v454 = vld [vmem:[#allocation4 + $0x38] sm:$0xff]
        %v455 = vld [vmem:[#allocation4 + $0x40] sm:$0xff]
        %v456 = vld [vmem:[#allocation4 + $0x48] sm:$0xff]
        %v457 = vld [vmem:[#allocation4 + $0x50] sm:$0xff]
        %v458 = vld [vmem:[#allocation4 + $0x58] sm:$0xff]
        %v459 = vld [vmem:[#allocation4 + $0x60] sm:$0xff]
        %v460 = vld [vmem:[#allocation4 + $0x68] sm:$0xff]
        %v461 = vld [vmem:[#allocation4 + $0x70] sm:$0xff]
        %v462 = vld [vmem:[#allocation4 + $0x78] sm:$0xff]
        %v463 = vld [vmem:[#allocation7] sm:$0xff]
        %v464 = vld [vmem:[#allocation7 + $0x8] sm:$0xff]
        %v465 = vld [vmem:[#allocation7 + $0x10] sm:$0xff]
        %v466 = vld [vmem:[#allocation7 + $0x18] sm:$0xff]
        %v467 = vld [vmem:[#allocation7 + $0x20] sm:$0xff]
        %v468 = vld [vmem:[#allocation7 + $0x28] sm:$0xff]
        %v469 = vld [vmem:[#allocation7 + $0x30] sm:$0xff]
        %v470 = vld [vmem:[#allocation7 + $0x38] sm:$0xff]
        %v471 = vld [vmem:[#allocation7 + $0x40] sm:$0xff]
        %v472 = vld [vmem:[#allocation7 + $0x48] sm:$0xff]
        %v473 = vld [vmem:[#allocation7 + $0x50] sm:$0xff]
        %v474 = vld [vmem:[#allocation7 + $0x58] sm:$0xff]
        %v475 = vld [vmem:[#allocation7 + $0x60] sm:$0xff]
        %v476 = vld [vmem:[#allocation7 + $0x68] sm:$0xff]
        %v477 = vld [vmem:[#allocation7 + $0x70] sm:$0xff]
        %v478 = vld [vmem:[#allocation7 + $0x78] sm:$0xff]
        %v479 = vld [vmem:[%s445] sm:$0xff]
        %v480 = vld [vmem:[%s445 + $0x8] sm:$0xff]
        %v481 = vld [vmem:[%s445 + $0x10] sm:$0xff]
        %v482 = vld [vmem:[%s445 + $0x18] sm:$0xff]
        %v483 = vld [vmem:[%s445 + $0x20] sm:$0xff]
        %v484 = vld [vmem:[%s445 + $0x28] sm:$0xff]
        %v485 = vld [vmem:[%s445 + $0x30] sm:$0xff]
        %v486 = vld [vmem:[%s445 + $0x38] sm:$0xff]
        %v487 = vld [vmem:[%s445 + $0x40] sm:$0xff]
        %v488 = vld [vmem:[%s445 + $0x48] sm:$0xff]
        %v489 = vld [vmem:[%s445 + $0x50] sm:$0xff]
        %v490 = vld [vmem:[%s445 + $0x58] sm:$0xff]
        %v491 = vld [vmem:[%s445 + $0x60] sm:$0xff]
        %v492 = vld [vmem:[%s445 + $0x68] sm:$0xff]
        %v493 = vld [vmem:[%s445 + $0x70] sm:$0xff]
        %v494 = vld [vmem:[%s445 + $0x78] sm:$0xff]
        %v495 = vld [vmem:[%s445 + $0x80] sm:$0xff]
        %v496 = vld [vmem:[%s445 + $0x88] sm:$0xff]
        %v497 = vld [vmem:[%s445 + $0x90] sm:$0xff]
        %v498 = vld [vmem:[%s445 + $0x98] sm:$0xff]
        %v499 = vld [vmem:[%s445 + $0xa0] sm:$0xff]
        %v500 = vld [vmem:[%s445 + $0xa8] sm:$0xff]
        %v501 = vld [vmem:[%s445 + $0xb0] sm:$0xff]
        %v502 = vld [vmem:[%s445 + $0xb8] sm:$0xff]
        %v503 = vld [vmem:[%s445 + $0xc0] sm:$0xff]
        %v504 = vld [vmem:[%s445 + $0xc8] sm:$0xff]
        %v505 = vld [vmem:[%s445 + $0xd0] sm:$0xff]
        %v506 = vld [vmem:[%s445 + $0xd8] sm:$0xff]
        %v507 = vld [vmem:[%s445 + $0xe0] sm:$0xff]
        %v508 = vld [vmem:[%s445 + $0xe8] sm:$0xff]
        %v509 = vld [vmem:[%s445 + $0xf0] sm:$0xff]
        %v510 = vld [vmem:[%s445 + $0xf8] sm:$0xff]
        %vm511 = vcmask 31744
        %512 = vst.msk [vmem:[#allocation2] sm:$0xff] %vm511, 0.0
        %513 = vst.msk [vmem:[#allocation2 + $0x8] sm:$0xff] %vm511, 0.0
        %vm514 = vcmask 25600
        %515 = vst.msk [vmem:[#allocation2 + $0x10] sm:$0x3] %vm514, 0.0
        %s516 = scalar_lea.vmem [#allocation2], 408
        %517 = vst.msk [vmem:[%s516] sm:$0xff] %vm511, 0.0
        %518 = vst.msk [vmem:[%s516 + $0x8] sm:$0xff] %vm511, 0.0
        %519 = vst.msk [vmem:[%s516 + $0x10] sm:$0x3] %vm514, 0.0
        %s520 = scalar_lea.vmem [#allocation2], 24
        %vm521 = vcmask 24576
        %522 = vst.msk [vmem:[%s520] sm:$0x1] %vm521, 0.0
        %523 = vst.msk [vmem:[%s520 + $0x18] sm:$0x1] %vm521, 0.0
        %524 = vst.msk [vmem:[%s520 + $0x30] sm:$0x1] %vm521, 0.0
        %525 = vst.msk [vmem:[%s520 + $0x48] sm:$0x1] %vm521, 0.0
        %526 = vst.msk [vmem:[%s520 + $0x60] sm:$0x1] %vm521, 0.0
        %527 = vst.msk [vmem:[%s520 + $0x78] sm:$0x1] %vm521, 0.0
        %528 = vst.msk [vmem:[%s520 + $0x90] sm:$0x1] %vm521, 0.0
        %529 = vst.msk [vmem:[%s520 + $0xa8] sm:$0x1] %vm521, 0.0
        %530 = vst.msk [vmem:[%s520 + $0xc0] sm:$0x1] %vm521, 0.0
        %531 = vst.msk [vmem:[%s520 + $0xd8] sm:$0x1] %vm521, 0.0
        %532 = vst.msk [vmem:[%s520 + $0xf0] sm:$0x1] %vm521, 0.0
        %533 = vst.msk [vmem:[%s520 + $0x108] sm:$0x1] %vm521, 0.0
        %534 = vst.msk [vmem:[%s520 + $0x120] sm:$0x1] %vm521, 0.0
        %535 = vst.msk [vmem:[%s520 + $0x138] sm:$0x1] %vm521, 0.0
        %536 = vst.msk [vmem:[%s520 + $0x150] sm:$0x1] %vm521, 0.0
        %537 = vst.msk [vmem:[%s520 + $0x168] sm:$0x1] %vm521, 0.0
        %538 = vst.msk [vmem:[%s520 + $0x11] sm:$0x1] %vm521, 0.0
        %539 = vst.msk [vmem:[%s520 + $0x29] sm:$0x1] %vm521, 0.0
        %540 = vst.msk [vmem:[%s520 + $0x41] sm:$0x1] %vm521, 0.0
        %541 = vst.msk [vmem:[%s520 + $0x59] sm:$0x1] %vm521, 0.0
        %542 = vst.msk [vmem:[%s520 + $0x71] sm:$0x1] %vm521, 0.0
        %543 = vst.msk [vmem:[%s520 + $0x89] sm:$0x1] %vm521, 0.0
        %544 = vst.msk [vmem:[%s520 + $0xa1] sm:$0x1] %vm521, 0.0
        %545 = vst.msk [vmem:[%s520 + $0xb9] sm:$0x1] %vm521, 0.0
        %546 = vst.msk [vmem:[%s520 + $0xd1] sm:$0x1] %vm521, 0.0
        %547 = vst.msk [vmem:[%s520 + $0xe9] sm:$0x1] %vm521, 0.0
        %548 = vst.msk [vmem:[%s520 + $0x101] sm:$0x1] %vm521, 0.0
        %549 = vst.msk [vmem:[%s520 + $0x119] sm:$0x1] %vm521, 0.0
        %550 = vst.msk [vmem:[%s520 + $0x131] sm:$0x1] %vm521, 0.0
        %551 = vst.msk [vmem:[%s520 + $0x149] sm:$0x1] %vm521, 0.0
        %552 = vst.msk [vmem:[%s520 + $0x161] sm:$0x1] %vm521, 0.0
        %553 = vst.msk [vmem:[%s520 + $0x179] sm:$0x1] %vm521, 0.0
        %554 = vst.msk [vmem:[%s520 + $0x1] sm:$0xff] %vm511, %v479
        %555 = vst.msk [vmem:[%s520 + $0x9] sm:$0xff] %vm511, %v480
        %556 = vst.msk [vmem:[%s520 + $0x19] sm:$0xff] %vm511, %v481
        %557 = vst.msk [vmem:[%s520 + $0x21] sm:$0xff] %vm511, %v482
        %558 = vst.msk [vmem:[%s520 + $0x31] sm:$0xff] %vm511, %v483
        %559 = vst.msk [vmem:[%s520 + $0x39] sm:$0xff] %vm511, %v484
        %560 = vst.msk [vmem:[%s520 + $0x49] sm:$0xff] %vm511, %v485
        %561 = vst.msk [vmem:[%s520 + $0x51] sm:$0xff] %vm511, %v486
        %562 = vst.msk [vmem:[%s520 + $0x61] sm:$0xff] %vm511, %v487
        %563 = vst.msk [vmem:[%s520 + $0x69] sm:$0xff] %vm511, %v488
        %564 = vst.msk [vmem:[%s520 + $0x79] sm:$0xff] %vm511, %v489
        %565 = vst.msk [vmem:[%s520 + $0x81] sm:$0xff] %vm511, %v490
        %566 = vst.msk [vmem:[%s520 + $0x91] sm:$0xff] %vm511, %v491
        %567 = vst.msk [vmem:[%s520 + $0x99] sm:$0xff] %vm511, %v492
        %568 = vst.msk [vmem:[%s520 + $0xa9] sm:$0xff] %vm511, %v493
        %569 = vst.msk [vmem:[%s520 + $0xb1] sm:$0xff] %vm511, %v494
        %570 = vst.msk [vmem:[%s520 + $0xc1] sm:$0xff] %vm511, %v495
        %571 = vst.msk [vmem:[%s520 + $0xc9] sm:$0xff] %vm511, %v496
        %572 = vst.msk [vmem:[%s520 + $0xd9] sm:$0xff] %vm511, %v497
        %573 = vst.msk [vmem:[%s520 + $0xe1] sm:$0xff] %vm511, %v498
        %574 = vst.msk [vmem:[%s520 + $0xf1] sm:$0xff] %vm511, %v499
        %575 = vst.msk [vmem:[%s520 + $0xf9] sm:$0xff] %vm511, %v500
        %576 = vst.msk [vmem:[%s520 + $0x109] sm:$0xff] %vm511, %v501
        %577 = vst.msk [vmem:[%s520 + $0x111] sm:$0xff] %vm511, %v502
        %578 = vst.msk [vmem:[%s520 + $0x121] sm:$0xff] %vm511, %v503
        %579 = vst.msk [vmem:[%s520 + $0x129] sm:$0xff] %vm511, %v504
        %580 = vst.msk [vmem:[%s520 + $0x139] sm:$0xff] %vm511, %v505
        %581 = vst.msk [vmem:[%s520 + $0x141] sm:$0xff] %vm511, %v506
        %582 = vst.msk [vmem:[%s520 + $0x151] sm:$0xff] %vm511, %v507
        %583 = vst.msk [vmem:[%s520 + $0x159] sm:$0xff] %vm511, %v508
        %584 = vst.msk [vmem:[%s520 + $0x169] sm:$0xff] %vm511, %v509
        %585 = vst.msk [vmem:[%s520 + $0x171] sm:$0xff] %vm511, %v510
        %v586 = vld [vmem:[#allocation2] sm:$0xff]
        %v587 = vld [vmem:[#allocation2 + $0x8] sm:$0xff]
        %v588 = vld [vmem:[#allocation2 + $0x18] sm:$0xff]
        %v589 = vld [vmem:[#allocation2 + $0x20] sm:$0xff]
        %v590 = vld [vmem:[#allocation2 + $0x30] sm:$0xff]
        %v591 = vld [vmem:[#allocation2 + $0x38] sm:$0xff]
        %v592 = vld [vmem:[#allocation2 + $0x48] sm:$0xff]
        %v593 = vld [vmem:[#allocation2 + $0x50] sm:$0xff]
        %v594 = vld [vmem:[#allocation2 + $0x60] sm:$0xff]
        %v595 = vld [vmem:[#allocation2 + $0x68] sm:$0xff]
        %v596 = vld [vmem:[#allocation2 + $0x78] sm:$0xff]
        %v597 = vld [vmem:[#allocation2 + $0x80] sm:$0xff]
        %v598 = vld [vmem:[#allocation2 + $0x90] sm:$0xff]
        %v599 = vld [vmem:[#allocation2 + $0x98] sm:$0xff]
        %v600 = vld [vmem:[#allocation2 + $0xa8] sm:$0xff]
        %v601 = vld [vmem:[#allocation2 + $0xb0] sm:$0xff]
        %v602 = vld [vmem:[#allocation2 + $0xc0] sm:$0xff]
        %v603 = vld [vmem:[#allocation2 + $0xc8] sm:$0xff]
        %v604 = vld [vmem:[#allocation2 + $0xd8] sm:$0xff]
        %v605 = vld [vmem:[#allocation2 + $0xe0] sm:$0xff]
        %v606 = vld [vmem:[#allocation2 + $0xf0] sm:$0xff]
        %v607 = vld [vmem:[#allocation2 + $0xf8] sm:$0xff]
        %v608 = vld [vmem:[#allocation2 + $0x108] sm:$0xff]
        %v609 = vld [vmem:[#allocation2 + $0x110] sm:$0xff]
        %v610 = vld [vmem:[#allocation2 + $0x120] sm:$0xff]
        %v611 = vld [vmem:[#allocation2 + $0x128] sm:$0xff]
        %v612 = vld [vmem:[#allocation2 + $0x138] sm:$0xff]
        %v613 = vld [vmem:[#allocation2 + $0x140] sm:$0xff]
        %v614 = vld [vmem:[#allocation2 + $0x150] sm:$0xff]
        %v615 = vld [vmem:[#allocation2 + $0x158] sm:$0xff]
        %v616 = vld [vmem:[#allocation2 + $0x168] sm:$0xff]
        %v617 = vld [vmem:[#allocation2 + $0x170] sm:$0xff]
        %v618 = vpack.c.bf16 %v587, %v586
        %v619 = vpack.c.bf16 %v589, %v588
        %v620 = vpack.c.bf16 %v591, %v590
        %v621 = vpack.c.bf16 %v593, %v592
        %v622 = vpack.c.bf16 %v595, %v594
        %v623 = vpack.c.bf16 %v597, %v596
        %v624 = vpack.c.bf16 %v599, %v598
        %v625 = vpack.c.bf16 %v601, %v600
        %v626 = vpack.c.bf16 %v603, %v602
        %v627 = vpack.c.bf16 %v605, %v604
        %v628 = vpack.c.bf16 %v607, %v606
        %v629 = vpack.c.bf16 %v609, %v608
        %v630 = vpack.c.bf16 %v611, %v610
        %v631 = vpack.c.bf16 %v613, %v612
        %v632 = vpack.c.bf16 %v615, %v614
        %v633 = vpack.c.bf16 %v617, %v616
        %v634 = vld [vmem:[%s1] sm:$0x3]
        %v635 = vld [vmem:[#allocation2 + $0x1] sm:$0xff]
        %v636 = vld [vmem:[#allocation2 + $0x9] sm:$0xff]
        %v637 = vld [vmem:[#allocation2 + $0x19] sm:$0xff]
        %v638 = vld [vmem:[#allocation2 + $0x21] sm:$0xff]
        %v639 = vld [vmem:[#allocation2 + $0x31] sm:$0xff]
        %v640 = vld [vmem:[#allocation2 + $0x39] sm:$0xff]
        %v641 = vld [vmem:[#allocation2 + $0x49] sm:$0xff]
        %v642 = vld [vmem:[#allocation2 + $0x51] sm:$0xff]
        %v643 = vld [vmem:[#allocation2 + $0x61] sm:$0xff]
        %v644 = vld [vmem:[#allocation2 + $0x69] sm:$0xff]
        %v645 = vld [vmem:[#allocation2 + $0x79] sm:$0xff]
        %v646 = vld [vmem:[#allocation2 + $0x81] sm:$0xff]
        %v647 = vld [vmem:[#allocation2 + $0x91] sm:$0xff]
        %v648 = vld [vmem:[#allocation2 + $0x99] sm:$0xff]
        %v649 = vld [vmem:[#allocation2 + $0xa9] sm:$0xff]
        %v650 = vld [vmem:[#allocation2 + $0xb1] sm:$0xff]
        %v651 = vld [vmem:[#allocation2 + $0xc1] sm:$0xff]
        %v652 = vld [vmem:[#allocation2 + $0xc9] sm:$0xff]
        %v653 = vld [vmem:[#allocation2 + $0xd9] sm:$0xff]
        %v654 = vld [vmem:[#allocation2 + $0xe1] sm:$0xff]
        %v655 = vld [vmem:[#allocation2 + $0xf1] sm:$0xff]
        %v656 = vld [vmem:[#allocation2 + $0xf9] sm:$0xff]
        %v657 = vld [vmem:[#allocation2 + $0x109] sm:$0xff]
        %v658 = vld [vmem:[#allocation2 + $0x111] sm:$0xff]
        %v659 = vld [vmem:[#allocation2 + $0x121] sm:$0xff]
        %v660 = vld [vmem:[#allocation2 + $0x129] sm:$0xff]
        %v661 = vld [vmem:[#allocation2 + $0x139] sm:$0xff]
        %v662 = vld [vmem:[#allocation2 + $0x141] sm:$0xff]
        %v663 = vld [vmem:[#allocation2 + $0x151] sm:$0xff]
        %v664 = vld [vmem:[#allocation2 + $0x159] sm:$0xff]
        %v665 = vld [vmem:[#allocation2 + $0x169] sm:$0xff]
        %v666 = vld [vmem:[#allocation2 + $0x171] sm:$0xff]
        %v667 = vpack.c.bf16 %v636, %v635
        %v668 = vpack.c.bf16 %v638, %v637
        %v669 = vpack.c.bf16 %v640, %v639
        %v670 = vpack.c.bf16 %v642, %v641
        %v671 = vpack.c.bf16 %v644, %v643
        %v672 = vpack.c.bf16 %v646, %v645
        %v673 = vpack.c.bf16 %v648, %v647
        %v674 = vpack.c.bf16 %v650, %v649
        %v675 = vpack.c.bf16 %v652, %v651
        %v676 = vpack.c.bf16 %v654, %v653
        %v677 = vpack.c.bf16 %v656, %v655
        %v678 = vpack.c.bf16 %v658, %v657
        %v679 = vpack.c.bf16 %v660, %v659
        %v680 = vpack.c.bf16 %v662, %v661
        %v681 = vpack.c.bf16 %v664, %v663
        %v682 = vpack.c.bf16 %v666, %v665
        %s683 = scalar_lea.vmem %s1, 2
        %v684 = vld [vmem:[%s683] sm:$0x3]
        %v686 = vsel %vm511, %v667, 0
        %v689 = vsel %vm511, %v668, 0
        %v692 = vsel %vm511, %v669, 0
        %v695 = vsel %vm511, %v670, 0
        %v698 = vsel %vm511, %v671, 0
        %v701 = vsel %vm511, %v672, 0
        %v704 = vsel %vm511, %v673, 0
        %v707 = vsel %vm511, %v674, 0
        %v710 = vsel %vm511, %v675, 0
        %v713 = vsel %vm511, %v676, 0
        %v716 = vsel %vm511, %v677, 0
        %v719 = vsel %vm511, %v678, 0
        %v722 = vsel %vm511, %v679, 0
        %v725 = vsel %vm511, %v680, 0
        %v728 = vsel %vm511, %v681, 0
        %v731 = vsel %vm511, %v682, 0
        %vm733 = vcmask 1041408
        %v735 = vsel %vm733, %v684, 0
        %737 = vmatpush.bf16.msra.mxu0 0
        %738 = vmatpush.bf16.msra.mxu0 0
        %739 = vmatpush.bf16.msra.mxu0 0
        %740 = vmatpush.bf16.msra.mxu0 0
        %741 = vmatpush.bf16.msra.mxu0 0
        %742 = vmatpush.bf16.msra.mxu0 0
        %743 = vmatpush.bf16.msra.mxu0 0
        %744 = vmatpush.bf16.msra.mxu0 %v735
        %745 = vmatmul.bf16.gmra.mxu0 %v686
        %v746 = vpop.f32.mrf.mxu0
        %v747 = vadd.f32 0.0, %v746
        %v748 = vpop.f32.mrf.mxu0
        %v749 = vadd.f32 0.0, %v748
        %750 = vmatmul.bf16.gmra.mxu0 %v689
        %v751 = vpop.f32.mrf.mxu0
        %v752 = vadd.f32 0.0, %v751
        %v753 = vpop.f32.mrf.mxu0
        %v754 = vadd.f32 0.0, %v753
        %755 = vmatmul.bf16.gmra.mxu0 %v692
        %v756 = vpop.f32.mrf.mxu0
        %v757 = vadd.f32 0.0, %v756
        %v758 = vpop.f32.mrf.mxu0
        %v759 = vadd.f32 0.0, %v758
        %760 = vmatmul.bf16.gmra.mxu0 %v695
        %v761 = vpop.f32.mrf.mxu0
        %v762 = vadd.f32 0.0, %v761
        %v763 = vpop.f32.mrf.mxu0
        %v764 = vadd.f32 0.0, %v763
        %765 = vmatmul.bf16.gmra.mxu0 %v698
        %v766 = vpop.f32.mrf.mxu0
        %v767 = vadd.f32 0.0, %v766
        %v768 = vpop.f32.mrf.mxu0
        %v769 = vadd.f32 0.0, %v768
        %770 = vmatmul.bf16.gmra.mxu0 %v701
        %v771 = vpop.f32.mrf.mxu0
        %v772 = vadd.f32 0.0, %v771
        %v773 = vpop.f32.mrf.mxu0
        %v774 = vadd.f32 0.0, %v773
        %775 = vmatmul.bf16.gmra.mxu0 %v704
        %v776 = vpop.f32.mrf.mxu0
        %v777 = vadd.f32 0.0, %v776
        %v778 = vpop.f32.mrf.mxu0
        %v779 = vadd.f32 0.0, %v778
        %780 = vmatmul.bf16.gmra.mxu0 %v707
        %v781 = vpop.f32.mrf.mxu0
        %v782 = vadd.f32 0.0, %v781
        %v783 = vpop.f32.mrf.mxu0
        %v784 = vadd.f32 0.0, %v783
        %785 = vmatmul.bf16.gmra.mxu0 %v710
        %v786 = vpop.f32.mrf.mxu0
        %v787 = vadd.f32 0.0, %v786
        %v788 = vpop.f32.mrf.mxu0
        %v789 = vadd.f32 0.0, %v788
        %790 = vmatmul.bf16.gmra.mxu0 %v713
        %v791 = vpop.f32.mrf.mxu0
        %v792 = vadd.f32 0.0, %v791
        %v793 = vpop.f32.mrf.mxu0
        %v794 = vadd.f32 0.0, %v793
        %795 = vmatmul.bf16.gmra.mxu0 %v716
        %v796 = vpop.f32.mrf.mxu0
        %v797 = vadd.f32 0.0, %v796
        %v798 = vpop.f32.mrf.mxu0
        %v799 = vadd.f32 0.0, %v798
        %800 = vmatmul.bf16.gmra.mxu0 %v719
        %v801 = vpop.f32.mrf.mxu0
        %v802 = vadd.f32 0.0, %v801
        %v803 = vpop.f32.mrf.mxu0
        %v804 = vadd.f32 0.0, %v803
        %805 = vmatmul.bf16.gmra.mxu0 %v722
        %v806 = vpop.f32.mrf.mxu0
        %v807 = vadd.f32 0.0, %v806
        %v808 = vpop.f32.mrf.mxu0
        %v809 = vadd.f32 0.0, %v808
        %810 = vmatmul.bf16.gmra.mxu0 %v725
        %v811 = vpop.f32.mrf.mxu0
        %v812 = vadd.f32 0.0, %v811
        %v813 = vpop.f32.mrf.mxu0
        %v814 = vadd.f32 0.0, %v813
        %815 = vmatmul.bf16.gmra.mxu0 %v728
        %v816 = vpop.f32.mrf.mxu0
        %v817 = vadd.f32 0.0, %v816
        %v818 = vpop.f32.mrf.mxu0
        %v819 = vadd.f32 0.0, %v818
        %820 = vmatmul.bf16.gmra.mxu0 %v731
        %v821 = vpop.f32.mrf.mxu0
        %v822 = vadd.f32 0.0, %v821
        %v823 = vpop.f32.mrf.mxu0
        %v824 = vadd.f32 0.0, %v823
        %825 = vdwg.mxu0
        %v827 = vsel %vm511, %v618, 0
        %v830 = vsel %vm511, %v619, 0
        %v833 = vsel %vm511, %v620, 0
        %v836 = vsel %vm511, %v621, 0
        %v839 = vsel %vm511, %v622, 0
        %v842 = vsel %vm511, %v623, 0
        %v845 = vsel %vm511, %v624, 0
        %v848 = vsel %vm511, %v625, 0
        %v851 = vsel %vm511, %v626, 0
        %v854 = vsel %vm511, %v627, 0
        %v857 = vsel %vm511, %v628, 0
        %v860 = vsel %vm511, %v629, 0
        %v863 = vsel %vm511, %v630, 0
        %v866 = vsel %vm511, %v631, 0
        %v869 = vsel %vm511, %v632, 0
        %v872 = vsel %vm511, %v633, 0
        %v875 = vsel %vm733, %v634, 0
        %877 = vmatpush.bf16.msra.mxu0 0
        %878 = vmatpush.bf16.msra.mxu0 0
        %879 = vmatpush.bf16.msra.mxu0 0
        %880 = vmatpush.bf16.msra.mxu0 0
        %881 = vmatpush.bf16.msra.mxu0 0
        %882 = vmatpush.bf16.msra.mxu0 0
        %883 = vmatpush.bf16.msra.mxu0 0
        %884 = vmatpush.bf16.msra.mxu0 %v875
        %885 = vmatmul.bf16.gmra.mxu0 %v827
        %v886 = vpop.f32.mrf.mxu0
        %v887 = vadd.f32 %v747, %v886
        %v888 = vpop.f32.mrf.mxu0
        %v889 = vadd.f32 %v749, %v888
        %890 = vmatmul.bf16.gmra.mxu0 %v830
        %v891 = vpop.f32.mrf.mxu0
        %v892 = vadd.f32 %v752, %v891
        %v893 = vpop.f32.mrf.mxu0
        %v894 = vadd.f32 %v754, %v893
        %895 = vmatmul.bf16.gmra.mxu0 %v833
        %v896 = vpop.f32.mrf.mxu0
        %v897 = vadd.f32 %v757, %v896
        %v898 = vpop.f32.mrf.mxu0
        %v899 = vadd.f32 %v759, %v898
        %900 = vmatmul.bf16.gmra.mxu0 %v836
        %v901 = vpop.f32.mrf.mxu0
        %v902 = vadd.f32 %v762, %v901
        %v903 = vpop.f32.mrf.mxu0
        %v904 = vadd.f32 %v764, %v903
        %905 = vmatmul.bf16.gmra.mxu0 %v839
        %v906 = vpop.f32.mrf.mxu0
        %v907 = vadd.f32 %v767, %v906
        %v908 = vpop.f32.mrf.mxu0
        %v909 = vadd.f32 %v769, %v908
        %910 = vmatmul.bf16.gmra.mxu0 %v842
        %v911 = vpop.f32.mrf.mxu0
        %v912 = vadd.f32 %v772, %v911
        %v913 = vpop.f32.mrf.mxu0
        %v914 = vadd.f32 %v774, %v913
        %915 = vmatmul.bf16.gmra.mxu0 %v845
        %v916 = vpop.f32.mrf.mxu0
        %v917 = vadd.f32 %v777, %v916
        %v918 = vpop.f32.mrf.mxu0
        %v919 = vadd.f32 %v779, %v918
        %920 = vmatmul.bf16.gmra.mxu0 %v848
        %v921 = vpop.f32.mrf.mxu0
        %v922 = vadd.f32 %v782, %v921
        %v923 = vpop.f32.mrf.mxu0
        %v924 = vadd.f32 %v784, %v923
        %925 = vmatmul.bf16.gmra.mxu0 %v851
        %v926 = vpop.f32.mrf.mxu0
        %v927 = vadd.f32 %v787, %v926
        %v928 = vpop.f32.mrf.mxu0
        %v929 = vadd.f32 %v789, %v928
        %930 = vmatmul.bf16.gmra.mxu0 %v854
        %v931 = vpop.f32.mrf.mxu0
        %v932 = vadd.f32 %v792, %v931
        %v933 = vpop.f32.mrf.mxu0
        %v934 = vadd.f32 %v794, %v933
        %935 = vmatmul.bf16.gmra.mxu0 %v857
        %v936 = vpop.f32.mrf.mxu0
        %v937 = vadd.f32 %v797, %v936
        %v938 = vpop.f32.mrf.mxu0
        %v939 = vadd.f32 %v799, %v938
        %940 = vmatmul.bf16.gmra.mxu0 %v860
        %v941 = vpop.f32.mrf.mxu0
        %v942 = vadd.f32 %v802, %v941
        %v943 = vpop.f32.mrf.mxu0
        %v944 = vadd.f32 %v804, %v943
        %945 = vmatmul.bf16.gmra.mxu0 %v863
        %v946 = vpop.f32.mrf.mxu0
        %v947 = vadd.f32 %v807, %v946
        %v948 = vpop.f32.mrf.mxu0
        %v949 = vadd.f32 %v809, %v948
        %950 = vmatmul.bf16.gmra.mxu0 %v866
        %v951 = vpop.f32.mrf.mxu0
        %v952 = vadd.f32 %v812, %v951
        %v953 = vpop.f32.mrf.mxu0
        %v954 = vadd.f32 %v814, %v953
        %955 = vmatmul.bf16.gmra.mxu0 %v869
        %v956 = vpop.f32.mrf.mxu0
        %v957 = vadd.f32 %v817, %v956
        %v958 = vpop.f32.mrf.mxu0
        %v959 = vadd.f32 %v819, %v958
        %960 = vmatmul.bf16.gmra.mxu0 %v872
        %v961 = vpop.f32.mrf.mxu0
        %v962 = vadd.f32 %v822, %v961
        %v963 = vpop.f32.mrf.mxu0
        %v964 = vadd.f32 %v824, %v963
        %965 = vdwg.mxu0
        %v966 = vld [vmem:[#allocation2 + $0x2] sm:$0xff]
        %v967 = vld [vmem:[#allocation2 + $0xa] sm:$0xff]
        %v968 = vld [vmem:[#allocation2 + $0x1a] sm:$0xff]
        %v969 = vld [vmem:[#allocation2 + $0x22] sm:$0xff]
        %v970 = vld [vmem:[#allocation2 + $0x32] sm:$0xff]
        %v971 = vld [vmem:[#allocation2 + $0x3a] sm:$0xff]
        %v972 = vld [vmem:[#allocation2 + $0x4a] sm:$0xff]
        %v973 = vld [vmem:[#allocation2 + $0x52] sm:$0xff]
        %v974 = vld [vmem:[#allocation2 + $0x62] sm:$0xff]
        %v975 = vld [vmem:[#allocation2 + $0x6a] sm:$0xff]
        %v976 = vld [vmem:[#allocation2 + $0x7a] sm:$0xff]
        %v977 = vld [vmem:[#allocation2 + $0x82] sm:$0xff]
        %v978 = vld [vmem:[#allocation2 + $0x92] sm:$0xff]
        %v979 = vld [vmem:[#allocation2 + $0x9a] sm:$0xff]
        %v980 = vld [vmem:[#allocation2 + $0xaa] sm:$0xff]
        %v981 = vld [vmem:[#allocation2 + $0xb2] sm:$0xff]
        %v982 = vld [vmem:[#allocation2 + $0xc2] sm:$0xff]
        %v983 = vld [vmem:[#allocation2 + $0xca] sm:$0xff]
        %v984 = vld [vmem:[#allocation2 + $0xda] sm:$0xff]
        %v985 = vld [vmem:[#allocation2 + $0xe2] sm:$0xff]
        %v986 = vld [vmem:[#allocation2 + $0xf2] sm:$0xff]
        %v987 = vld [vmem:[#allocation2 + $0xfa] sm:$0xff]
        %v988 = vld [vmem:[#allocation2 + $0x10a] sm:$0xff]
        %v989 = vld [vmem:[#allocation2 + $0x112] sm:$0xff]
        %v990 = vld [vmem:[#allocation2 + $0x122] sm:$0xff]
        %v991 = vld [vmem:[#allocation2 + $0x12a] sm:$0xff]
        %v992 = vld [vmem:[#allocation2 + $0x13a] sm:$0xff]
        %v993 = vld [vmem:[#allocation2 + $0x142] sm:$0xff]
        %v994 = vld [vmem:[#allocation2 + $0x152] sm:$0xff]
        %v995 = vld [vmem:[#allocation2 + $0x15a] sm:$0xff]
        %v996 = vld [vmem:[#allocation2 + $0x16a] sm:$0xff]
        %v997 = vld [vmem:[#allocation2 + $0x172] sm:$0xff]
        %v998 = vpack.c.bf16 %v967, %v966
        %v999 = vpack.c.bf16 %v969, %v968
        %v1000 = vpack.c.bf16 %v971, %v970
        %v1001 = vpack.c.bf16 %v973, %v972
        %v1002 = vpack.c.bf16 %v975, %v974
        %v1003 = vpack.c.bf16 %v977, %v976
        %v1004 = vpack.c.bf16 %v979, %v978
        %v1005 = vpack.c.bf16 %v981, %v980
        %v1006 = vpack.c.bf16 %v983, %v982
        %v1007 = vpack.c.bf16 %v985, %v984
        %v1008 = vpack.c.bf16 %v987, %v986
        %v1009 = vpack.c.bf16 %v989, %v988
        %v1010 = vpack.c.bf16 %v991, %v990
        %v1011 = vpack.c.bf16 %v993, %v992
        %v1012 = vpack.c.bf16 %v995, %v994
        %v1013 = vpack.c.bf16 %v997, %v996
        %s1014 = scalar_lea.vmem %s1, 4
        %v1015 = vld [vmem:[%s1014] sm:$0x3]
        %v1017 = vsel %vm511, %v998, 0
        %v1020 = vsel %vm511, %v999, 0
        %v1023 = vsel %vm511, %v1000, 0
        %v1026 = vsel %vm511, %v1001, 0
        %v1029 = vsel %vm511, %v1002, 0
        %v1032 = vsel %vm511, %v1003, 0
        %v1035 = vsel %vm511, %v1004, 0
        %v1038 = vsel %vm511, %v1005, 0
        %v1041 = vsel %vm511, %v1006, 0
        %v1044 = vsel %vm511, %v1007, 0
        %v1047 = vsel %vm511, %v1008, 0
        %v1050 = vsel %vm511, %v1009, 0
        %v1053 = vsel %vm511, %v1010, 0
        %v1056 = vsel %vm511, %v1011, 0
        %v1059 = vsel %vm511, %v1012, 0
        %v1062 = vsel %vm511, %v1013, 0
        %v1065 = vsel %vm733, %v1015, 0
        %1067 = vmatpush.bf16.msra.mxu0 0
        %1068 = vmatpush.bf16.msra.mxu0 0
        %1069 = vmatpush.bf16.msra.mxu0 0
        %1070 = vmatpush.bf16.msra.mxu0 0
        %1071 = vmatpush.bf16.msra.mxu0 0
        %1072 = vmatpush.bf16.msra.mxu0 0
        %1073 = vmatpush.bf16.msra.mxu0 0
        %1074 = vmatpush.bf16.msra.mxu0 %v1065
        %1075 = vmatmul.bf16.gmra.mxu0 %v1017
        %v1076 = vpop.f32.mrf.mxu0
        %v1077 = vadd.f32 0.0, %v1076
        %v1078 = vpop.f32.mrf.mxu0
        %v1079 = vadd.f32 0.0, %v1078
        %1080 = vmatmul.bf16.gmra.mxu0 %v1020
        %v1081 = vpop.f32.mrf.mxu0
        %v1082 = vadd.f32 0.0, %v1081
        %v1083 = vpop.f32.mrf.mxu0
        %v1084 = vadd.f32 0.0, %v1083
        %1085 = vmatmul.bf16.gmra.mxu0 %v1023
        %v1086 = vpop.f32.mrf.mxu0
        %v1087 = vadd.f32 0.0, %v1086
        %v1088 = vpop.f32.mrf.mxu0
        %v1089 = vadd.f32 0.0, %v1088
        %1090 = vmatmul.bf16.gmra.mxu0 %v1026
        %v1091 = vpop.f32.mrf.mxu0
        %v1092 = vadd.f32 0.0, %v1091
        %v1093 = vpop.f32.mrf.mxu0
        %v1094 = vadd.f32 0.0, %v1093
        %1095 = vmatmul.bf16.gmra.mxu0 %v1029
        %v1096 = vpop.f32.mrf.mxu0
        %v1097 = vadd.f32 0.0, %v1096
        %v1098 = vpop.f32.mrf.mxu0
        %v1099 = vadd.f32 0.0, %v1098
        %1100 = vmatmul.bf16.gmra.mxu0 %v1032
        %v1101 = vpop.f32.mrf.mxu0
        %v1102 = vadd.f32 0.0, %v1101
        %v1103 = vpop.f32.mrf.mxu0
        %v1104 = vadd.f32 0.0, %v1103
        %1105 = vmatmul.bf16.gmra.mxu0 %v1035
        %v1106 = vpop.f32.mrf.mxu0
        %v1107 = vadd.f32 0.0, %v1106
        %v1108 = vpop.f32.mrf.mxu0
        %v1109 = vadd.f32 0.0, %v1108
        %1110 = vmatmul.bf16.gmra.mxu0 %v1038
        %v1111 = vpop.f32.mrf.mxu0
        %v1112 = vadd.f32 0.0, %v1111
        %v1113 = vpop.f32.mrf.mxu0
        %v1114 = vadd.f32 0.0, %v1113
        %1115 = vmatmul.bf16.gmra.mxu0 %v1041
        %v1116 = vpop.f32.mrf.mxu0
        %v1117 = vadd.f32 0.0, %v1116
        %v1118 = vpop.f32.mrf.mxu0
        %v1119 = vadd.f32 0.0, %v1118
        %1120 = vmatmul.bf16.gmra.mxu0 %v1044
        %v1121 = vpop.f32.mrf.mxu0
        %v1122 = vadd.f32 0.0, %v1121
        %v1123 = vpop.f32.mrf.mxu0
        %v1124 = vadd.f32 0.0, %v1123
        %1125 = vmatmul.bf16.gmra.mxu0 %v1047
        %v1126 = vpop.f32.mrf.mxu0
        %v1127 = vadd.f32 0.0, %v1126
        %v1128 = vpop.f32.mrf.mxu0
        %v1129 = vadd.f32 0.0, %v1128
        %1130 = vmatmul.bf16.gmra.mxu0 %v1050
        %v1131 = vpop.f32.mrf.mxu0
        %v1132 = vadd.f32 0.0, %v1131
        %v1133 = vpop.f32.mrf.mxu0
        %v1134 = vadd.f32 0.0, %v1133
        %1135 = vmatmul.bf16.gmra.mxu0 %v1053
        %v1136 = vpop.f32.mrf.mxu0
        %v1137 = vadd.f32 0.0, %v1136
        %v1138 = vpop.f32.mrf.mxu0
        %v1139 = vadd.f32 0.0, %v1138
        %1140 = vmatmul.bf16.gmra.mxu0 %v1056
        %v1141 = vpop.f32.mrf.mxu0
        %v1142 = vadd.f32 0.0, %v1141
        %v1143 = vpop.f32.mrf.mxu0
        %v1144 = vadd.f32 0.0, %v1143
        %1145 = vmatmul.bf16.gmra.mxu0 %v1059
        %v1146 = vpop.f32.mrf.mxu0
        %v1147 = vadd.f32 0.0, %v1146
        %v1148 = vpop.f32.mrf.mxu0
        %v1149 = vadd.f32 0.0, %v1148
        %1150 = vmatmul.bf16.gmra.mxu0 %v1062
        %v1151 = vpop.f32.mrf.mxu0
        %v1152 = vadd.f32 0.0, %v1151
        %v1153 = vpop.f32.mrf.mxu0
        %v1154 = vadd.f32 0.0, %v1153
        %1155 = vdwg.mxu0
        %v1156 = vadd.f32 %v887, %v1077
        %v1157 = vadd.f32 %v889, %v1079
        %v1158 = vadd.f32 %v892, %v1082
        %v1159 = vadd.f32 %v894, %v1084
        %v1160 = vadd.f32 %v897, %v1087
        %v1161 = vadd.f32 %v899, %v1089
        %v1162 = vadd.f32 %v902, %v1092
        %v1163 = vadd.f32 %v904, %v1094
        %v1164 = vadd.f32 %v907, %v1097
        %v1165 = vadd.f32 %v909, %v1099
        %v1166 = vadd.f32 %v912, %v1102
        %v1167 = vadd.f32 %v914, %v1104
        %v1168 = vadd.f32 %v917, %v1107
        %v1169 = vadd.f32 %v919, %v1109
        %v1170 = vadd.f32 %v922, %v1112
        %v1171 = vadd.f32 %v924, %v1114
        %v1172 = vadd.f32 %v927, %v1117
        %v1173 = vadd.f32 %v929, %v1119
        %v1174 = vadd.f32 %v932, %v1122
        %v1175 = vadd.f32 %v934, %v1124
        %v1176 = vadd.f32 %v937, %v1127
        %v1177 = vadd.f32 %v939, %v1129
        %v1178 = vadd.f32 %v942, %v1132
        %v1179 = vadd.f32 %v944, %v1134
        %v1180 = vadd.f32 %v947, %v1137
        %v1181 = vadd.f32 %v949, %v1139
        %v1182 = vadd.f32 %v952, %v1142
        %v1183 = vadd.f32 %v954, %v1144
        %v1184 = vadd.f32 %v957, %v1147
        %v1185 = vadd.f32 %v959, %v1149
        %v1186 = vadd.f32 %v962, %v1152
        %v1187 = vadd.f32 %v964, %v1154
        %v1188 = vld [vmem:[%s520] sm:$0xff]
        %v1189 = vld [vmem:[%s520 + $0x8] sm:$0xff]
        %v1190 = vld [vmem:[%s520 + $0x18] sm:$0xff]
        %v1191 = vld [vmem:[%s520 + $0x20] sm:$0xff]
        %v1192 = vld [vmem:[%s520 + $0x30] sm:$0xff]
        %v1193 = vld [vmem:[%s520 + $0x38] sm:$0xff]
        %v1194 = vld [vmem:[%s520 + $0x48] sm:$0xff]
        %v1195 = vld [vmem:[%s520 + $0x50] sm:$0xff]
        %v1196 = vld [vmem:[%s520 + $0x60] sm:$0xff]
        %v1197 = vld [vmem:[%s520 + $0x68] sm:$0xff]
        %v1198 = vld [vmem:[%s520 + $0x78] sm:$0xff]
        %v1199 = vld [vmem:[%s520 + $0x80] sm:$0xff]
        %v1200 = vld [vmem:[%s520 + $0x90] sm:$0xff]
        %v1201 = vld [vmem:[%s520 + $0x98] sm:$0xff]
        %v1202 = vld [vmem:[%s520 + $0xa8] sm:$0xff]
        %v1203 = vld [vmem:[%s520 + $0xb0] sm:$0xff]
        %v1204 = vld [vmem:[%s520 + $0xc0] sm:$0xff]
        %v1205 = vld [vmem:[%s520 + $0xc8] sm:$0xff]
        %v1206 = vld [vmem:[%s520 + $0xd8] sm:$0xff]
        %v1207 = vld [vmem:[%s520 + $0xe0] sm:$0xff]
        %v1208 = vld [vmem:[%s520 + $0xf0] sm:$0xff]
        %v1209 = vld [vmem:[%s520 + $0xf8] sm:$0xff]
        %v1210 = vld [vmem:[%s520 + $0x108] sm:$0xff]
        %v1211 = vld [vmem:[%s520 + $0x110] sm:$0xff]
        %v1212 = vld [vmem:[%s520 + $0x120] sm:$0xff]
        %v1213 = vld [vmem:[%s520 + $0x128] sm:$0xff]
        %v1214 = vld [vmem:[%s520 + $0x138] sm:$0xff]
        %v1215 = vld [vmem:[%s520 + $0x140] sm:$0xff]
        %v1216 = vld [vmem:[%s520 + $0x150] sm:$0xff]
        %v1217 = vld [vmem:[%s520 + $0x158] sm:$0xff]
        %v1218 = vld [vmem:[%s520 + $0x168] sm:$0xff]
        %v1219 = vld [vmem:[%s520 + $0x170] sm:$0xff]
        %v1220 = vpack.c.bf16 %v1189, %v1188
        %v1221 = vpack.c.bf16 %v1191, %v1190
        %v1222 = vpack.c.bf16 %v1193, %v1192
        %v1223 = vpack.c.bf16 %v1195, %v1194
        %v1224 = vpack.c.bf16 %v1197, %v1196
        %v1225 = vpack.c.bf16 %v1199, %v1198
        %v1226 = vpack.c.bf16 %v1201, %v1200
        %v1227 = vpack.c.bf16 %v1203, %v1202
        %v1228 = vpack.c.bf16 %v1205, %v1204
        %v1229 = vpack.c.bf16 %v1207, %v1206
        %v1230 = vpack.c.bf16 %v1209, %v1208
        %v1231 = vpack.c.bf16 %v1211, %v1210
        %v1232 = vpack.c.bf16 %v1213, %v1212
        %v1233 = vpack.c.bf16 %v1215, %v1214
        %v1234 = vpack.c.bf16 %v1217, %v1216
        %v1235 = vpack.c.bf16 %v1219, %v1218
        %s1236 = scalar_lea.vmem %s1, 6
        %v1237 = vld [vmem:[%s1236] sm:$0x3]
        %v1239 = vsel %vm511, %v1220, 0
        %v1242 = vsel %vm511, %v1221, 0
        %v1245 = vsel %vm511, %v1222, 0
        %v1248 = vsel %vm511, %v1223, 0
        %v1251 = vsel %vm511, %v1224, 0
        %v1254 = vsel %vm511, %v1225, 0
        %v1257 = vsel %vm511, %v1226, 0
        %v1260 = vsel %vm511, %v1227, 0
        %v1263 = vsel %vm511, %v1228, 0
        %v1266 = vsel %vm511, %v1229, 0
        %v1269 = vsel %vm511, %v1230, 0
        %v1272 = vsel %vm511, %v1231, 0
        %v1275 = vsel %vm511, %v1232, 0
        %v1278 = vsel %vm511, %v1233, 0
        %v1281 = vsel %vm511, %v1234, 0
        %v1284 = vsel %vm511, %v1235, 0
        %v1287 = vsel %vm733, %v1237, 0
        %1289 = vmatpush.bf16.msra.mxu0 0
        %1290 = vmatpush.bf16.msra.mxu0 0
        %1291 = vmatpush.bf16.msra.mxu0 0
        %1292 = vmatpush.bf16.msra.mxu0 0
        %1293 = vmatpush.bf16.msra.mxu0 0
        %1294 = vmatpush.bf16.msra.mxu0 0
        %1295 = vmatpush.bf16.msra.mxu0 0
        %1296 = vmatpush.bf16.msra.mxu0 %v1287
        %1297 = vmatmul.bf16.gmra.mxu0 %v1239
        %v1298 = vpop.f32.mrf.mxu0
        %v1299 = vadd.f32 0.0, %v1298
        %v1300 = vpop.f32.mrf.mxu0
        %v1301 = vadd.f32 0.0, %v1300
        %1302 = vmatmul.bf16.gmra.mxu0 %v1242
        %v1303 = vpop.f32.mrf.mxu0
        %v1304 = vadd.f32 0.0, %v1303
        %v1305 = vpop.f32.mrf.mxu0
        %v1306 = vadd.f32 0.0, %v1305
        %1307 = vmatmul.bf16.gmra.mxu0 %v1245
        %v1308 = vpop.f32.mrf.mxu0
        %v1309 = vadd.f32 0.0, %v1308
        %v1310 = vpop.f32.mrf.mxu0
        %v1311 = vadd.f32 0.0, %v1310
        %1312 = vmatmul.bf16.gmra.mxu0 %v1248
        %v1313 = vpop.f32.mrf.mxu0
        %v1314 = vadd.f32 0.0, %v1313
        %v1315 = vpop.f32.mrf.mxu0
        %v1316 = vadd.f32 0.0, %v1315
        %1317 = vmatmul.bf16.gmra.mxu0 %v1251
        %v1318 = vpop.f32.mrf.mxu0
        %v1319 = vadd.f32 0.0, %v1318
        %v1320 = vpop.f32.mrf.mxu0
        %v1321 = vadd.f32 0.0, %v1320
        %1322 = vmatmul.bf16.gmra.mxu0 %v1254
        %v1323 = vpop.f32.mrf.mxu0
        %v1324 = vadd.f32 0.0, %v1323
        %v1325 = vpop.f32.mrf.mxu0
        %v1326 = vadd.f32 0.0, %v1325
        %1327 = vmatmul.bf16.gmra.mxu0 %v1257
        %v1328 = vpop.f32.mrf.mxu0
        %v1329 = vadd.f32 0.0, %v1328
        %v1330 = vpop.f32.mrf.mxu0
        %v1331 = vadd.f32 0.0, %v1330
        %1332 = vmatmul.bf16.gmra.mxu0 %v1260
        %v1333 = vpop.f32.mrf.mxu0
        %v1334 = vadd.f32 0.0, %v1333
        %v1335 = vpop.f32.mrf.mxu0
        %v1336 = vadd.f32 0.0, %v1335
        %1337 = vmatmul.bf16.gmra.mxu0 %v1263
        %v1338 = vpop.f32.mrf.mxu0
        %v1339 = vadd.f32 0.0, %v1338
        %v1340 = vpop.f32.mrf.mxu0
        %v1341 = vadd.f32 0.0, %v1340
        %1342 = vmatmul.bf16.gmra.mxu0 %v1266
        %v1343 = vpop.f32.mrf.mxu0
        %v1344 = vadd.f32 0.0, %v1343
        %v1345 = vpop.f32.mrf.mxu0
        %v1346 = vadd.f32 0.0, %v1345
        %1347 = vmatmul.bf16.gmra.mxu0 %v1269
        %v1348 = vpop.f32.mrf.mxu0
        %v1349 = vadd.f32 0.0, %v1348
        %v1350 = vpop.f32.mrf.mxu0
        %v1351 = vadd.f32 0.0, %v1350
        %1352 = vmatmul.bf16.gmra.mxu0 %v1272
        %v1353 = vpop.f32.mrf.mxu0
        %v1354 = vadd.f32 0.0, %v1353
        %v1355 = vpop.f32.mrf.mxu0
        %v1356 = vadd.f32 0.0, %v1355
        %1357 = vmatmul.bf16.gmra.mxu0 %v1275
        %v1358 = vpop.f32.mrf.mxu0
        %v1359 = vadd.f32 0.0, %v1358
        %v1360 = vpop.f32.mrf.mxu0
        %v1361 = vadd.f32 0.0, %v1360
        %1362 = vmatmul.bf16.gmra.mxu0 %v1278
        %v1363 = vpop.f32.mrf.mxu0
        %v1364 = vadd.f32 0.0, %v1363
        %v1365 = vpop.f32.mrf.mxu0
        %v1366 = vadd.f32 0.0, %v1365
        %1367 = vmatmul.bf16.gmra.mxu0 %v1281
        %v1368 = vpop.f32.mrf.mxu0
        %v1369 = vadd.f32 0.0, %v1368
        %v1370 = vpop.f32.mrf.mxu0
        %v1371 = vadd.f32 0.0, %v1370
        %1372 = vmatmul.bf16.gmra.mxu0 %v1284
        %v1373 = vpop.f32.mrf.mxu0
        %v1374 = vadd.f32 0.0, %v1373
        %v1375 = vpop.f32.mrf.mxu0
        %v1376 = vadd.f32 0.0, %v1375
        %1377 = vdwg.mxu0
        %v1378 = vadd.f32 %v1156, %v1299
        %v1379 = vadd.f32 %v1157, %v1301
        %v1380 = vadd.f32 %v1158, %v1304
        %v1381 = vadd.f32 %v1159, %v1306
        %v1382 = vadd.f32 %v1160, %v1309
        %v1383 = vadd.f32 %v1161, %v1311
        %v1384 = vadd.f32 %v1162, %v1314
        %v1385 = vadd.f32 %v1163, %v1316
        %v1386 = vadd.f32 %v1164, %v1319
        %v1387 = vadd.f32 %v1165, %v1321
        %v1388 = vadd.f32 %v1166, %v1324
        %v1389 = vadd.f32 %v1167, %v1326
        %v1390 = vadd.f32 %v1168, %v1329
        %v1391 = vadd.f32 %v1169, %v1331
        %v1392 = vadd.f32 %v1170, %v1334
        %v1393 = vadd.f32 %v1171, %v1336
        %v1394 = vadd.f32 %v1172, %v1339
        %v1395 = vadd.f32 %v1173, %v1341
        %v1396 = vadd.f32 %v1174, %v1344
        %v1397 = vadd.f32 %v1175, %v1346
        %v1398 = vadd.f32 %v1176, %v1349
        %v1399 = vadd.f32 %v1177, %v1351
        %v1400 = vadd.f32 %v1178, %v1354
        %v1401 = vadd.f32 %v1179, %v1356
        %v1402 = vadd.f32 %v1180, %v1359
        %v1403 = vadd.f32 %v1181, %v1361
        %v1404 = vadd.f32 %v1182, %v1364
        %v1405 = vadd.f32 %v1183, %v1366
        %v1406 = vadd.f32 %v1184, %v1369
        %v1407 = vadd.f32 %v1185, %v1371
        %v1408 = vadd.f32 %v1186, %v1374
        %v1409 = vadd.f32 %v1187, %v1376
        %v1410 = vld [vmem:[%s520 + $0x1] sm:$0xff]
        %v1411 = vld [vmem:[%s520 + $0x9] sm:$0xff]
        %v1412 = vld [vmem:[%s520 + $0x19] sm:$0xff]
        %v1413 = vld [vmem:[%s520 + $0x21] sm:$0xff]
        %v1414 = vld [vmem:[%s520 + $0x31] sm:$0xff]
        %v1415 = vld [vmem:[%s520 + $0x39] sm:$0xff]
        %v1416 = vld [vmem:[%s520 + $0x49] sm:$0xff]
        %v1417 = vld [vmem:[%s520 + $0x51] sm:$0xff]
        %v1418 = vld [vmem:[%s520 + $0x61] sm:$0xff]
        %v1419 = vld [vmem:[%s520 + $0x69] sm:$0xff]
        %v1420 = vld [vmem:[%s520 + $0x79] sm:$0xff]
        %v1421 = vld [vmem:[%s520 + $0x81] sm:$0xff]
        %v1422 = vld [vmem:[%s520 + $0x91] sm:$0xff]
        %v1423 = vld [vmem:[%s520 + $0x99] sm:$0xff]
        %v1424 = vld [vmem:[%s520 + $0xa9] sm:$0xff]
        %v1425 = vld [vmem:[%s520 + $0xb1] sm:$0xff]
        %v1426 = vld [vmem:[%s520 + $0xc1] sm:$0xff]
        %v1427 = vld [vmem:[%s520 + $0xc9] sm:$0xff]
        %v1428 = vld [vmem:[%s520 + $0xd9] sm:$0xff]
        %v1429 = vld [vmem:[%s520 + $0xe1] sm:$0xff]
        %v1430 = vld [vmem:[%s520 + $0xf1] sm:$0xff]
        %v1431 = vld [vmem:[%s520 + $0xf9] sm:$0xff]
        %v1432 = vld [vmem:[%s520 + $0x109] sm:$0xff]
        %v1433 = vld [vmem:[%s520 + $0x111] sm:$0xff]
        %v1434 = vld [vmem:[%s520 + $0x121] sm:$0xff]
        %v1435 = vld [vmem:[%s520 + $0x129] sm:$0xff]
        %v1436 = vld [vmem:[%s520 + $0x139] sm:$0xff]
        %v1437 = vld [vmem:[%s520 + $0x141] sm:$0xff]
        %v1438 = vld [vmem:[%s520 + $0x151] sm:$0xff]
        %v1439 = vld [vmem:[%s520 + $0x159] sm:$0xff]
        %v1440 = vld [vmem:[%s520 + $0x169] sm:$0xff]
        %v1441 = vld [vmem:[%s520 + $0x171] sm:$0xff]
        %v1442 = vpack.c.bf16 %v1411, %v1410
        %v1443 = vpack.c.bf16 %v1413, %v1412
        %v1444 = vpack.c.bf16 %v1415, %v1414
        %v1445 = vpack.c.bf16 %v1417, %v1416
        %v1446 = vpack.c.bf16 %v1419, %v1418
        %v1447 = vpack.c.bf16 %v1421, %v1420
        %v1448 = vpack.c.bf16 %v1423, %v1422
        %v1449 = vpack.c.bf16 %v1425, %v1424
        %v1450 = vpack.c.bf16 %v1427, %v1426
        %v1451 = vpack.c.bf16 %v1429, %v1428
        %v1452 = vpack.c.bf16 %v1431, %v1430
        %v1453 = vpack.c.bf16 %v1433, %v1432
        %v1454 = vpack.c.bf16 %v1435, %v1434
        %v1455 = vpack.c.bf16 %v1437, %v1436
        %v1456 = vpack.c.bf16 %v1439, %v1438
        %v1457 = vpack.c.bf16 %v1441, %v1440
        %s1458 = scalar_lea.vmem %s1, 8
        %v1459 = vld [vmem:[%s1458] sm:$0x3]
        %v1461 = vsel %vm511, %v1442, 0
        %v1464 = vsel %vm511, %v1443, 0
        %v1467 = vsel %vm511, %v1444, 0
        %v1470 = vsel %vm511, %v1445, 0
        %v1473 = vsel %vm511, %v1446, 0
        %v1476 = vsel %vm511, %v1447, 0
        %v1479 = vsel %vm511, %v1448, 0
        %v1482 = vsel %vm511, %v1449, 0
        %v1485 = vsel %vm511, %v1450, 0
        %v1488 = vsel %vm511, %v1451, 0
        %v1491 = vsel %vm511, %v1452, 0
        %v1494 = vsel %vm511, %v1453, 0
        %v1497 = vsel %vm511, %v1454, 0
        %v1500 = vsel %vm511, %v1455, 0
        %v1503 = vsel %vm511, %v1456, 0
        %v1506 = vsel %vm511, %v1457, 0
        %v1509 = vsel %vm733, %v1459, 0
        %1511 = vmatpush.bf16.msra.mxu0 0
        %1512 = vmatpush.bf16.msra.mxu0 0
        %1513 = vmatpush.bf16.msra.mxu0 0
        %1514 = vmatpush.bf16.msra.mxu0 0
        %1515 = vmatpush.bf16.msra.mxu0 0
        %1516 = vmatpush.bf16.msra.mxu0 0
        %1517 = vmatpush.bf16.msra.mxu0 0
        %1518 = vmatpush.bf16.msra.mxu0 %v1509
        %1519 = vmatmul.bf16.gmra.mxu0 %v1461
        %v1520 = vpop.f32.mrf.mxu0
        %v1521 = vadd.f32 0.0, %v1520
        %v1522 = vpop.f32.mrf.mxu0
        %v1523 = vadd.f32 0.0, %v1522
        %1524 = vmatmul.bf16.gmra.mxu0 %v1464
        %v1525 = vpop.f32.mrf.mxu0
        %v1526 = vadd.f32 0.0, %v1525
        %v1527 = vpop.f32.mrf.mxu0
        %v1528 = vadd.f32 0.0, %v1527
        %1529 = vmatmul.bf16.gmra.mxu0 %v1467
        %v1530 = vpop.f32.mrf.mxu0
        %v1531 = vadd.f32 0.0, %v1530
        %v1532 = vpop.f32.mrf.mxu0
        %v1533 = vadd.f32 0.0, %v1532
        %1534 = vmatmul.bf16.gmra.mxu0 %v1470
        %v1535 = vpop.f32.mrf.mxu0
        %v1536 = vadd.f32 0.0, %v1535
        %v1537 = vpop.f32.mrf.mxu0
        %v1538 = vadd.f32 0.0, %v1537
        %1539 = vmatmul.bf16.gmra.mxu0 %v1473
        %v1540 = vpop.f32.mrf.mxu0
        %v1541 = vadd.f32 0.0, %v1540
        %v1542 = vpop.f32.mrf.mxu0
        %v1543 = vadd.f32 0.0, %v1542
        %1544 = vmatmul.bf16.gmra.mxu0 %v1476
        %v1545 = vpop.f32.mrf.mxu0
        %v1546 = vadd.f32 0.0, %v1545
        %v1547 = vpop.f32.mrf.mxu0
        %v1548 = vadd.f32 0.0, %v1547
        %1549 = vmatmul.bf16.gmra.mxu0 %v1479
        %v1550 = vpop.f32.mrf.mxu0
        %v1551 = vadd.f32 0.0, %v1550
        %v1552 = vpop.f32.mrf.mxu0
        %v1553 = vadd.f32 0.0, %v1552
        %1554 = vmatmul.bf16.gmra.mxu0 %v1482
        %v1555 = vpop.f32.mrf.mxu0
        %v1556 = vadd.f32 0.0, %v1555
        %v1557 = vpop.f32.mrf.mxu0
        %v1558 = vadd.f32 0.0, %v1557
        %1559 = vmatmul.bf16.gmra.mxu0 %v1485
        %v1560 = vpop.f32.mrf.mxu0
        %v1561 = vadd.f32 0.0, %v1560
        %v1562 = vpop.f32.mrf.mxu0
        %v1563 = vadd.f32 0.0, %v1562
        %1564 = vmatmul.bf16.gmra.mxu0 %v1488
        %v1565 = vpop.f32.mrf.mxu0
        %v1566 = vadd.f32 0.0, %v1565
        %v1567 = vpop.f32.mrf.mxu0
        %v1568 = vadd.f32 0.0, %v1567
        %1569 = vmatmul.bf16.gmra.mxu0 %v1491
        %v1570 = vpop.f32.mrf.mxu0
        %v1571 = vadd.f32 0.0, %v1570
        %v1572 = vpop.f32.mrf.mxu0
        %v1573 = vadd.f32 0.0, %v1572
        %1574 = vmatmul.bf16.gmra.mxu0 %v1494
        %v1575 = vpop.f32.mrf.mxu0
        %v1576 = vadd.f32 0.0, %v1575
        %v1577 = vpop.f32.mrf.mxu0
        %v1578 = vadd.f32 0.0, %v1577
        %1579 = vmatmul.bf16.gmra.mxu0 %v1497
        %v1580 = vpop.f32.mrf.mxu0
        %v1581 = vadd.f32 0.0, %v1580
        %v1582 = vpop.f32.mrf.mxu0
        %v1583 = vadd.f32 0.0, %v1582
        %1584 = vmatmul.bf16.gmra.mxu0 %v1500
        %v1585 = vpop.f32.mrf.mxu0
        %v1586 = vadd.f32 0.0, %v1585
        %v1587 = vpop.f32.mrf.mxu0
        %v1588 = vadd.f32 0.0, %v1587
        %1589 = vmatmul.bf16.gmra.mxu0 %v1503
        %v1590 = vpop.f32.mrf.mxu0
        %v1591 = vadd.f32 0.0, %v1590
        %v1592 = vpop.f32.mrf.mxu0
        %v1593 = vadd.f32 0.0, %v1592
        %1594 = vmatmul.bf16.gmra.mxu0 %v1506
        %v1595 = vpop.f32.mrf.mxu0
        %v1596 = vadd.f32 0.0, %v1595
        %v1597 = vpop.f32.mrf.mxu0
        %v1598 = vadd.f32 0.0, %v1597
        %1599 = vdwg.mxu0
        %v1600 = vadd.f32 %v1378, %v1521
        %v1601 = vadd.f32 %v1379, %v1523
        %v1602 = vadd.f32 %v1380, %v1526
        %v1603 = vadd.f32 %v1381, %v1528
        %v1604 = vadd.f32 %v1382, %v1531
        %v1605 = vadd.f32 %v1383, %v1533
        %v1606 = vadd.f32 %v1384, %v1536
        %v1607 = vadd.f32 %v1385, %v1538
        %v1608 = vadd.f32 %v1386, %v1541
        %v1609 = vadd.f32 %v1387, %v1543
        %v1610 = vadd.f32 %v1388, %v1546
        %v1611 = vadd.f32 %v1389, %v1548
        %v1612 = vadd.f32 %v1390, %v1551
        %v1613 = vadd.f32 %v1391, %v1553
        %v1614 = vadd.f32 %v1392, %v1556
        %v1615 = vadd.f32 %v1393, %v1558
        %v1616 = vadd.f32 %v1394, %v1561
        %v1617 = vadd.f32 %v1395, %v1563
        %v1618 = vadd.f32 %v1396, %v1566
        %v1619 = vadd.f32 %v1397, %v1568
        %v1620 = vadd.f32 %v1398, %v1571
        %v1621 = vadd.f32 %v1399, %v1573
        %v1622 = vadd.f32 %v1400, %v1576
        %v1623 = vadd.f32 %v1401, %v1578
        %v1624 = vadd.f32 %v1402, %v1581
        %v1625 = vadd.f32 %v1403, %v1583
        %v1626 = vadd.f32 %v1404, %v1586
        %v1627 = vadd.f32 %v1405, %v1588
        %v1628 = vadd.f32 %v1406, %v1591
        %v1629 = vadd.f32 %v1407, %v1593
        %v1630 = vadd.f32 %v1408, %v1596
        %v1631 = vadd.f32 %v1409, %v1598
        %v1632 = vld [vmem:[%s520 + $0x2] sm:$0xff]
        %v1633 = vld [vmem:[%s520 + $0xa] sm:$0xff]
        %v1634 = vld [vmem:[%s520 + $0x1a] sm:$0xff]
        %v1635 = vld [vmem:[%s520 + $0x22] sm:$0xff]
        %v1636 = vld [vmem:[%s520 + $0x32] sm:$0xff]
        %v1637 = vld [vmem:[%s520 + $0x3a] sm:$0xff]
        %v1638 = vld [vmem:[%s520 + $0x4a] sm:$0xff]
        %v1639 = vld [vmem:[%s520 + $0x52] sm:$0xff]
        %v1640 = vld [vmem:[%s520 + $0x62] sm:$0xff]
        %v1641 = vld [vmem:[%s520 + $0x6a] sm:$0xff]
        %v1642 = vld [vmem:[%s520 + $0x7a] sm:$0xff]
        %v1643 = vld [vmem:[%s520 + $0x82] sm:$0xff]
        %v1644 = vld [vmem:[%s520 + $0x92] sm:$0xff]
        %v1645 = vld [vmem:[%s520 + $0x9a] sm:$0xff]
        %v1646 = vld [vmem:[%s520 + $0xaa] sm:$0xff]
        %v1647 = vld [vmem:[%s520 + $0xb2] sm:$0xff]
        %v1648 = vld [vmem:[%s520 + $0xc2] sm:$0xff]
        %v1649 = vld [vmem:[%s520 + $0xca] sm:$0xff]
        %v1650 = vld [vmem:[%s520 + $0xda] sm:$0xff]
        %v1651 = vld [vmem:[%s520 + $0xe2] sm:$0xff]
        %v1652 = vld [vmem:[%s520 + $0xf2] sm:$0xff]
        %v1653 = vld [vmem:[%s520 + $0xfa] sm:$0xff]
        %v1654 = vld [vmem:[%s520 + $0x10a] sm:$0xff]
        %v1655 = vld [vmem:[%s520 + $0x112] sm:$0xff]
        %v1656 = vld [vmem:[%s520 + $0x122] sm:$0xff]
        %v1657 = vld [vmem:[%s520 + $0x12a] sm:$0xff]
        %v1658 = vld [vmem:[%s520 + $0x13a] sm:$0xff]
        %v1659 = vld [vmem:[%s520 + $0x142] sm:$0xff]
        %v1660 = vld [vmem:[%s520 + $0x152] sm:$0xff]
        %v1661 = vld [vmem:[%s520 + $0x15a] sm:$0xff]
        %v1662 = vld [vmem:[%s520 + $0x16a] sm:$0xff]
        %v1663 = vld [vmem:[%s520 + $0x172] sm:$0xff]
        %v1664 = vpack.c.bf16 %v1633, %v1632
        %v1665 = vpack.c.bf16 %v1635, %v1634
        %v1666 = vpack.c.bf16 %v1637, %v1636
        %v1667 = vpack.c.bf16 %v1639, %v1638
        %v1668 = vpack.c.bf16 %v1641, %v1640
        %v1669 = vpack.c.bf16 %v1643, %v1642
        %v1670 = vpack.c.bf16 %v1645, %v1644
        %v1671 = vpack.c.bf16 %v1647, %v1646
        %v1672 = vpack.c.bf16 %v1649, %v1648
        %v1673 = vpack.c.bf16 %v1651, %v1650
        %v1674 = vpack.c.bf16 %v1653, %v1652
        %v1675 = vpack.c.bf16 %v1655, %v1654
        %v1676 = vpack.c.bf16 %v1657, %v1656
        %v1677 = vpack.c.bf16 %v1659, %v1658
        %v1678 = vpack.c.bf16 %v1661, %v1660
        %v1679 = vpack.c.bf16 %v1663, %v1662
        %s1680 = scalar_lea.vmem %s1, 10
        %v1681 = vld [vmem:[%s1680] sm:$0x3]
        %v1683 = vsel %vm511, %v1664, 0
        %v1686 = vsel %vm511, %v1665, 0
        %v1689 = vsel %vm511, %v1666, 0
        %v1692 = vsel %vm511, %v1667, 0
        %v1695 = vsel %vm511, %v1668, 0
        %v1698 = vsel %vm511, %v1669, 0
        %v1701 = vsel %vm511, %v1670, 0
        %v1704 = vsel %vm511, %v1671, 0
        %v1707 = vsel %vm511, %v1672, 0
        %v1710 = vsel %vm511, %v1673, 0
        %v1713 = vsel %vm511, %v1674, 0
        %v1716 = vsel %vm511, %v1675, 0
        %v1719 = vsel %vm511, %v1676, 0
        %v1722 = vsel %vm511, %v1677, 0
        %v1725 = vsel %vm511, %v1678, 0
        %v1728 = vsel %vm511, %v1679, 0
        %v1731 = vsel %vm733, %v1681, 0
        %1733 = vmatpush.bf16.msra.mxu0 0
        %1734 = vmatpush.bf16.msra.mxu0 0
        %1735 = vmatpush.bf16.msra.mxu0 0
        %1736 = vmatpush.bf16.msra.mxu0 0
        %1737 = vmatpush.bf16.msra.mxu0 0
        %1738 = vmatpush.bf16.msra.mxu0 0
        %1739 = vmatpush.bf16.msra.mxu0 0
        %1740 = vmatpush.bf16.msra.mxu0 %v1731
        %1741 = vmatmul.bf16.gmra.mxu0 %v1683
        %v1742 = vpop.f32.mrf.mxu0
        %v1743 = vadd.f32 0.0, %v1742
        %v1744 = vpop.f32.mrf.mxu0
        %v1745 = vadd.f32 0.0, %v1744
        %1746 = vmatmul.bf16.gmra.mxu0 %v1686
        %v1747 = vpop.f32.mrf.mxu0
        %v1748 = vadd.f32 0.0, %v1747
        %v1749 = vpop.f32.mrf.mxu0
        %v1750 = vadd.f32 0.0, %v1749
        %1751 = vmatmul.bf16.gmra.mxu0 %v1689
        %v1752 = vpop.f32.mrf.mxu0
        %v1753 = vadd.f32 0.0, %v1752
        %v1754 = vpop.f32.mrf.mxu0
        %v1755 = vadd.f32 0.0, %v1754
        %1756 = vmatmul.bf16.gmra.mxu0 %v1692
        %v1757 = vpop.f32.mrf.mxu0
        %v1758 = vadd.f32 0.0, %v1757
        %v1759 = vpop.f32.mrf.mxu0
        %v1760 = vadd.f32 0.0, %v1759
        %1761 = vmatmul.bf16.gmra.mxu0 %v1695
        %v1762 = vpop.f32.mrf.mxu0
        %v1763 = vadd.f32 0.0, %v1762
        %v1764 = vpop.f32.mrf.mxu0
        %v1765 = vadd.f32 0.0, %v1764
        %1766 = vmatmul.bf16.gmra.mxu0 %v1698
        %v1767 = vpop.f32.mrf.mxu0
        %v1768 = vadd.f32 0.0, %v1767
        %v1769 = vpop.f32.mrf.mxu0
        %v1770 = vadd.f32 0.0, %v1769
        %1771 = vmatmul.bf16.gmra.mxu0 %v1701
        %v1772 = vpop.f32.mrf.mxu0
        %v1773 = vadd.f32 0.0, %v1772
        %v1774 = vpop.f32.mrf.mxu0
        %v1775 = vadd.f32 0.0, %v1774
        %1776 = vmatmul.bf16.gmra.mxu0 %v1704
        %v1777 = vpop.f32.mrf.mxu0
        %v1778 = vadd.f32 0.0, %v1777
        %v1779 = vpop.f32.mrf.mxu0
        %v1780 = vadd.f32 0.0, %v1779
        %1781 = vmatmul.bf16.gmra.mxu0 %v1707
        %v1782 = vpop.f32.mrf.mxu0
        %v1783 = vadd.f32 0.0, %v1782
        %v1784 = vpop.f32.mrf.mxu0
        %v1785 = vadd.f32 0.0, %v1784
        %1786 = vmatmul.bf16.gmra.mxu0 %v1710
        %v1787 = vpop.f32.mrf.mxu0
        %v1788 = vadd.f32 0.0, %v1787
        %v1789 = vpop.f32.mrf.mxu0
        %v1790 = vadd.f32 0.0, %v1789
        %1791 = vmatmul.bf16.gmra.mxu0 %v1713
        %v1792 = vpop.f32.mrf.mxu0
        %v1793 = vadd.f32 0.0, %v1792
        %v1794 = vpop.f32.mrf.mxu0
        %v1795 = vadd.f32 0.0, %v1794
        %1796 = vmatmul.bf16.gmra.mxu0 %v1716
        %v1797 = vpop.f32.mrf.mxu0
        %v1798 = vadd.f32 0.0, %v1797
        %v1799 = vpop.f32.mrf.mxu0
        %v1800 = vadd.f32 0.0, %v1799
        %1801 = vmatmul.bf16.gmra.mxu0 %v1719
        %v1802 = vpop.f32.mrf.mxu0
        %v1803 = vadd.f32 0.0, %v1802
        %v1804 = vpop.f32.mrf.mxu0
        %v1805 = vadd.f32 0.0, %v1804
        %1806 = vmatmul.bf16.gmra.mxu0 %v1722
        %v1807 = vpop.f32.mrf.mxu0
        %v1808 = vadd.f32 0.0, %v1807
        %v1809 = vpop.f32.mrf.mxu0
        %v1810 = vadd.f32 0.0, %v1809
        %1811 = vmatmul.bf16.gmra.mxu0 %v1725
        %v1812 = vpop.f32.mrf.mxu0
        %v1813 = vadd.f32 0.0, %v1812
        %v1814 = vpop.f32.mrf.mxu0
        %v1815 = vadd.f32 0.0, %v1814
        %1816 = vmatmul.bf16.gmra.mxu0 %v1728
        %v1817 = vpop.f32.mrf.mxu0
        %v1818 = vadd.f32 0.0, %v1817
        %v1819 = vpop.f32.mrf.mxu0
        %v1820 = vadd.f32 0.0, %v1819
        %1821 = vdwg.mxu0
        %v1822 = vadd.f32 %v1600, %v1743
        %v1823 = vadd.f32 %v1601, %v1745
        %v1824 = vadd.f32 %v1602, %v1748
        %v1825 = vadd.f32 %v1603, %v1750
        %v1826 = vadd.f32 %v1604, %v1753
        %v1827 = vadd.f32 %v1605, %v1755
        %v1828 = vadd.f32 %v1606, %v1758
        %v1829 = vadd.f32 %v1607, %v1760
        %v1830 = vadd.f32 %v1608, %v1763
        %v1831 = vadd.f32 %v1609, %v1765
        %v1832 = vadd.f32 %v1610, %v1768
        %v1833 = vadd.f32 %v1611, %v1770
        %v1834 = vadd.f32 %v1612, %v1773
        %v1835 = vadd.f32 %v1613, %v1775
        %v1836 = vadd.f32 %v1614, %v1778
        %v1837 = vadd.f32 %v1615, %v1780
        %v1838 = vadd.f32 %v1616, %v1783
        %v1839 = vadd.f32 %v1617, %v1785
        %v1840 = vadd.f32 %v1618, %v1788
        %v1841 = vadd.f32 %v1619, %v1790
        %v1842 = vadd.f32 %v1620, %v1793
        %v1843 = vadd.f32 %v1621, %v1795
        %v1844 = vadd.f32 %v1622, %v1798
        %v1845 = vadd.f32 %v1623, %v1800
        %v1846 = vadd.f32 %v1624, %v1803
        %v1847 = vadd.f32 %v1625, %v1805
        %v1848 = vadd.f32 %v1626, %v1808
        %v1849 = vadd.f32 %v1627, %v1810
        %v1850 = vadd.f32 %v1628, %v1813
        %v1851 = vadd.f32 %v1629, %v1815
        %v1852 = vadd.f32 %v1630, %v1818
        %v1853 = vadd.f32 %v1631, %v1820
        %s1854 = scalar_lea.vmem [#allocation2], 48
        %v1855 = vld [vmem:[%s1854] sm:$0xff]
        %v1856 = vld [vmem:[%s1854 + $0x8] sm:$0xff]
        %v1857 = vld [vmem:[%s1854 + $0x18] sm:$0xff]
        %v1858 = vld [vmem:[%s1854 + $0x20] sm:$0xff]
        %v1859 = vld [vmem:[%s1854 + $0x30] sm:$0xff]
        %v1860 = vld [vmem:[%s1854 + $0x38] sm:$0xff]
        %v1861 = vld [vmem:[%s1854 + $0x48] sm:$0xff]
        %v1862 = vld [vmem:[%s1854 + $0x50] sm:$0xff]
        %v1863 = vld [vmem:[%s1854 + $0x60] sm:$0xff]
        %v1864 = vld [vmem:[%s1854 + $0x68] sm:$0xff]
        %v1865 = vld [vmem:[%s1854 + $0x78] sm:$0xff]
        %v1866 = vld [vmem:[%s1854 + $0x80] sm:$0xff]
        %v1867 = vld [vmem:[%s1854 + $0x90] sm:$0xff]
        %v1868 = vld [vmem:[%s1854 + $0x98] sm:$0xff]
        %v1869 = vld [vmem:[%s1854 + $0xa8] sm:$0xff]
        %v1870 = vld [vmem:[%s1854 + $0xb0] sm:$0xff]
        %v1871 = vld [vmem:[%s1854 + $0xc0] sm:$0xff]
        %v1872 = vld [vmem:[%s1854 + $0xc8] sm:$0xff]
        %v1873 = vld [vmem:[%s1854 + $0xd8] sm:$0xff]
        %v1874 = vld [vmem:[%s1854 + $0xe0] sm:$0xff]
        %v1875 = vld [vmem:[%s1854 + $0xf0] sm:$0xff]
        %v1876 = vld [vmem:[%s1854 + $0xf8] sm:$0xff]
        %v1877 = vld [vmem:[%s1854 + $0x108] sm:$0xff]
        %v1878 = vld [vmem:[%s1854 + $0x110] sm:$0xff]
        %v1879 = vld [vmem:[%s1854 + $0x120] sm:$0xff]
        %v1880 = vld [vmem:[%s1854 + $0x128] sm:$0xff]
        %v1881 = vld [vmem:[%s1854 + $0x138] sm:$0xff]
        %v1882 = vld [vmem:[%s1854 + $0x140] sm:$0xff]
        %v1883 = vld [vmem:[%s1854 + $0x150] sm:$0xff]
        %v1884 = vld [vmem:[%s1854 + $0x158] sm:$0xff]
        %v1885 = vld [vmem:[%s1854 + $0x168] sm:$0xff]
        %v1886 = vld [vmem:[%s1854 + $0x170] sm:$0xff]
        %v1887 = vpack.c.bf16 %v1856, %v1855
        %v1888 = vpack.c.bf16 %v1858, %v1857
        %v1889 = vpack.c.bf16 %v1860, %v1859
        %v1890 = vpack.c.bf16 %v1862, %v1861
        %v1891 = vpack.c.bf16 %v1864, %v1863
        %v1892 = vpack.c.bf16 %v1866, %v1865
        %v1893 = vpack.c.bf16 %v1868, %v1867
        %v1894 = vpack.c.bf16 %v1870, %v1869
        %v1895 = vpack.c.bf16 %v1872, %v1871
        %v1896 = vpack.c.bf16 %v1874, %v1873
        %v1897 = vpack.c.bf16 %v1876, %v1875
        %v1898 = vpack.c.bf16 %v1878, %v1877
        %v1899 = vpack.c.bf16 %v1880, %v1879
        %v1900 = vpack.c.bf16 %v1882, %v1881
        %v1901 = vpack.c.bf16 %v1884, %v1883
        %v1902 = vpack.c.bf16 %v1886, %v1885
        %s1903 = scalar_lea.vmem %s1, 12
        %v1904 = vld [vmem:[%s1903] sm:$0x3]
        %v1906 = vsel %vm511, %v1887, 0
        %v1909 = vsel %vm511, %v1888, 0
        %v1912 = vsel %vm511, %v1889, 0
        %v1915 = vsel %vm511, %v1890, 0
        %v1918 = vsel %vm511, %v1891, 0
        %v1921 = vsel %vm511, %v1892, 0
        %v1924 = vsel %vm511, %v1893, 0
        %v1927 = vsel %vm511, %v1894, 0
        %v1930 = vsel %vm511, %v1895, 0
        %v1933 = vsel %vm511, %v1896, 0
        %v1936 = vsel %vm511, %v1897, 0
        %v1939 = vsel %vm511, %v1898, 0
        %v1942 = vsel %vm511, %v1899, 0
        %v1945 = vsel %vm511, %v1900, 0
        %v1948 = vsel %vm511, %v1901, 0
        %v1951 = vsel %vm511, %v1902, 0
        %v1954 = vsel %vm733, %v1904, 0
        %1956 = vmatpush.bf16.msra.mxu0 0
        %1957 = vmatpush.bf16.msra.mxu0 0
        %1958 = vmatpush.bf16.msra.mxu0 0
        %1959 = vmatpush.bf16.msra.mxu0 0
        %1960 = vmatpush.bf16.msra.mxu0 0
        %1961 = vmatpush.bf16.msra.mxu0 0
        %1962 = vmatpush.bf16.msra.mxu0 0
        %1963 = vmatpush.bf16.msra.mxu0 %v1954
        %1964 = vmatmul.bf16.gmra.mxu0 %v1906
        %v1965 = vpop.f32.mrf.mxu0
        %v1966 = vadd.f32 0.0, %v1965
        %v1967 = vpop.f32.mrf.mxu0
        %v1968 = vadd.f32 0.0, %v1967
        %1969 = vmatmul.bf16.gmra.mxu0 %v1909
        %v1970 = vpop.f32.mrf.mxu0
        %v1971 = vadd.f32 0.0, %v1970
        %v1972 = vpop.f32.mrf.mxu0
        %v1973 = vadd.f32 0.0, %v1972
        %1974 = vmatmul.bf16.gmra.mxu0 %v1912
        %v1975 = vpop.f32.mrf.mxu0
        %v1976 = vadd.f32 0.0, %v1975
        %v1977 = vpop.f32.mrf.mxu0
        %v1978 = vadd.f32 0.0, %v1977
        %1979 = vmatmul.bf16.gmra.mxu0 %v1915
        %v1980 = vpop.f32.mrf.mxu0
        %v1981 = vadd.f32 0.0, %v1980
        %v1982 = vpop.f32.mrf.mxu0
        %v1983 = vadd.f32 0.0, %v1982
        %1984 = vmatmul.bf16.gmra.mxu0 %v1918
        %v1985 = vpop.f32.mrf.mxu0
        %v1986 = vadd.f32 0.0, %v1985
        %v1987 = vpop.f32.mrf.mxu0
        %v1988 = vadd.f32 0.0, %v1987
        %1989 = vmatmul.bf16.gmra.mxu0 %v1921
        %v1990 = vpop.f32.mrf.mxu0
        %v1991 = vadd.f32 0.0, %v1990
        %v1992 = vpop.f32.mrf.mxu0
        %v1993 = vadd.f32 0.0, %v1992
        %1994 = vmatmul.bf16.gmra.mxu0 %v1924
        %v1995 = vpop.f32.mrf.mxu0
        %v1996 = vadd.f32 0.0, %v1995
        %v1997 = vpop.f32.mrf.mxu0
        %v1998 = vadd.f32 0.0, %v1997
        %1999 = vmatmul.bf16.gmra.mxu0 %v1927
        %v2000 = vpop.f32.mrf.mxu0
        %v2001 = vadd.f32 0.0, %v2000
        %v2002 = vpop.f32.mrf.mxu0
        %v2003 = vadd.f32 0.0, %v2002
        %2004 = vmatmul.bf16.gmra.mxu0 %v1930
        %v2005 = vpop.f32.mrf.mxu0
        %v2006 = vadd.f32 0.0, %v2005
        %v2007 = vpop.f32.mrf.mxu0
        %v2008 = vadd.f32 0.0, %v2007
        %2009 = vmatmul.bf16.gmra.mxu0 %v1933
        %v2010 = vpop.f32.mrf.mxu0
        %v2011 = vadd.f32 0.0, %v2010
        %v2012 = vpop.f32.mrf.mxu0
        %v2013 = vadd.f32 0.0, %v2012
        %2014 = vmatmul.bf16.gmra.mxu0 %v1936
        %v2015 = vpop.f32.mrf.mxu0
        %v2016 = vadd.f32 0.0, %v2015
        %v2017 = vpop.f32.mrf.mxu0
        %v2018 = vadd.f32 0.0, %v2017
        %2019 = vmatmul.bf16.gmra.mxu0 %v1939
        %v2020 = vpop.f32.mrf.mxu0
        %v2021 = vadd.f32 0.0, %v2020
        %v2022 = vpop.f32.mrf.mxu0
        %v2023 = vadd.f32 0.0, %v2022
        %2024 = vmatmul.bf16.gmra.mxu0 %v1942
        %v2025 = vpop.f32.mrf.mxu0
        %v2026 = vadd.f32 0.0, %v2025
        %v2027 = vpop.f32.mrf.mxu0
        %v2028 = vadd.f32 0.0, %v2027
        %2029 = vmatmul.bf16.gmra.mxu0 %v1945
        %v2030 = vpop.f32.mrf.mxu0
        %v2031 = vadd.f32 0.0, %v2030
        %v2032 = vpop.f32.mrf.mxu0
        %v2033 = vadd.f32 0.0, %v2032
        %2034 = vmatmul.bf16.gmra.mxu0 %v1948
        %v2035 = vpop.f32.mrf.mxu0
        %v2036 = vadd.f32 0.0, %v2035
        %v2037 = vpop.f32.mrf.mxu0
        %v2038 = vadd.f32 0.0, %v2037
        %2039 = vmatmul.bf16.gmra.mxu0 %v1951
        %v2040 = vpop.f32.mrf.mxu0
        %v2041 = vadd.f32 0.0, %v2040
        %v2042 = vpop.f32.mrf.mxu0
        %v2043 = vadd.f32 0.0, %v2042
        %2044 = vdwg.mxu0
        %v2045 = vadd.f32 %v1822, %v1966
        %v2046 = vadd.f32 %v1823, %v1968
        %v2047 = vadd.f32 %v1824, %v1971
        %v2048 = vadd.f32 %v1825, %v1973
        %v2049 = vadd.f32 %v1826, %v1976
        %v2050 = vadd.f32 %v1827, %v1978
        %v2051 = vadd.f32 %v1828, %v1981
        %v2052 = vadd.f32 %v1829, %v1983
        %v2053 = vadd.f32 %v1830, %v1986
        %v2054 = vadd.f32 %v1831, %v1988
        %v2055 = vadd.f32 %v1832, %v1991
        %v2056 = vadd.f32 %v1833, %v1993
        %v2057 = vadd.f32 %v1834, %v1996
        %v2058 = vadd.f32 %v1835, %v1998
        %v2059 = vadd.f32 %v1836, %v2001
        %v2060 = vadd.f32 %v1837, %v2003
        %v2061 = vadd.f32 %v1838, %v2006
        %v2062 = vadd.f32 %v1839, %v2008
        %v2063 = vadd.f32 %v1840, %v2011
        %v2064 = vadd.f32 %v1841, %v2013
        %v2065 = vadd.f32 %v1842, %v2016
        %v2066 = vadd.f32 %v1843, %v2018
        %v2067 = vadd.f32 %v1844, %v2021
        %v2068 = vadd.f32 %v1845, %v2023
        %v2069 = vadd.f32 %v1846, %v2026
        %v2070 = vadd.f32 %v1847, %v2028
        %v2071 = vadd.f32 %v1848, %v2031
        %v2072 = vadd.f32 %v1849, %v2033
        %v2073 = vadd.f32 %v1850, %v2036
        %v2074 = vadd.f32 %v1851, %v2038
        %v2075 = vadd.f32 %v1852, %v2041
        %v2076 = vadd.f32 %v1853, %v2043
        %v2077 = vld [vmem:[%s1854 + $0x1] sm:$0xff]
        %v2078 = vld [vmem:[%s1854 + $0x9] sm:$0xff]
        %v2079 = vld [vmem:[%s1854 + $0x19] sm:$0xff]
        %v2080 = vld [vmem:[%s1854 + $0x21] sm:$0xff]
        %v2081 = vld [vmem:[%s1854 + $0x31] sm:$0xff]
        %v2082 = vld [vmem:[%s1854 + $0x39] sm:$0xff]
        %v2083 = vld [vmem:[%s1854 + $0x49] sm:$0xff]
        %v2084 = vld [vmem:[%s1854 + $0x51] sm:$0xff]
        %v2085 = vld [vmem:[%s1854 + $0x61] sm:$0xff]
        %v2086 = vld [vmem:[%s1854 + $0x69] sm:$0xff]
        %v2087 = vld [vmem:[%s1854 + $0x79] sm:$0xff]
        %v2088 = vld [vmem:[%s1854 + $0x81] sm:$0xff]
        %v2089 = vld [vmem:[%s1854 + $0x91] sm:$0xff]
        %v2090 = vld [vmem:[%s1854 + $0x99] sm:$0xff]
        %v2091 = vld [vmem:[%s1854 + $0xa9] sm:$0xff]
        %v2092 = vld [vmem:[%s1854 + $0xb1] sm:$0xff]
        %v2093 = vld [vmem:[%s1854 + $0xc1] sm:$0xff]
        %v2094 = vld [vmem:[%s1854 + $0xc9] sm:$0xff]
        %v2095 = vld [vmem:[%s1854 + $0xd9] sm:$0xff]
        %v2096 = vld [vmem:[%s1854 + $0xe1] sm:$0xff]
        %v2097 = vld [vmem:[%s1854 + $0xf1] sm:$0xff]
        %v2098 = vld [vmem:[%s1854 + $0xf9] sm:$0xff]
        %v2099 = vld [vmem:[%s1854 + $0x109] sm:$0xff]
        %v2100 = vld [vmem:[%s1854 + $0x111] sm:$0xff]
        %v2101 = vld [vmem:[%s1854 + $0x121] sm:$0xff]
        %v2102 = vld [vmem:[%s1854 + $0x129] sm:$0xff]
        %v2103 = vld [vmem:[%s1854 + $0x139] sm:$0xff]
        %v2104 = vld [vmem:[%s1854 + $0x141] sm:$0xff]
        %v2105 = vld [vmem:[%s1854 + $0x151] sm:$0xff]
        %v2106 = vld [vmem:[%s1854 + $0x159] sm:$0xff]
        %v2107 = vld [vmem:[%s1854 + $0x169] sm:$0xff]
        %v2108 = vld [vmem:[%s1854 + $0x171] sm:$0xff]
        %v2109 = vpack.c.bf16 %v2078, %v2077
        %v2110 = vpack.c.bf16 %v2080, %v2079
        %v2111 = vpack.c.bf16 %v2082, %v2081
        %v2112 = vpack.c.bf16 %v2084, %v2083
        %v2113 = vpack.c.bf16 %v2086, %v2085
        %v2114 = vpack.c.bf16 %v2088, %v2087
        %v2115 = vpack.c.bf16 %v2090, %v2089
        %v2116 = vpack.c.bf16 %v2092, %v2091
        %v2117 = vpack.c.bf16 %v2094, %v2093
        %v2118 = vpack.c.bf16 %v2096, %v2095
        %v2119 = vpack.c.bf16 %v2098, %v2097
        %v2120 = vpack.c.bf16 %v2100, %v2099
        %v2121 = vpack.c.bf16 %v2102, %v2101
        %v2122 = vpack.c.bf16 %v2104, %v2103
        %v2123 = vpack.c.bf16 %v2106, %v2105
        %v2124 = vpack.c.bf16 %v2108, %v2107
        %s2125 = scalar_lea.vmem %s1, 14
        %v2126 = vld [vmem:[%s2125] sm:$0x3]
        %v2128 = vsel %vm511, %v2109, 0
        %v2131 = vsel %vm511, %v2110, 0
        %v2134 = vsel %vm511, %v2111, 0
        %v2137 = vsel %vm511, %v2112, 0
        %v2140 = vsel %vm511, %v2113, 0
        %v2143 = vsel %vm511, %v2114, 0
        %v2146 = vsel %vm511, %v2115, 0
        %v2149 = vsel %vm511, %v2116, 0
        %v2152 = vsel %vm511, %v2117, 0
        %v2155 = vsel %vm511, %v2118, 0
        %v2158 = vsel %vm511, %v2119, 0
        %v2161 = vsel %vm511, %v2120, 0
        %v2164 = vsel %vm511, %v2121, 0
        %v2167 = vsel %vm511, %v2122, 0
        %v2170 = vsel %vm511, %v2123, 0
        %v2173 = vsel %vm511, %v2124, 0
        %v2176 = vsel %vm733, %v2126, 0
        %2178 = vmatpush.bf16.msra.mxu0 0
        %2179 = vmatpush.bf16.msra.mxu0 0
        %2180 = vmatpush.bf16.msra.mxu0 0
        %2181 = vmatpush.bf16.msra.mxu0 0
        %2182 = vmatpush.bf16.msra.mxu0 0
        %2183 = vmatpush.bf16.msra.mxu0 0
        %2184 = vmatpush.bf16.msra.mxu0 0
        %2185 = vmatpush.bf16.msra.mxu0 %v2176
        %2186 = vmatmul.bf16.gmra.mxu0 %v2128
        %v2187 = vpop.f32.mrf.mxu0
        %v2188 = vadd.f32 0.0, %v2187
        %v2189 = vpop.f32.mrf.mxu0
        %v2190 = vadd.f32 0.0, %v2189
        %2191 = vmatmul.bf16.gmra.mxu0 %v2131
        %v2192 = vpop.f32.mrf.mxu0
        %v2193 = vadd.f32 0.0, %v2192
        %v2194 = vpop.f32.mrf.mxu0
        %v2195 = vadd.f32 0.0, %v2194
        %2196 = vmatmul.bf16.gmra.mxu0 %v2134
        %v2197 = vpop.f32.mrf.mxu0
        %v2198 = vadd.f32 0.0, %v2197
        %v2199 = vpop.f32.mrf.mxu0
        %v2200 = vadd.f32 0.0, %v2199
        %2201 = vmatmul.bf16.gmra.mxu0 %v2137
        %v2202 = vpop.f32.mrf.mxu0
        %v2203 = vadd.f32 0.0, %v2202
        %v2204 = vpop.f32.mrf.mxu0
        %v2205 = vadd.f32 0.0, %v2204
        %2206 = vmatmul.bf16.gmra.mxu0 %v2140
        %v2207 = vpop.f32.mrf.mxu0
        %v2208 = vadd.f32 0.0, %v2207
        %v2209 = vpop.f32.mrf.mxu0
        %v2210 = vadd.f32 0.0, %v2209
        %2211 = vmatmul.bf16.gmra.mxu0 %v2143
        %v2212 = vpop.f32.mrf.mxu0
        %v2213 = vadd.f32 0.0, %v2212
        %v2214 = vpop.f32.mrf.mxu0
        %v2215 = vadd.f32 0.0, %v2214
        %2216 = vmatmul.bf16.gmra.mxu0 %v2146
        %v2217 = vpop.f32.mrf.mxu0
        %v2218 = vadd.f32 0.0, %v2217
        %v2219 = vpop.f32.mrf.mxu0
        %v2220 = vadd.f32 0.0, %v2219
        %2221 = vmatmul.bf16.gmra.mxu0 %v2149
        %v2222 = vpop.f32.mrf.mxu0
        %v2223 = vadd.f32 0.0, %v2222
        %v2224 = vpop.f32.mrf.mxu0
        %v2225 = vadd.f32 0.0, %v2224
        %2226 = vmatmul.bf16.gmra.mxu0 %v2152
        %v2227 = vpop.f32.mrf.mxu0
        %v2228 = vadd.f32 0.0, %v2227
        %v2229 = vpop.f32.mrf.mxu0
        %v2230 = vadd.f32 0.0, %v2229
        %2231 = vmatmul.bf16.gmra.mxu0 %v2155
        %v2232 = vpop.f32.mrf.mxu0
        %v2233 = vadd.f32 0.0, %v2232
        %v2234 = vpop.f32.mrf.mxu0
        %v2235 = vadd.f32 0.0, %v2234
        %2236 = vmatmul.bf16.gmra.mxu0 %v2158
        %v2237 = vpop.f32.mrf.mxu0
        %v2238 = vadd.f32 0.0, %v2237
        %v2239 = vpop.f32.mrf.mxu0
        %v2240 = vadd.f32 0.0, %v2239
        %2241 = vmatmul.bf16.gmra.mxu0 %v2161
        %v2242 = vpop.f32.mrf.mxu0
        %v2243 = vadd.f32 0.0, %v2242
        %v2244 = vpop.f32.mrf.mxu0
        %v2245 = vadd.f32 0.0, %v2244
        %2246 = vmatmul.bf16.gmra.mxu0 %v2164
        %v2247 = vpop.f32.mrf.mxu0
        %v2248 = vadd.f32 0.0, %v2247
        %v2249 = vpop.f32.mrf.mxu0
        %v2250 = vadd.f32 0.0, %v2249
        %2251 = vmatmul.bf16.gmra.mxu0 %v2167
        %v2252 = vpop.f32.mrf.mxu0
        %v2253 = vadd.f32 0.0, %v2252
        %v2254 = vpop.f32.mrf.mxu0
        %v2255 = vadd.f32 0.0, %v2254
        %2256 = vmatmul.bf16.gmra.mxu0 %v2170
        %v2257 = vpop.f32.mrf.mxu0
        %v2258 = vadd.f32 0.0, %v2257
        %v2259 = vpop.f32.mrf.mxu0
        %v2260 = vadd.f32 0.0, %v2259
        %2261 = vmatmul.bf16.gmra.mxu0 %v2173
        %v2262 = vpop.f32.mrf.mxu0
        %v2263 = vadd.f32 0.0, %v2262
        %v2264 = vpop.f32.mrf.mxu0
        %v2265 = vadd.f32 0.0, %v2264
        %2266 = vdwg.mxu0
        %v2267 = vadd.f32 %v2045, %v2188
        %v2268 = vadd.f32 %v2046, %v2190
        %v2269 = vadd.f32 %v2047, %v2193
        %v2270 = vadd.f32 %v2048, %v2195
        %v2271 = vadd.f32 %v2049, %v2198
        %v2272 = vadd.f32 %v2050, %v2200
        %v2273 = vadd.f32 %v2051, %v2203
        %v2274 = vadd.f32 %v2052, %v2205
        %v2275 = vadd.f32 %v2053, %v2208
        %v2276 = vadd.f32 %v2054, %v2210
        %v2277 = vadd.f32 %v2055, %v2213
        %v2278 = vadd.f32 %v2056, %v2215
        %v2279 = vadd.f32 %v2057, %v2218
        %v2280 = vadd.f32 %v2058, %v2220
        %v2281 = vadd.f32 %v2059, %v2223
        %v2282 = vadd.f32 %v2060, %v2225
        %v2283 = vadd.f32 %v2061, %v2228
        %v2284 = vadd.f32 %v2062, %v2230
        %v2285 = vadd.f32 %v2063, %v2233
        %v2286 = vadd.f32 %v2064, %v2235
        %v2287 = vadd.f32 %v2065, %v2238
        %v2288 = vadd.f32 %v2066, %v2240
        %v2289 = vadd.f32 %v2067, %v2243
        %v2290 = vadd.f32 %v2068, %v2245
        %v2291 = vadd.f32 %v2069, %v2248
        %v2292 = vadd.f32 %v2070, %v2250
        %v2293 = vadd.f32 %v2071, %v2253
        %v2294 = vadd.f32 %v2072, %v2255
        %v2295 = vadd.f32 %v2073, %v2258
        %v2296 = vadd.f32 %v2074, %v2260
        %v2297 = vadd.f32 %v2075, %v2263
        %v2298 = vadd.f32 %v2076, %v2265
        %v2299 = vld [vmem:[%s1854 + $0x2] sm:$0xff]
        %v2300 = vld [vmem:[%s1854 + $0xa] sm:$0xff]
        %v2301 = vld [vmem:[%s1854 + $0x1a] sm:$0xff]
        %v2302 = vld [vmem:[%s1854 + $0x22] sm:$0xff]
        %v2303 = vld [vmem:[%s1854 + $0x32] sm:$0xff]
        %v2304 = vld [vmem:[%s1854 + $0x3a] sm:$0xff]
        %v2305 = vld [vmem:[%s1854 + $0x4a] sm:$0xff]
        %v2306 = vld [vmem:[%s1854 + $0x52] sm:$0xff]
        %v2307 = vld [vmem:[%s1854 + $0x62] sm:$0xff]
        %v2308 = vld [vmem:[%s1854 + $0x6a] sm:$0xff]
        %v2309 = vld [vmem:[%s1854 + $0x7a] sm:$0xff]
        %v2310 = vld [vmem:[%s1854 + $0x82] sm:$0xff]
        %v2311 = vld [vmem:[%s1854 + $0x92] sm:$0xff]
        %v2312 = vld [vmem:[%s1854 + $0x9a] sm:$0xff]
        %v2313 = vld [vmem:[%s1854 + $0xaa] sm:$0xff]
        %v2314 = vld [vmem:[%s1854 + $0xb2] sm:$0xff]
        %v2315 = vld [vmem:[%s1854 + $0xc2] sm:$0xff]
        %v2316 = vld [vmem:[%s1854 + $0xca] sm:$0xff]
        %v2317 = vld [vmem:[%s1854 + $0xda] sm:$0xff]
        %v2318 = vld [vmem:[%s1854 + $0xe2] sm:$0xff]
        %v2319 = vld [vmem:[%s1854 + $0xf2] sm:$0xff]
        %v2320 = vld [vmem:[%s1854 + $0xfa] sm:$0xff]
        %v2321 = vld [vmem:[%s1854 + $0x10a] sm:$0xff]
        %v2322 = vld [vmem:[%s1854 + $0x112] sm:$0xff]
        %v2323 = vld [vmem:[%s1854 + $0x122] sm:$0xff]
        %v2324 = vld [vmem:[%s1854 + $0x12a] sm:$0xff]
        %v2325 = vld [vmem:[%s1854 + $0x13a] sm:$0xff]
        %v2326 = vld [vmem:[%s1854 + $0x142] sm:$0xff]
        %v2327 = vld [vmem:[%s1854 + $0x152] sm:$0xff]
        %v2328 = vld [vmem:[%s1854 + $0x15a] sm:$0xff]
        %v2329 = vld [vmem:[%s1854 + $0x16a] sm:$0xff]
        %v2330 = vld [vmem:[%s1854 + $0x172] sm:$0xff]
        %v2331 = vpack.c.bf16 %v2300, %v2299
        %v2332 = vpack.c.bf16 %v2302, %v2301
        %v2333 = vpack.c.bf16 %v2304, %v2303
        %v2334 = vpack.c.bf16 %v2306, %v2305
        %v2335 = vpack.c.bf16 %v2308, %v2307
        %v2336 = vpack.c.bf16 %v2310, %v2309
        %v2337 = vpack.c.bf16 %v2312, %v2311
        %v2338 = vpack.c.bf16 %v2314, %v2313
        %v2339 = vpack.c.bf16 %v2316, %v2315
        %v2340 = vpack.c.bf16 %v2318, %v2317
        %v2341 = vpack.c.bf16 %v2320, %v2319
        %v2342 = vpack.c.bf16 %v2322, %v2321
        %v2343 = vpack.c.bf16 %v2324, %v2323
        %v2344 = vpack.c.bf16 %v2326, %v2325
        %v2345 = vpack.c.bf16 %v2328, %v2327
        %v2346 = vpack.c.bf16 %v2330, %v2329
        %s2347 = scalar_lea.vmem %s1, 16
        %v2348 = vld [vmem:[%s2347] sm:$0x3]
        %v2350 = vsel %vm511, %v2331, 0
        %v2353 = vsel %vm511, %v2332, 0
        %v2356 = vsel %vm511, %v2333, 0
        %v2359 = vsel %vm511, %v2334, 0
        %v2362 = vsel %vm511, %v2335, 0
        %v2365 = vsel %vm511, %v2336, 0
        %v2368 = vsel %vm511, %v2337, 0
        %v2371 = vsel %vm511, %v2338, 0
        %v2374 = vsel %vm511, %v2339, 0
        %v2377 = vsel %vm511, %v2340, 0
        %v2380 = vsel %vm511, %v2341, 0
        %v2383 = vsel %vm511, %v2342, 0
        %v2386 = vsel %vm511, %v2343, 0
        %v2389 = vsel %vm511, %v2344, 0
        %v2392 = vsel %vm511, %v2345, 0
        %v2395 = vsel %vm511, %v2346, 0
        %v2398 = vsel %vm733, %v2348, 0
        %2400 = vmatpush.bf16.msra.mxu0 0
        %2401 = vmatpush.bf16.msra.mxu0 0
        %2402 = vmatpush.bf16.msra.mxu0 0
        %2403 = vmatpush.bf16.msra.mxu0 0
        %2404 = vmatpush.bf16.msra.mxu0 0
        %2405 = vmatpush.bf16.msra.mxu0 0
        %2406 = vmatpush.bf16.msra.mxu0 0
        %2407 = vmatpush.bf16.msra.mxu0 %v2398
        %2408 = vmatmul.bf16.gmra.mxu0 %v2350
        %v2409 = vpop.f32.mrf.mxu0
        %v2410 = vadd.f32 0.0, %v2409
        %v2411 = vpop.f32.mrf.mxu0
        %v2412 = vadd.f32 0.0, %v2411
        %2413 = vmatmul.bf16.gmra.mxu0 %v2353
        %v2414 = vpop.f32.mrf.mxu0
        %v2415 = vadd.f32 0.0, %v2414
        %v2416 = vpop.f32.mrf.mxu0
        %v2417 = vadd.f32 0.0, %v2416
        %2418 = vmatmul.bf16.gmra.mxu0 %v2356
        %v2419 = vpop.f32.mrf.mxu0
        %v2420 = vadd.f32 0.0, %v2419
        %v2421 = vpop.f32.mrf.mxu0
        %v2422 = vadd.f32 0.0, %v2421
        %2423 = vmatmul.bf16.gmra.mxu0 %v2359
        %v2424 = vpop.f32.mrf.mxu0
        %v2425 = vadd.f32 0.0, %v2424
        %v2426 = vpop.f32.mrf.mxu0
        %v2427 = vadd.f32 0.0, %v2426
        %2428 = vmatmul.bf16.gmra.mxu0 %v2362
        %v2429 = vpop.f32.mrf.mxu0
        %v2430 = vadd.f32 0.0, %v2429
        %v2431 = vpop.f32.mrf.mxu0
        %v2432 = vadd.f32 0.0, %v2431
        %2433 = vmatmul.bf16.gmra.mxu0 %v2365
        %v2434 = vpop.f32.mrf.mxu0
        %v2435 = vadd.f32 0.0, %v2434
        %v2436 = vpop.f32.mrf.mxu0
        %v2437 = vadd.f32 0.0, %v2436
        %2438 = vmatmul.bf16.gmra.mxu0 %v2368
        %v2439 = vpop.f32.mrf.mxu0
        %v2440 = vadd.f32 0.0, %v2439
        %v2441 = vpop.f32.mrf.mxu0
        %v2442 = vadd.f32 0.0, %v2441
        %2443 = vmatmul.bf16.gmra.mxu0 %v2371
        %v2444 = vpop.f32.mrf.mxu0
        %v2445 = vadd.f32 0.0, %v2444
        %v2446 = vpop.f32.mrf.mxu0
        %v2447 = vadd.f32 0.0, %v2446
        %2448 = vmatmul.bf16.gmra.mxu0 %v2374
        %v2449 = vpop.f32.mrf.mxu0
        %v2450 = vadd.f32 0.0, %v2449
        %v2451 = vpop.f32.mrf.mxu0
        %v2452 = vadd.f32 0.0, %v2451
        %2453 = vmatmul.bf16.gmra.mxu0 %v2377
        %v2454 = vpop.f32.mrf.mxu0
        %v2455 = vadd.f32 0.0, %v2454
        %v2456 = vpop.f32.mrf.mxu0
        %v2457 = vadd.f32 0.0, %v2456
        %2458 = vmatmul.bf16.gmra.mxu0 %v2380
        %v2459 = vpop.f32.mrf.mxu0
        %v2460 = vadd.f32 0.0, %v2459
        %v2461 = vpop.f32.mrf.mxu0
        %v2462 = vadd.f32 0.0, %v2461
        %2463 = vmatmul.bf16.gmra.mxu0 %v2383
        %v2464 = vpop.f32.mrf.mxu0
        %v2465 = vadd.f32 0.0, %v2464
        %v2466 = vpop.f32.mrf.mxu0
        %v2467 = vadd.f32 0.0, %v2466
        %2468 = vmatmul.bf16.gmra.mxu0 %v2386
        %v2469 = vpop.f32.mrf.mxu0
        %v2470 = vadd.f32 0.0, %v2469
        %v2471 = vpop.f32.mrf.mxu0
        %v2472 = vadd.f32 0.0, %v2471
        %2473 = vmatmul.bf16.gmra.mxu0 %v2389
        %v2474 = vpop.f32.mrf.mxu0
        %v2475 = vadd.f32 0.0, %v2474
        %v2476 = vpop.f32.mrf.mxu0
        %v2477 = vadd.f32 0.0, %v2476
        %2478 = vmatmul.bf16.gmra.mxu0 %v2392
        %v2479 = vpop.f32.mrf.mxu0
        %v2480 = vadd.f32 0.0, %v2479
        %v2481 = vpop.f32.mrf.mxu0
        %v2482 = vadd.f32 0.0, %v2481
        %2483 = vmatmul.bf16.gmra.mxu0 %v2395
        %v2484 = vpop.f32.mrf.mxu0
        %v2485 = vadd.f32 0.0, %v2484
        %v2486 = vpop.f32.mrf.mxu0
        %v2487 = vadd.f32 0.0, %v2486
        %2488 = vdwg.mxu0
        %v2489 = vadd.f32 %v2267, %v2410
        %v2490 = vadd.f32 %v2268, %v2412
        %v2491 = vadd.f32 %v2269, %v2415
        %v2492 = vadd.f32 %v2270, %v2417
        %v2493 = vadd.f32 %v2271, %v2420
        %v2494 = vadd.f32 %v2272, %v2422
        %v2495 = vadd.f32 %v2273, %v2425
        %v2496 = vadd.f32 %v2274, %v2427
        %v2497 = vadd.f32 %v2275, %v2430
        %v2498 = vadd.f32 %v2276, %v2432
        %v2499 = vadd.f32 %v2277, %v2435
        %v2500 = vadd.f32 %v2278, %v2437
        %v2501 = vadd.f32 %v2279, %v2440
        %v2502 = vadd.f32 %v2280, %v2442
        %v2503 = vadd.f32 %v2281, %v2445
        %v2504 = vadd.f32 %v2282, %v2447
        %v2505 = vadd.f32 %v2283, %v2450
        %v2506 = vadd.f32 %v2284, %v2452
        %v2507 = vadd.f32 %v2285, %v2455
        %v2508 = vadd.f32 %v2286, %v2457
        %v2509 = vadd.f32 %v2287, %v2460
        %v2510 = vadd.f32 %v2288, %v2462
        %v2511 = vadd.f32 %v2289, %v2465
        %v2512 = vadd.f32 %v2290, %v2467
        %v2513 = vadd.f32 %v2291, %v2470
        %v2514 = vadd.f32 %v2292, %v2472
        %v2515 = vadd.f32 %v2293, %v2475
        %v2516 = vadd.f32 %v2294, %v2477
        %v2517 = vadd.f32 %v2295, %v2480
        %v2518 = vadd.f32 %v2296, %v2482
        %v2519 = vadd.f32 %v2297, %v2485
        %v2520 = vadd.f32 %v2298, %v2487
        %v2521 = vld [vmem:[%s2] sm:$0x1]
        %v2522 = vld [vmem:[%s3] sm:$0x1]
        %v2523 = vadd.f32 %v2489, %v2490
        %v2524 = vadd.f32 %v2523, %v2491
        %v2525 = vadd.f32 %v2524, %v2492
        %v2526 = vadd.f32 %v2525, %v2493
        %v2527 = vadd.f32 %v2526, %v2494
        %v2528 = vadd.f32 %v2527, %v2495
        %v2529 = vadd.f32 %v2528, %v2496
        %v2530 = vadd.f32 %v2529, %v2497
        %v2531 = vadd.f32 %v2530, %v2498
        %v2532 = vadd.f32 %v2531, %v2499
        %v2533 = vadd.f32 %v2532, %v2500
        %v2534 = vadd.f32 %v2533, %v2501
        %v2535 = vadd.f32 %v2534, %v2502
        %v2536 = vadd.f32 %v2535, %v2503
        %v2537 = vadd.f32 %v2536, %v2504
        %v2538 = vadd.f32 %v2537, %v2505
        %v2539 = vadd.f32 %v2538, %v2506
        %v2540 = vadd.f32 %v2539, %v2507
        %v2541 = vadd.f32 %v2540, %v2508
        %v2542 = vadd.f32 %v2541, %v2509
        %v2543 = vadd.f32 %v2542, %v2510
        %v2544 = vadd.f32 %v2543, %v2511
        %v2545 = vadd.f32 %v2544, %v2512
        %v2546 = vadd.f32 %v2545, %v2513
        %v2547 = vadd.f32 %v2546, %v2514
        %v2548 = vadd.f32 %v2547, %v2515
        %v2549 = vadd.f32 %v2548, %v2516
        %v2550 = vadd.f32 %v2549, %v2517
        %v2551 = vadd.f32 %v2550, %v2518
        %v2552 = vadd.f32 %v2551, %v2519
        %v2553 = vadd.f32 %v2552, %v2520
        %v2554 = vrot.slane %v2553, 4
        %v2555 = vadd.f32 %v2553, %v2554
        %v2556 = vrot.slane %v2555, 2
        %v2557 = vadd.f32 %v2555, %v2556
        %v2558 = vrot.slane %v2557, 1
        %v2559 = vadd.f32 %v2557, %v2558
        %v2560 = vmul.f32 %v2489, %v2489
        %v2561 = vmul.f32 %v2490, %v2490
        %v2562 = vmul.f32 %v2491, %v2491
        %v2563 = vmul.f32 %v2492, %v2492
        %v2564 = vmul.f32 %v2493, %v2493
        %v2565 = vmul.f32 %v2494, %v2494
        %v2566 = vmul.f32 %v2495, %v2495
        %v2567 = vmul.f32 %v2496, %v2496
        %v2568 = vmul.f32 %v2497, %v2497
        %v2569 = vmul.f32 %v2498, %v2498
        %v2570 = vmul.f32 %v2499, %v2499
        %v2571 = vmul.f32 %v2500, %v2500
        %v2572 = vmul.f32 %v2501, %v2501
        %v2573 = vmul.f32 %v2502, %v2502
        %v2574 = vmul.f32 %v2503, %v2503
        %v2575 = vmul.f32 %v2504, %v2504
        %v2576 = vmul.f32 %v2505, %v2505
        %v2577 = vmul.f32 %v2506, %v2506
        %v2578 = vmul.f32 %v2507, %v2507
        %v2579 = vmul.f32 %v2508, %v2508
        %v2580 = vmul.f32 %v2509, %v2509
        %v2581 = vmul.f32 %v2510, %v2510
        %v2582 = vmul.f32 %v2511, %v2511
        %v2583 = vmul.f32 %v2512, %v2512
        %v2584 = vmul.f32 %v2513, %v2513
        %v2585 = vmul.f32 %v2514, %v2514
        %v2586 = vmul.f32 %v2515, %v2515
        %v2587 = vmul.f32 %v2516, %v2516
        %v2588 = vmul.f32 %v2517, %v2517
        %v2589 = vmul.f32 %v2518, %v2518
        %v2590 = vmul.f32 %v2519, %v2519
        %v2591 = vmul.f32 %v2520, %v2520
        %v2592 = vadd.f32 %v2560, %v2561
        %v2593 = vadd.f32 %v2592, %v2562
        %v2594 = vadd.f32 %v2593, %v2563
        %v2595 = vadd.f32 %v2594, %v2564
        %v2596 = vadd.f32 %v2595, %v2565
        %v2597 = vadd.f32 %v2596, %v2566
        %v2598 = vadd.f32 %v2597, %v2567
        %v2599 = vadd.f32 %v2598, %v2568
        %v2600 = vadd.f32 %v2599, %v2569
        %v2601 = vadd.f32 %v2600, %v2570
        %v2602 = vadd.f32 %v2601, %v2571
        %v2603 = vadd.f32 %v2602, %v2572
        %v2604 = vadd.f32 %v2603, %v2573
        %v2605 = vadd.f32 %v2604, %v2574
        %v2606 = vadd.f32 %v2605, %v2575
        %v2607 = vadd.f32 %v2606, %v2576
        %v2608 = vadd.f32 %v2607, %v2577
        %v2609 = vadd.f32 %v2608, %v2578
        %v2610 = vadd.f32 %v2609, %v2579
        %v2611 = vadd.f32 %v2610, %v2580
        %v2612 = vadd.f32 %v2611, %v2581
        %v2613 = vadd.f32 %v2612, %v2582
        %v2614 = vadd.f32 %v2613, %v2583
        %v2615 = vadd.f32 %v2614, %v2584
        %v2616 = vadd.f32 %v2615, %v2585
        %v2617 = vadd.f32 %v2616, %v2586
        %v2618 = vadd.f32 %v2617, %v2587
        %v2619 = vadd.f32 %v2618, %v2588
        %v2620 = vadd.f32 %v2619, %v2589
        %v2621 = vadd.f32 %v2620, %v2590
        %v2622 = vadd.f32 %v2621, %v2591
        %v2623 = vrot.slane %v2622, 4
        %v2624 = vadd.f32 %v2622, %v2623
        %v2625 = vrot.slane %v2624, 2
        %v2626 = vadd.f32 %v2624, %v2625
        %v2627 = vrot.slane %v2626, 1
        %v2628 = vadd.f32 %v2626, %v2627
        %vm2629 = vcmask 1040384
        %v2630 = vsel %vm2629, %v2559, %v2628
        %2631 = vmatpush.msra.mxu0 %v462
        %2632 = vmatpush.msra.mxu0 %v461
        %2633 = vmatpush.msra.mxu0 %v460
        %2634 = vmatpush.msra.mxu0 %v459
        %2635 = vmatpush.msra.mxu0 %v458
        %2636 = vmatpush.msra.mxu0 %v457
        %2637 = vmatpush.msra.mxu0 %v456
        %2638 = vmatpush.msra.mxu0 %v455
        %2639 = vmatpush.msra.mxu0 %v454
        %2640 = vmatpush.msra.mxu0 %v453
        %2641 = vmatpush.msra.mxu0 %v452
        %2642 = vmatpush.msra.mxu0 %v451
        %2643 = vmatpush.msra.mxu0 %v450
        %2644 = vmatpush.msra.mxu0 %v449
        %2645 = vmatpush.msra.mxu0 %v448
        %2646 = vmatpush.msra.mxu0 %v447
        %2647 = vmatmul.f32.gmra.mxu0 %v2630
        %v2648 = vpop.f32.mrf.mxu0
        %v2649 = vadd.f32 0.0, %v2648
        %2650 = vdwg.mxu0
        %v2651 = vmul.f32 %v2649, 0.0009765625
        %v2652 = vmul.f32 %v2651, %v2651
        %v2654 = vrot.slane %v2652, 7
        %v2656 = vsub.f32 %v2651, %v2654
        %v2657 = vmax.f32 %v2656, 0.0
        %v2658 = vadd.f32 %v2657, 1e-05
        %v2659 = vrsqrt.pop %v2658
        %v2660 = vmul.f32 %v2659, %v2658
        %v2661 = vmul.f32 %v2660, %v2659
        %v2662 = vmul.f32 0.5, %v2661
        %v2663 = vsub.f32 1.5, %v2662
        %v2664 = vmul.f32 %v2659, %v2663
        %vm2665 = vweird.f32 %v2658
        %vm2666 = vweird.f32 %v2659
        %vm2667 = vmor %vm2665, %vm2666
        %v2668 = vsel %vm2667, %v2659, %v2664
        %v2669 = vsel %vm2629, %v2651, %v2668
        %2670 = vmatpush.msra.mxu0 %v478
        %2671 = vmatpush.msra.mxu0 %v477
        %2672 = vmatpush.msra.mxu0 %v476
        %2673 = vmatpush.msra.mxu0 %v475
        %2674 = vmatpush.msra.mxu0 %v474
        %2675 = vmatpush.msra.mxu0 %v473
        %2676 = vmatpush.msra.mxu0 %v472
        %2677 = vmatpush.msra.mxu0 %v471
        %2678 = vmatpush.msra.mxu0 %v470
        %2679 = vmatpush.msra.mxu0 %v469
        %2680 = vmatpush.msra.mxu0 %v468
        %2681 = vmatpush.msra.mxu0 %v467
        %2682 = vmatpush.msra.mxu0 %v466
        %2683 = vmatpush.msra.mxu0 %v465
        %2684 = vmatpush.msra.mxu0 %v464
        %2685 = vmatpush.msra.mxu0 %v463
        %2686 = vmatmul.f32.gmra.mxu0 %v2669
        %v2687 = vpop.f32.mrf.mxu0
        %v2688 = vadd.f32 0.0, %v2687
        %2689 = vdwg.mxu0
        %2691 = vst [vmem:[#allocation1] sm:$0xff] %v2688
        %s2692 = scalar_lea.vmem [#allocation1], 1
        %v2693 = vld [vmem:[%s2692] ss:$9 sm:$0xff]
        %v2695 = vmul.f32 %v2521, %v2693
        %v2696 = vmul.f32 %v2688, %v2695
        %v2697 = vsub.f32 %v2522, %v2696
        %v2699 = vperm.slane %v2695, 0
        %v2701 = vmul.f32 %v2489, %v2699
        %v2702 = vmul.f32 %v2490, %v2699
        %v2703 = vmul.f32 %v2491, %v2699
        %v2704 = vmul.f32 %v2492, %v2699
        %v2705 = vmul.f32 %v2493, %v2699
        %v2706 = vmul.f32 %v2494, %v2699
        %v2707 = vmul.f32 %v2495, %v2699
        %v2708 = vmul.f32 %v2496, %v2699
        %v2709 = vmul.f32 %v2497, %v2699
        %v2710 = vmul.f32 %v2498, %v2699
        %v2711 = vmul.f32 %v2499, %v2699
        %v2712 = vmul.f32 %v2500, %v2699
        %v2713 = vmul.f32 %v2501, %v2699
        %v2714 = vmul.f32 %v2502, %v2699
        %v2715 = vmul.f32 %v2503, %v2699
        %v2716 = vmul.f32 %v2504, %v2699
        %v2717 = vmul.f32 %v2505, %v2699
        %v2718 = vmul.f32 %v2506, %v2699
        %v2719 = vmul.f32 %v2507, %v2699
        %v2720 = vmul.f32 %v2508, %v2699
        %v2721 = vmul.f32 %v2509, %v2699
        %v2722 = vmul.f32 %v2510, %v2699
        %v2723 = vmul.f32 %v2511, %v2699
        %v2724 = vmul.f32 %v2512, %v2699
        %v2725 = vmul.f32 %v2513, %v2699
        %v2726 = vmul.f32 %v2514, %v2699
        %v2727 = vmul.f32 %v2515, %v2699
        %v2728 = vmul.f32 %v2516, %v2699
        %v2729 = vmul.f32 %v2517, %v2699
        %v2730 = vmul.f32 %v2518, %v2699
        %v2731 = vmul.f32 %v2519, %v2699
        %v2732 = vmul.f32 %v2520, %v2699
        %v2734 = vperm.slane %v2697, 0
        %v2736 = vadd.f32 %v2701, %v2734
        %v2737 = vadd.f32 %v2702, %v2734
        %v2738 = vadd.f32 %v2703, %v2734
        %v2739 = vadd.f32 %v2704, %v2734
        %v2740 = vadd.f32 %v2705, %v2734
        %v2741 = vadd.f32 %v2706, %v2734
        %v2742 = vadd.f32 %v2707, %v2734
        %v2743 = vadd.f32 %v2708, %v2734
        %v2744 = vadd.f32 %v2709, %v2734
        %v2745 = vadd.f32 %v2710, %v2734
        %v2746 = vadd.f32 %v2711, %v2734
        %v2747 = vadd.f32 %v2712, %v2734
        %v2748 = vadd.f32 %v2713, %v2734
        %v2749 = vadd.f32 %v2714, %v2734
        %v2750 = vadd.f32 %v2715, %v2734
        %v2751 = vadd.f32 %v2716, %v2734
        %v2752 = vadd.f32 %v2717, %v2734
        %v2753 = vadd.f32 %v2718, %v2734
        %v2754 = vadd.f32 %v2719, %v2734
        %v2755 = vadd.f32 %v2720, %v2734
        %v2756 = vadd.f32 %v2721, %v2734
        %v2757 = vadd.f32 %v2722, %v2734
        %v2758 = vadd.f32 %v2723, %v2734
        %v2759 = vadd.f32 %v2724, %v2734
        %v2760 = vadd.f32 %v2725, %v2734
        %v2761 = vadd.f32 %v2726, %v2734
        %v2762 = vadd.f32 %v2727, %v2734
        %v2763 = vadd.f32 %v2728, %v2734
        %v2764 = vadd.f32 %v2729, %v2734
        %v2765 = vadd.f32 %v2730, %v2734
        %v2766 = vadd.f32 %v2731, %v2734
        %v2767 = vadd.f32 %v2732, %v2734
        %v2768 = vmax.f32 %v2736, 0.0
        %v2769 = vmax.f32 %v2737, 0.0
        %v2770 = vmax.f32 %v2738, 0.0
        %v2771 = vmax.f32 %v2739, 0.0
        %v2772 = vmax.f32 %v2740, 0.0
        %v2773 = vmax.f32 %v2741, 0.0
        %v2774 = vmax.f32 %v2742, 0.0
        %v2775 = vmax.f32 %v2743, 0.0
        %v2776 = vmax.f32 %v2744, 0.0
        %v2777 = vmax.f32 %v2745, 0.0
        %v2778 = vmax.f32 %v2746, 0.0
        %v2779 = vmax.f32 %v2747, 0.0
        %v2780 = vmax.f32 %v2748, 0.0
        %v2781 = vmax.f32 %v2749, 0.0
        %v2782 = vmax.f32 %v2750, 0.0
        %v2783 = vmax.f32 %v2751, 0.0
        %v2784 = vmax.f32 %v2752, 0.0
        %v2785 = vmax.f32 %v2753, 0.0
        %v2786 = vmax.f32 %v2754, 0.0
        %v2787 = vmax.f32 %v2755, 0.0
        %v2788 = vmax.f32 %v2756, 0.0
        %v2789 = vmax.f32 %v2757, 0.0
        %v2790 = vmax.f32 %v2758, 0.0
        %v2791 = vmax.f32 %v2759, 0.0
        %v2792 = vmax.f32 %v2760, 0.0
        %v2793 = vmax.f32 %v2761, 0.0
        %v2794 = vmax.f32 %v2762, 0.0
        %v2795 = vmax.f32 %v2763, 0.0
        %v2796 = vmax.f32 %v2764, 0.0
        %v2797 = vmax.f32 %v2765, 0.0
        %v2798 = vmax.f32 %v2766, 0.0
        %v2799 = vmax.f32 %v2767, 0.0
        %2800 = vst [vmem:[#allocation3] sm:$0xff] 0.0
        %2801 = vst [vmem:[#allocation3 + $0x8] sm:$0xff] 0.0
        %2802 = vst [vmem:[#allocation3 + $0x10] sm:$0x3] 0.0
        %s2803 = scalar_lea.vmem [#allocation3], 408
        %2804 = vst [vmem:[%s2803] sm:$0xff] 0.0
        %2805 = vst [vmem:[%s2803 + $0x8] sm:$0xff] 0.0
        %2806 = vst [vmem:[%s2803 + $0x10] sm:$0x3] 0.0
        %s2807 = scalar_lea.vmem [#allocation3], 24
        %2808 = vst [vmem:[%s2807] sm:$0x1] 0.0
        %2809 = vst [vmem:[%s2807 + $0x18] sm:$0x1] 0.0
        %2810 = vst [vmem:[%s2807 + $0x30] sm:$0x1] 0.0
        %2811 = vst [vmem:[%s2807 + $0x48] sm:$0x1] 0.0
        %2812 = vst [vmem:[%s2807 + $0x60] sm:$0x1] 0.0
        %2813 = vst [vmem:[%s2807 + $0x78] sm:$0x1] 0.0
        %2814 = vst [vmem:[%s2807 + $0x90] sm:$0x1] 0.0
        %2815 = vst [vmem:[%s2807 + $0xa8] sm:$0x1] 0.0
        %2816 = vst [vmem:[%s2807 + $0xc0] sm:$0x1] 0.0
        %2817 = vst [vmem:[%s2807 + $0xd8] sm:$0x1] 0.0
        %2818 = vst [vmem:[%s2807 + $0xf0] sm:$0x1] 0.0
        %2819 = vst [vmem:[%s2807 + $0x108] sm:$0x1] 0.0
        %2820 = vst [vmem:[%s2807 + $0x120] sm:$0x1] 0.0
        %2821 = vst [vmem:[%s2807 + $0x138] sm:$0x1] 0.0
        %2822 = vst [vmem:[%s2807 + $0x150] sm:$0x1] 0.0
        %2823 = vst [vmem:[%s2807 + $0x168] sm:$0x1] 0.0
        %2824 = vst [vmem:[%s2807 + $0x11] sm:$0x1] 0.0
        %2825 = vst [vmem:[%s2807 + $0x29] sm:$0x1] 0.0
        %2826 = vst [vmem:[%s2807 + $0x41] sm:$0x1] 0.0
        %2827 = vst [vmem:[%s2807 + $0x59] sm:$0x1] 0.0
        %2828 = vst [vmem:[%s2807 + $0x71] sm:$0x1] 0.0
        %2829 = vst [vmem:[%s2807 + $0x89] sm:$0x1] 0.0
        %2830 = vst [vmem:[%s2807 + $0xa1] sm:$0x1] 0.0
        %2831 = vst [vmem:[%s2807 + $0xb9] sm:$0x1] 0.0
        %2832 = vst [vmem:[%s2807 + $0xd1] sm:$0x1] 0.0
        %2833 = vst [vmem:[%s2807 + $0xe9] sm:$0x1] 0.0
        %2834 = vst [vmem:[%s2807 + $0x101] sm:$0x1] 0.0
        %2835 = vst [vmem:[%s2807 + $0x119] sm:$0x1] 0.0
        %2836 = vst [vmem:[%s2807 + $0x131] sm:$0x1] 0.0
        %2837 = vst [vmem:[%s2807 + $0x149] sm:$0x1] 0.0
        %2838 = vst [vmem:[%s2807 + $0x161] sm:$0x1] 0.0
        %2839 = vst [vmem:[%s2807 + $0x179] sm:$0x1] 0.0
        %2840 = vst [vmem:[%s2807 + $0x1] sm:$0xff] %v2768
        %2841 = vst [vmem:[%s2807 + $0x9] sm:$0xff] %v2769
        %2842 = vst [vmem:[%s2807 + $0x19] sm:$0xff] %v2770
        %2843 = vst [vmem:[%s2807 + $0x21] sm:$0xff] %v2771
        %2844 = vst [vmem:[%s2807 + $0x31] sm:$0xff] %v2772
        %2845 = vst [vmem:[%s2807 + $0x39] sm:$0xff] %v2773
        %2846 = vst [vmem:[%s2807 + $0x49] sm:$0xff] %v2774
        %2847 = vst [vmem:[%s2807 + $0x51] sm:$0xff] %v2775
        %2848 = vst [vmem:[%s2807 + $0x61] sm:$0xff] %v2776
        %2849 = vst [vmem:[%s2807 + $0x69] sm:$0xff] %v2777
        %2850 = vst [vmem:[%s2807 + $0x79] sm:$0xff] %v2778
        %2851 = vst [vmem:[%s2807 + $0x81] sm:$0xff] %v2779
        %2852 = vst [vmem:[%s2807 + $0x91] sm:$0xff] %v2780
        %2853 = vst [vmem:[%s2807 + $0x99] sm:$0xff] %v2781
        %2854 = vst [vmem:[%s2807 + $0xa9] sm:$0xff] %v2782
        %2855 = vst [vmem:[%s2807 + $0xb1] sm:$0xff] %v2783
        %2856 = vst [vmem:[%s2807 + $0xc1] sm:$0xff] %v2784
        %2857 = vst [vmem:[%s2807 + $0xc9] sm:$0xff] %v2785
        %2858 = vst [vmem:[%s2807 + $0xd9] sm:$0xff] %v2786
        %2859 = vst [vmem:[%s2807 + $0xe1] sm:$0xff] %v2787
        %2860 = vst [vmem:[%s2807 + $0xf1] sm:$0xff] %v2788
        %2861 = vst [vmem:[%s2807 + $0xf9] sm:$0xff] %v2789
        %2862 = vst [vmem:[%s2807 + $0x109] sm:$0xff] %v2790
        %2863 = vst [vmem:[%s2807 + $0x111] sm:$0xff] %v2791
        %2864 = vst [vmem:[%s2807 + $0x121] sm:$0xff] %v2792
        %2865 = vst [vmem:[%s2807 + $0x129] sm:$0xff] %v2793
        %2866 = vst [vmem:[%s2807 + $0x139] sm:$0xff] %v2794
        %2867 = vst [vmem:[%s2807 + $0x141] sm:$0xff] %v2795
        %2868 = vst [vmem:[%s2807 + $0x151] sm:$0xff] %v2796
        %2869 = vst [vmem:[%s2807 + $0x159] sm:$0xff] %v2797
        %2870 = vst [vmem:[%s2807 + $0x169] sm:$0xff] %v2798
        %2871 = vst [vmem:[%s2807 + $0x171] sm:$0xff] %v2799
        %v2872 = vld [vmem:[#allocation3] sm:$0xff]
        %v2873 = vld [vmem:[#allocation3 + $0x8] sm:$0xff]
        %v2874 = vld [vmem:[#allocation3 + $0x18] sm:$0xff]
        %v2875 = vld [vmem:[#allocation3 + $0x20] sm:$0xff]
        %v2876 = vld [vmem:[#allocation3 + $0x30] sm:$0xff]
        %v2877 = vld [vmem:[#allocation3 + $0x38] sm:$0xff]
        %v2878 = vld [vmem:[#allocation3 + $0x48] sm:$0xff]
        %v2879 = vld [vmem:[#allocation3 + $0x50] sm:$0xff]
        %v2880 = vld [vmem:[#allocation3 + $0x60] sm:$0xff]
        %v2881 = vld [vmem:[#allocation3 + $0x68] sm:$0xff]
        %v2882 = vld [vmem:[#allocation3 + $0x78] sm:$0xff]
        %v2883 = vld [vmem:[#allocation3 + $0x80] sm:$0xff]
        %v2884 = vld [vmem:[#allocation3 + $0x90] sm:$0xff]
        %v2885 = vld [vmem:[#allocation3 + $0x98] sm:$0xff]
        %v2886 = vld [vmem:[#allocation3 + $0xa8] sm:$0xff]
        %v2887 = vld [vmem:[#allocation3 + $0xb0] sm:$0xff]
        %v2888 = vld [vmem:[#allocation3 + $0xc0] sm:$0xff]
        %v2889 = vld [vmem:[#allocation3 + $0xc8] sm:$0xff]
        %v2890 = vld [vmem:[#allocation3 + $0xd8] sm:$0xff]
        %v2891 = vld [vmem:[#allocation3 + $0xe0] sm:$0xff]
        %v2892 = vld [vmem:[#allocation3 + $0xf0] sm:$0xff]
        %v2893 = vld [vmem:[#allocation3 + $0xf8] sm:$0xff]
        %v2894 = vld [vmem:[#allocation3 + $0x108] sm:$0xff]
        %v2895 = vld [vmem:[#allocation3 + $0x110] sm:$0xff]
        %v2896 = vld [vmem:[#allocation3 + $0x120] sm:$0xff]
        %v2897 = vld [vmem:[#allocation3 + $0x128] sm:$0xff]
        %v2898 = vld [vmem:[#allocation3 + $0x138] sm:$0xff]
        %v2899 = vld [vmem:[#allocation3 + $0x140] sm:$0xff]
        %v2900 = vld [vmem:[#allocation3 + $0x150] sm:$0xff]
        %v2901 = vld [vmem:[#allocation3 + $0x158] sm:$0xff]
        %v2902 = vld [vmem:[#allocation3 + $0x168] sm:$0xff]
        %v2903 = vld [vmem:[#allocation3 + $0x170] sm:$0xff]
        %v2904 = vpack.c.bf16 %v2873, %v2872
        %v2905 = vpack.c.bf16 %v2875, %v2874
        %v2906 = vpack.c.bf16 %v2877, %v2876
        %v2907 = vpack.c.bf16 %v2879, %v2878
        %v2908 = vpack.c.bf16 %v2881, %v2880
        %v2909 = vpack.c.bf16 %v2883, %v2882
        %v2910 = vpack.c.bf16 %v2885, %v2884
        %v2911 = vpack.c.bf16 %v2887, %v2886
        %v2912 = vpack.c.bf16 %v2889, %v2888
        %v2913 = vpack.c.bf16 %v2891, %v2890
        %v2914 = vpack.c.bf16 %v2893, %v2892
        %v2915 = vpack.c.bf16 %v2895, %v2894
        %v2916 = vpack.c.bf16 %v2897, %v2896
        %v2917 = vpack.c.bf16 %v2899, %v2898
        %v2918 = vpack.c.bf16 %v2901, %v2900
        %v2919 = vpack.c.bf16 %v2903, %v2902
        %v2920 = vld [vmem:[%s4] sm:$0xf]
        %v2921 = vld [vmem:[%s4 + $0x4] sm:$0xf]
        %v2922 = vld [vmem:[%s4 + $0x8] sm:$0xf]
        %v2923 = vld [vmem:[%s4 + $0xc] sm:$0xf]
        %v2924 = vld [vmem:[%s4 + $0x10] sm:$0xf]
        %v2925 = vld [vmem:[%s4 + $0x14] sm:$0xf]
        %v2926 = vld [vmem:[%s4 + $0x18] sm:$0xf]
        %v2927 = vld [vmem:[%s4 + $0x1c] sm:$0xf]
        %v2928 = vld [vmem:[%s4 + $0x20] sm:$0xf]
        %v2929 = vld [vmem:[%s4 + $0x24] sm:$0xf]
        %v2930 = vld [vmem:[%s4 + $0x28] sm:$0xf]
        %v2931 = vld [vmem:[%s4 + $0x2c] sm:$0xf]
        %v2932 = vld [vmem:[%s4 + $0x30] sm:$0xf]
        %v2933 = vld [vmem:[%s4 + $0x34] sm:$0xf]
        %v2934 = vld [vmem:[%s4 + $0x38] sm:$0xf]
        %v2935 = vld [vmem:[%s4 + $0x3c] sm:$0xf]
        %v2936 = vld [vmem:[#allocation3 + $0x1] sm:$0xff]
        %v2937 = vld [vmem:[#allocation3 + $0x9] sm:$0xff]
        %v2938 = vld [vmem:[#allocation3 + $0x19] sm:$0xff]
        %v2939 = vld [vmem:[#allocation3 + $0x21] sm:$0xff]
        %v2940 = vld [vmem:[#allocation3 + $0x31] sm:$0xff]
        %v2941 = vld [vmem:[#allocation3 + $0x39] sm:$0xff]
        %v2942 = vld [vmem:[#allocation3 + $0x49] sm:$0xff]
        %v2943 = vld [vmem:[#allocation3 + $0x51] sm:$0xff]
        %v2944 = vld [vmem:[#allocation3 + $0x61] sm:$0xff]
        %v2945 = vld [vmem:[#allocation3 + $0x69] sm:$0xff]
        %v2946 = vld [vmem:[#allocation3 + $0x79] sm:$0xff]
        %v2947 = vld [vmem:[#allocation3 + $0x81] sm:$0xff]
        %v2948 = vld [vmem:[#allocation3 + $0x91] sm:$0xff]
        %v2949 = vld [vmem:[#allocation3 + $0x99] sm:$0xff]
        %v2950 = vld [vmem:[#allocation3 + $0xa9] sm:$0xff]
        %v2951 = vld [vmem:[#allocation3 + $0xb1] sm:$0xff]
        %v2952 = vld [vmem:[#allocation3 + $0xc1] sm:$0xff]
        %v2953 = vld [vmem:[#allocation3 + $0xc9] sm:$0xff]
        %v2954 = vld [vmem:[#allocation3 + $0xd9] sm:$0xff]
        %v2955 = vld [vmem:[#allocation3 + $0xe1] sm:$0xff]
        %v2956 = vld [vmem:[#allocation3 + $0xf1] sm:$0xff]
        %v2957 = vld [vmem:[#allocation3 + $0xf9] sm:$0xff]
        %v2958 = vld [vmem:[#allocation3 + $0x109] sm:$0xff]
        %v2959 = vld [vmem:[#allocation3 + $0x111] sm:$0xff]
        %v2960 = vld [vmem:[#allocation3 + $0x121] sm:$0xff]
        %v2961 = vld [vmem:[#allocation3 + $0x129] sm:$0xff]
        %v2962 = vld [vmem:[#allocation3 + $0x139] sm:$0xff]
        %v2963 = vld [vmem:[#allocation3 + $0x141] sm:$0xff]
        %v2964 = vld [vmem:[#allocation3 + $0x151] sm:$0xff]
        %v2965 = vld [vmem:[#allocation3 + $0x159] sm:$0xff]
        %v2966 = vld [vmem:[#allocation3 + $0x169] sm:$0xff]
        %v2967 = vld [vmem:[#allocation3 + $0x171] sm:$0xff]
        %v2968 = vpack.c.bf16 %v2937, %v2936
        %v2969 = vpack.c.bf16 %v2939, %v2938
        %v2970 = vpack.c.bf16 %v2941, %v2940
        %v2971 = vpack.c.bf16 %v2943, %v2942
        %v2972 = vpack.c.bf16 %v2945, %v2944
        %v2973 = vpack.c.bf16 %v2947, %v2946
        %v2974 = vpack.c.bf16 %v2949, %v2948
        %v2975 = vpack.c.bf16 %v2951, %v2950
        %v2976 = vpack.c.bf16 %v2953, %v2952
        %v2977 = vpack.c.bf16 %v2955, %v2954
        %v2978 = vpack.c.bf16 %v2957, %v2956
        %v2979 = vpack.c.bf16 %v2959, %v2958
        %v2980 = vpack.c.bf16 %v2961, %v2960
        %v2981 = vpack.c.bf16 %v2963, %v2962
        %v2982 = vpack.c.bf16 %v2965, %v2964
        %v2983 = vpack.c.bf16 %v2967, %v2966
        %s2984 = scalar_lea.vmem %s4, 64
        %v2985 = vld [vmem:[%s2984] sm:$0xf]
        %v2986 = vld [vmem:[%s2984 + $0x4] sm:$0xf]
        %v2987 = vld [vmem:[%s2984 + $0x8] sm:$0xf]
        %v2988 = vld [vmem:[%s2984 + $0xc] sm:$0xf]
        %v2989 = vld [vmem:[%s2984 + $0x10] sm:$0xf]
        %v2990 = vld [vmem:[%s2984 + $0x14] sm:$0xf]
        %v2991 = vld [vmem:[%s2984 + $0x18] sm:$0xf]
        %v2992 = vld [vmem:[%s2984 + $0x1c] sm:$0xf]
        %v2993 = vld [vmem:[%s2984 + $0x20] sm:$0xf]
        %v2994 = vld [vmem:[%s2984 + $0x24] sm:$0xf]
        %v2995 = vld [vmem:[%s2984 + $0x28] sm:$0xf]
        %v2996 = vld [vmem:[%s2984 + $0x2c] sm:$0xf]
        %v2997 = vld [vmem:[%s2984 + $0x30] sm:$0xf]
        %v2998 = vld [vmem:[%s2984 + $0x34] sm:$0xf]
        %v2999 = vld [vmem:[%s2984 + $0x38] sm:$0xf]
        %v3000 = vld [vmem:[%s2984 + $0x3c] sm:$0xf]
        %v3017 = vunpack.c.l.b16 %v2985
        %v3018 = vunpack.c.l.b16 %v2986
        %v3019 = vunpack.c.l.b16 %v2987
        %v3020 = vunpack.c.l.b16 %v2988
        %v3021 = vunpack.c.l.b16 %v2989
        %v3022 = vunpack.c.l.b16 %v2990
        %v3023 = vunpack.c.l.b16 %v2991
        %v3024 = vunpack.c.l.b16 %v2992
        %v3025 = vunpack.c.l.b16 %v2993
        %v3026 = vunpack.c.l.b16 %v2994
        %v3027 = vunpack.c.l.b16 %v2995
        %v3028 = vunpack.c.l.b16 %v2996
        %v3029 = vunpack.c.l.b16 %v2997
        %v3030 = vunpack.c.l.b16 %v2998
        %v3031 = vunpack.c.l.b16 %v2999
        %v3032 = vunpack.c.l.b16 %v3000
        %v3033 = vpack.c.b16 %v3018, %v3017
        %v3034 = vpack.c.b16 %v3020, %v3019
        %v3035 = vpack.c.b16 %v3022, %v3021
        %v3036 = vpack.c.b16 %v3024, %v3023
        %v3037 = vpack.c.b16 %v3026, %v3025
        %v3038 = vpack.c.b16 %v3028, %v3027
        %v3039 = vpack.c.b16 %v3030, %v3029
        %v3040 = vpack.c.b16 %v3032, %v3031
        %3049 = vmatpush.bf16.msra.mxu0 %v3040
        %3050 = vmatpush.bf16.msra.mxu0 %v3039
        %3051 = vmatpush.bf16.msra.mxu0 %v3038
        %3052 = vmatpush.bf16.msra.mxu0 %v3037
        %3053 = vmatpush.bf16.msra.mxu0 %v3036
        %3054 = vmatpush.bf16.msra.mxu0 %v3035
        %3055 = vmatpush.bf16.msra.mxu0 %v3034
        %3056 = vmatpush.bf16.msra.mxu0 %v3033
        %3057 = vmatmul.bf16.gmra.mxu0 %v2968
        %v3058 = vpop.f32.mrf.mxu0
        %v3059 = vadd.f32 0.0, %v3058
        %v3060 = vpop.f32.mrf.mxu0
        %v3061 = vadd.f32 0.0, %v3060
        %3062 = vmatmul.bf16.gmra.mxu0 %v2969
        %v3063 = vpop.f32.mrf.mxu0
        %v3064 = vadd.f32 0.0, %v3063
        %v3065 = vpop.f32.mrf.mxu0
        %v3066 = vadd.f32 0.0, %v3065
        %3067 = vmatmul.bf16.gmra.mxu0 %v2970
        %v3068 = vpop.f32.mrf.mxu0
        %v3069 = vadd.f32 0.0, %v3068
        %v3070 = vpop.f32.mrf.mxu0
        %v3071 = vadd.f32 0.0, %v3070
        %3072 = vmatmul.bf16.gmra.mxu0 %v2971
        %v3073 = vpop.f32.mrf.mxu0
        %v3074 = vadd.f32 0.0, %v3073
        %v3075 = vpop.f32.mrf.mxu0
        %v3076 = vadd.f32 0.0, %v3075
        %3077 = vmatmul.bf16.gmra.mxu0 %v2972
        %v3078 = vpop.f32.mrf.mxu0
        %v3079 = vadd.f32 0.0, %v3078
        %v3080 = vpop.f32.mrf.mxu0
        %v3081 = vadd.f32 0.0, %v3080
        %3082 = vmatmul.bf16.gmra.mxu0 %v2973
        %v3083 = vpop.f32.mrf.mxu0
        %v3084 = vadd.f32 0.0, %v3083
        %v3085 = vpop.f32.mrf.mxu0
        %v3086 = vadd.f32 0.0, %v3085
        %3087 = vmatmul.bf16.gmra.mxu0 %v2974
        %v3088 = vpop.f32.mrf.mxu0
        %v3089 = vadd.f32 0.0, %v3088
        %v3090 = vpop.f32.mrf.mxu0
        %v3091 = vadd.f32 0.0, %v3090
        %3092 = vmatmul.bf16.gmra.mxu0 %v2975
        %v3093 = vpop.f32.mrf.mxu0
        %v3094 = vadd.f32 0.0, %v3093
        %v3095 = vpop.f32.mrf.mxu0
        %v3096 = vadd.f32 0.0, %v3095
        %3097 = vmatmul.bf16.gmra.mxu0 %v2976
        %v3098 = vpop.f32.mrf.mxu0
        %v3099 = vadd.f32 0.0, %v3098
        %v3100 = vpop.f32.mrf.mxu0
        %v3101 = vadd.f32 0.0, %v3100
        %3102 = vmatmul.bf16.gmra.mxu0 %v2977
        %v3103 = vpop.f32.mrf.mxu0
        %v3104 = vadd.f32 0.0, %v3103
        %v3105 = vpop.f32.mrf.mxu0
        %v3106 = vadd.f32 0.0, %v3105
        %3107 = vmatmul.bf16.gmra.mxu0 %v2978
        %v3108 = vpop.f32.mrf.mxu0
        %v3109 = vadd.f32 0.0, %v3108
        %v3110 = vpop.f32.mrf.mxu0
        %v3111 = vadd.f32 0.0, %v3110
        %3112 = vmatmul.bf16.gmra.mxu0 %v2979
        %v3113 = vpop.f32.mrf.mxu0
        %v3114 = vadd.f32 0.0, %v3113
        %v3115 = vpop.f32.mrf.mxu0
        %v3116 = vadd.f32 0.0, %v3115
        %3117 = vmatmul.bf16.gmra.mxu0 %v2980
        %v3118 = vpop.f32.mrf.mxu0
        %v3119 = vadd.f32 0.0, %v3118
        %v3120 = vpop.f32.mrf.mxu0
        %v3121 = vadd.f32 0.0, %v3120
        %3122 = vmatmul.bf16.gmra.mxu0 %v2981
        %v3123 = vpop.f32.mrf.mxu0
        %v3124 = vadd.f32 0.0, %v3123
        %v3125 = vpop.f32.mrf.mxu0
        %v3126 = vadd.f32 0.0, %v3125
        %3127 = vmatmul.bf16.gmra.mxu0 %v2982
        %v3128 = vpop.f32.mrf.mxu0
        %v3129 = vadd.f32 0.0, %v3128
        %v3130 = vpop.f32.mrf.mxu0
        %v3131 = vadd.f32 0.0, %v3130
        %3132 = vmatmul.bf16.gmra.mxu0 %v2983
        %v3133 = vpop.f32.mrf.mxu0
        %v3134 = vadd.f32 0.0, %v3133
        %v3135 = vpop.f32.mrf.mxu0
        %v3136 = vadd.f32 0.0, %v3135
        %3137 = vdwg.mxu0
        %v3154 = vunpack.c.l.b16 %v2920
        %v3155 = vunpack.c.l.b16 %v2921
        %v3156 = vunpack.c.l.b16 %v2922
        %v3157 = vunpack.c.l.b16 %v2923
        %v3158 = vunpack.c.l.b16 %v2924
        %v3159 = vunpack.c.l.b16 %v2925
        %v3160 = vunpack.c.l.b16 %v2926
        %v3161 = vunpack.c.l.b16 %v2927
        %v3162 = vunpack.c.l.b16 %v2928
        %v3163 = vunpack.c.l.b16 %v2929
        %v3164 = vunpack.c.l.b16 %v2930
        %v3165 = vunpack.c.l.b16 %v2931
        %v3166 = vunpack.c.l.b16 %v2932
        %v3167 = vunpack.c.l.b16 %v2933
        %v3168 = vunpack.c.l.b16 %v2934
        %v3169 = vunpack.c.l.b16 %v2935
        %v3170 = vpack.c.b16 %v3155, %v3154
        %v3171 = vpack.c.b16 %v3157, %v3156
        %v3172 = vpack.c.b16 %v3159, %v3158
        %v3173 = vpack.c.b16 %v3161, %v3160
        %v3174 = vpack.c.b16 %v3163, %v3162
        %v3175 = vpack.c.b16 %v3165, %v3164
        %v3176 = vpack.c.b16 %v3167, %v3166
        %v3177 = vpack.c.b16 %v3169, %v3168
        %3186 = vmatpush.bf16.msra.mxu0 %v3177
        %3187 = vmatpush.bf16.msra.mxu0 %v3176
        %3188 = vmatpush.bf16.msra.mxu0 %v3175
        %3189 = vmatpush.bf16.msra.mxu0 %v3174
        %3190 = vmatpush.bf16.msra.mxu0 %v3173
        %3191 = vmatpush.bf16.msra.mxu0 %v3172
        %3192 = vmatpush.bf16.msra.mxu0 %v3171
        %3193 = vmatpush.bf16.msra.mxu0 %v3170
        %3194 = vmatmul.bf16.gmra.mxu0 %v2904
        %v3195 = vpop.f32.mrf.mxu0
        %v3196 = vadd.f32 %v3059, %v3195
        %v3197 = vpop.f32.mrf.mxu0
        %v3198 = vadd.f32 %v3061, %v3197
        %3199 = vmatmul.bf16.gmra.mxu0 %v2905
        %v3200 = vpop.f32.mrf.mxu0
        %v3201 = vadd.f32 %v3064, %v3200
        %v3202 = vpop.f32.mrf.mxu0
        %v3203 = vadd.f32 %v3066, %v3202
        %3204 = vmatmul.bf16.gmra.mxu0 %v2906
        %v3205 = vpop.f32.mrf.mxu0
        %v3206 = vadd.f32 %v3069, %v3205
        %v3207 = vpop.f32.mrf.mxu0
        %v3208 = vadd.f32 %v3071, %v3207
        %3209 = vmatmul.bf16.gmra.mxu0 %v2907
        %v3210 = vpop.f32.mrf.mxu0
        %v3211 = vadd.f32 %v3074, %v3210
        %v3212 = vpop.f32.mrf.mxu0
        %v3213 = vadd.f32 %v3076, %v3212
        %3214 = vmatmul.bf16.gmra.mxu0 %v2908
        %v3215 = vpop.f32.mrf.mxu0
        %v3216 = vadd.f32 %v3079, %v3215
        %v3217 = vpop.f32.mrf.mxu0
        %v3218 = vadd.f32 %v3081, %v3217
        %3219 = vmatmul.bf16.gmra.mxu0 %v2909
        %v3220 = vpop.f32.mrf.mxu0
        %v3221 = vadd.f32 %v3084, %v3220
        %v3222 = vpop.f32.mrf.mxu0
        %v3223 = vadd.f32 %v3086, %v3222
        %3224 = vmatmul.bf16.gmra.mxu0 %v2910
        %v3225 = vpop.f32.mrf.mxu0
        %v3226 = vadd.f32 %v3089, %v3225
        %v3227 = vpop.f32.mrf.mxu0
        %v3228 = vadd.f32 %v3091, %v3227
        %3229 = vmatmul.bf16.gmra.mxu0 %v2911
        %v3230 = vpop.f32.mrf.mxu0
        %v3231 = vadd.f32 %v3094, %v3230
        %v3232 = vpop.f32.mrf.mxu0
        %v3233 = vadd.f32 %v3096, %v3232
        %3234 = vmatmul.bf16.gmra.mxu0 %v2912
        %v3235 = vpop.f32.mrf.mxu0
        %v3236 = vadd.f32 %v3099, %v3235
        %v3237 = vpop.f32.mrf.mxu0
        %v3238 = vadd.f32 %v3101, %v3237
        %3239 = vmatmul.bf16.gmra.mxu0 %v2913
        %v3240 = vpop.f32.mrf.mxu0
        %v3241 = vadd.f32 %v3104, %v3240
        %v3242 = vpop.f32.mrf.mxu0
        %v3243 = vadd.f32 %v3106, %v3242
        %3244 = vmatmul.bf16.gmra.mxu0 %v2914
        %v3245 = vpop.f32.mrf.mxu0
        %v3246 = vadd.f32 %v3109, %v3245
        %v3247 = vpop.f32.mrf.mxu0
        %v3248 = vadd.f32 %v3111, %v3247
        %3249 = vmatmul.bf16.gmra.mxu0 %v2915
        %v3250 = vpop.f32.mrf.mxu0
        %v3251 = vadd.f32 %v3114, %v3250
        %v3252 = vpop.f32.mrf.mxu0
        %v3253 = vadd.f32 %v3116, %v3252
        %3254 = vmatmul.bf16.gmra.mxu0 %v2916
        %v3255 = vpop.f32.mrf.mxu0
        %v3256 = vadd.f32 %v3119, %v3255
        %v3257 = vpop.f32.mrf.mxu0
        %v3258 = vadd.f32 %v3121, %v3257
        %3259 = vmatmul.bf16.gmra.mxu0 %v2917
        %v3260 = vpop.f32.mrf.mxu0
        %v3261 = vadd.f32 %v3124, %v3260
        %v3262 = vpop.f32.mrf.mxu0
        %v3263 = vadd.f32 %v3126, %v3262
        %3264 = vmatmul.bf16.gmra.mxu0 %v2918
        %v3265 = vpop.f32.mrf.mxu0
        %v3266 = vadd.f32 %v3129, %v3265
        %v3267 = vpop.f32.mrf.mxu0
        %v3268 = vadd.f32 %v3131, %v3267
        %3269 = vmatmul.bf16.gmra.mxu0 %v2919
        %v3270 = vpop.f32.mrf.mxu0
        %v3271 = vadd.f32 %v3134, %v3270
        %v3272 = vpop.f32.mrf.mxu0
        %v3273 = vadd.f32 %v3136, %v3272
        %3274 = vdwg.mxu0
        %v3275 = vld [vmem:[#allocation3 + $0x2] sm:$0xff]
        %v3276 = vld [vmem:[#allocation3 + $0xa] sm:$0xff]
        %v3277 = vld [vmem:[#allocation3 + $0x1a] sm:$0xff]
        %v3278 = vld [vmem:[#allocation3 + $0x22] sm:$0xff]
        %v3279 = vld [vmem:[#allocation3 + $0x32] sm:$0xff]
        %v3280 = vld [vmem:[#allocation3 + $0x3a] sm:$0xff]
        %v3281 = vld [vmem:[#allocation3 + $0x4a] sm:$0xff]
        %v3282 = vld [vmem:[#allocation3 + $0x52] sm:$0xff]
        %v3283 = vld [vmem:[#allocation3 + $0x62] sm:$0xff]
        %v3284 = vld [vmem:[#allocation3 + $0x6a] sm:$0xff]
        %v3285 = vld [vmem:[#allocation3 + $0x7a] sm:$0xff]
        %v3286 = vld [vmem:[#allocation3 + $0x82] sm:$0xff]
        %v3287 = vld [vmem:[#allocation3 + $0x92] sm:$0xff]
        %v3288 = vld [vmem:[#allocation3 + $0x9a] sm:$0xff]
        %v3289 = vld [vmem:[#allocation3 + $0xaa] sm:$0xff]
        %v3290 = vld [vmem:[#allocation3 + $0xb2] sm:$0xff]
        %v3291 = vld [vmem:[#allocation3 + $0xc2] sm:$0xff]
        %v3292 = vld [vmem:[#allocation3 + $0xca] sm:$0xff]
        %v3293 = vld [vmem:[#allocation3 + $0xda] sm:$0xff]
        %v3294 = vld [vmem:[#allocation3 + $0xe2] sm:$0xff]
        %v3295 = vld [vmem:[#allocation3 + $0xf2] sm:$0xff]
        %v3296 = vld [vmem:[#allocation3 + $0xfa] sm:$0xff]
        %v3297 = vld [vmem:[#allocation3 + $0x10a] sm:$0xff]
        %v3298 = vld [vmem:[#allocation3 + $0x112] sm:$0xff]
        %v3299 = vld [vmem:[#allocation3 + $0x122] sm:$0xff]
        %v3300 = vld [vmem:[#allocation3 + $0x12a] sm:$0xff]
        %v3301 = vld [vmem:[#allocation3 + $0x13a] sm:$0xff]
        %v3302 = vld [vmem:[#allocation3 + $0x142] sm:$0xff]
        %v3303 = vld [vmem:[#allocation3 + $0x152] sm:$0xff]
        %v3304 = vld [vmem:[#allocation3 + $0x15a] sm:$0xff]
        %v3305 = vld [vmem:[#allocation3 + $0x16a] sm:$0xff]
        %v3306 = vld [vmem:[#allocation3 + $0x172] sm:$0xff]
        %v3307 = vpack.c.bf16 %v3276, %v3275
        %v3308 = vpack.c.bf16 %v3278, %v3277
        %v3309 = vpack.c.bf16 %v3280, %v3279
        %v3310 = vpack.c.bf16 %v3282, %v3281
        %v3311 = vpack.c.bf16 %v3284, %v3283
        %v3312 = vpack.c.bf16 %v3286, %v3285
        %v3313 = vpack.c.bf16 %v3288, %v3287
        %v3314 = vpack.c.bf16 %v3290, %v3289
        %v3315 = vpack.c.bf16 %v3292, %v3291
        %v3316 = vpack.c.bf16 %v3294, %v3293
        %v3317 = vpack.c.bf16 %v3296, %v3295
        %v3318 = vpack.c.bf16 %v3298, %v3297
        %v3319 = vpack.c.bf16 %v3300, %v3299
        %v3320 = vpack.c.bf16 %v3302, %v3301
        %v3321 = vpack.c.bf16 %v3304, %v3303
        %v3322 = vpack.c.bf16 %v3306, %v3305
        %s3323 = scalar_lea.vmem %s4, 128
        %v3324 = vld [vmem:[%s3323] sm:$0xf]
        %v3325 = vld [vmem:[%s3323 + $0x4] sm:$0xf]
        %v3326 = vld [vmem:[%s3323 + $0x8] sm:$0xf]
        %v3327 = vld [vmem:[%s3323 + $0xc] sm:$0xf]
        %v3328 = vld [vmem:[%s3323 + $0x10] sm:$0xf]
        %v3329 = vld [vmem:[%s3323 + $0x14] sm:$0xf]
        %v3330 = vld [vmem:[%s3323 + $0x18] sm:$0xf]
        %v3331 = vld [vmem:[%s3323 + $0x1c] sm:$0xf]
        %v3332 = vld [vmem:[%s3323 + $0x20] sm:$0xf]
        %v3333 = vld [vmem:[%s3323 + $0x24] sm:$0xf]
        %v3334 = vld [vmem:[%s3323 + $0x28] sm:$0xf]
        %v3335 = vld [vmem:[%s3323 + $0x2c] sm:$0xf]
        %v3336 = vld [vmem:[%s3323 + $0x30] sm:$0xf]
        %v3337 = vld [vmem:[%s3323 + $0x34] sm:$0xf]
        %v3338 = vld [vmem:[%s3323 + $0x38] sm:$0xf]
        %v3339 = vld [vmem:[%s3323 + $0x3c] sm:$0xf]
        %v3356 = vunpack.c.l.b16 %v3324
        %v3357 = vunpack.c.l.b16 %v3325
        %v3358 = vunpack.c.l.b16 %v3326
        %v3359 = vunpack.c.l.b16 %v3327
        %v3360 = vunpack.c.l.b16 %v3328
        %v3361 = vunpack.c.l.b16 %v3329
        %v3362 = vunpack.c.l.b16 %v3330
        %v3363 = vunpack.c.l.b16 %v3331
        %v3364 = vunpack.c.l.b16 %v3332
        %v3365 = vunpack.c.l.b16 %v3333
        %v3366 = vunpack.c.l.b16 %v3334
        %v3367 = vunpack.c.l.b16 %v3335
        %v3368 = vunpack.c.l.b16 %v3336
        %v3369 = vunpack.c.l.b16 %v3337
        %v3370 = vunpack.c.l.b16 %v3338
        %v3371 = vunpack.c.l.b16 %v3339
        %v3372 = vpack.c.b16 %v3357, %v3356
        %v3373 = vpack.c.b16 %v3359, %v3358
        %v3374 = vpack.c.b16 %v3361, %v3360
        %v3375 = vpack.c.b16 %v3363, %v3362
        %v3376 = vpack.c.b16 %v3365, %v3364
        %v3377 = vpack.c.b16 %v3367, %v3366
        %v3378 = vpack.c.b16 %v3369, %v3368
        %v3379 = vpack.c.b16 %v3371, %v3370
        %3388 = vmatpush.bf16.msra.mxu0 %v3379
        %3389 = vmatpush.bf16.msra.mxu0 %v3378
        %3390 = vmatpush.bf16.msra.mxu0 %v3377
        %3391 = vmatpush.bf16.msra.mxu0 %v3376
        %3392 = vmatpush.bf16.msra.mxu0 %v3375
        %3393 = vmatpush.bf16.msra.mxu0 %v3374
        %3394 = vmatpush.bf16.msra.mxu0 %v3373
        %3395 = vmatpush.bf16.msra.mxu0 %v3372
        %3396 = vmatmul.bf16.gmra.mxu0 %v3307
        %v3397 = vpop.f32.mrf.mxu0
        %v3398 = vadd.f32 0.0, %v3397
        %v3399 = vpop.f32.mrf.mxu0
        %v3400 = vadd.f32 0.0, %v3399
        %3401 = vmatmul.bf16.gmra.mxu0 %v3308
        %v3402 = vpop.f32.mrf.mxu0
        %v3403 = vadd.f32 0.0, %v3402
        %v3404 = vpop.f32.mrf.mxu0
        %v3405 = vadd.f32 0.0, %v3404
        %3406 = vmatmul.bf16.gmra.mxu0 %v3309
        %v3407 = vpop.f32.mrf.mxu0
        %v3408 = vadd.f32 0.0, %v3407
        %v3409 = vpop.f32.mrf.mxu0
        %v3410 = vadd.f32 0.0, %v3409
        %3411 = vmatmul.bf16.gmra.mxu0 %v3310
        %v3412 = vpop.f32.mrf.mxu0
        %v3413 = vadd.f32 0.0, %v3412
        %v3414 = vpop.f32.mrf.mxu0
        %v3415 = vadd.f32 0.0, %v3414
        %3416 = vmatmul.bf16.gmra.mxu0 %v3311
        %v3417 = vpop.f32.mrf.mxu0
        %v3418 = vadd.f32 0.0, %v3417
        %v3419 = vpop.f32.mrf.mxu0
        %v3420 = vadd.f32 0.0, %v3419
        %3421 = vmatmul.bf16.gmra.mxu0 %v3312
        %v3422 = vpop.f32.mrf.mxu0
        %v3423 = vadd.f32 0.0, %v3422
        %v3424 = vpop.f32.mrf.mxu0
        %v3425 = vadd.f32 0.0, %v3424
        %3426 = vmatmul.bf16.gmra.mxu0 %v3313
        %v3427 = vpop.f32.mrf.mxu0
        %v3428 = vadd.f32 0.0, %v3427
        %v3429 = vpop.f32.mrf.mxu0
        %v3430 = vadd.f32 0.0, %v3429
        %3431 = vmatmul.bf16.gmra.mxu0 %v3314
        %v3432 = vpop.f32.mrf.mxu0
        %v3433 = vadd.f32 0.0, %v3432
        %v3434 = vpop.f32.mrf.mxu0
        %v3435 = vadd.f32 0.0, %v3434
        %3436 = vmatmul.bf16.gmra.mxu0 %v3315
        %v3437 = vpop.f32.mrf.mxu0
        %v3438 = vadd.f32 0.0, %v3437
        %v3439 = vpop.f32.mrf.mxu0
        %v3440 = vadd.f32 0.0, %v3439
        %3441 = vmatmul.bf16.gmra.mxu0 %v3316
        %v3442 = vpop.f32.mrf.mxu0
        %v3443 = vadd.f32 0.0, %v3442
        %v3444 = vpop.f32.mrf.mxu0
        %v3445 = vadd.f32 0.0, %v3444
        %3446 = vmatmul.bf16.gmra.mxu0 %v3317
        %v3447 = vpop.f32.mrf.mxu0
        %v3448 = vadd.f32 0.0, %v3447
        %v3449 = vpop.f32.mrf.mxu0
        %v3450 = vadd.f32 0.0, %v3449
        %3451 = vmatmul.bf16.gmra.mxu0 %v3318
        %v3452 = vpop.f32.mrf.mxu0
        %v3453 = vadd.f32 0.0, %v3452
        %v3454 = vpop.f32.mrf.mxu0
        %v3455 = vadd.f32 0.0, %v3454
        %3456 = vmatmul.bf16.gmra.mxu0 %v3319
        %v3457 = vpop.f32.mrf.mxu0
        %v3458 = vadd.f32 0.0, %v3457
        %v3459 = vpop.f32.mrf.mxu0
        %v3460 = vadd.f32 0.0, %v3459
        %3461 = vmatmul.bf16.gmra.mxu0 %v3320
        %v3462 = vpop.f32.mrf.mxu0
        %v3463 = vadd.f32 0.0, %v3462
        %v3464 = vpop.f32.mrf.mxu0
        %v3465 = vadd.f32 0.0, %v3464
        %3466 = vmatmul.bf16.gmra.mxu0 %v3321
        %v3467 = vpop.f32.mrf.mxu0
        %v3468 = vadd.f32 0.0, %v3467
        %v3469 = vpop.f32.mrf.mxu0
        %v3470 = vadd.f32 0.0, %v3469
        %3471 = vmatmul.bf16.gmra.mxu0 %v3322
        %v3472 = vpop.f32.mrf.mxu0
        %v3473 = vadd.f32 0.0, %v3472
        %v3474 = vpop.f32.mrf.mxu0
        %v3475 = vadd.f32 0.0, %v3474
        %3476 = vdwg.mxu0
        %v3477 = vadd.f32 %v3196, %v3398
        %v3478 = vadd.f32 %v3198, %v3400
        %v3479 = vadd.f32 %v3201, %v3403
        %v3480 = vadd.f32 %v3203, %v3405
        %v3481 = vadd.f32 %v3206, %v3408
        %v3482 = vadd.f32 %v3208, %v3410
        %v3483 = vadd.f32 %v3211, %v3413
        %v3484 = vadd.f32 %v3213, %v3415
        %v3485 = vadd.f32 %v3216, %v3418
        %v3486 = vadd.f32 %v3218, %v3420
        %v3487 = vadd.f32 %v3221, %v3423
        %v3488 = vadd.f32 %v3223, %v3425
        %v3489 = vadd.f32 %v3226, %v3428
        %v3490 = vadd.f32 %v3228, %v3430
        %v3491 = vadd.f32 %v3231, %v3433
        %v3492 = vadd.f32 %v3233, %v3435
        %v3493 = vadd.f32 %v3236, %v3438
        %v3494 = vadd.f32 %v3238, %v3440
        %v3495 = vadd.f32 %v3241, %v3443
        %v3496 = vadd.f32 %v3243, %v3445
        %v3497 = vadd.f32 %v3246, %v3448
        %v3498 = vadd.f32 %v3248, %v3450
        %v3499 = vadd.f32 %v3251, %v3453
        %v3500 = vadd.f32 %v3253, %v3455
        %v3501 = vadd.f32 %v3256, %v3458
        %v3502 = vadd.f32 %v3258, %v3460
        %v3503 = vadd.f32 %v3261, %v3463
        %v3504 = vadd.f32 %v3263, %v3465
        %v3505 = vadd.f32 %v3266, %v3468
        %v3506 = vadd.f32 %v3268, %v3470
        %v3507 = vadd.f32 %v3271, %v3473
        %v3508 = vadd.f32 %v3273, %v3475
        %v3509 = vld [vmem:[%s2807] sm:$0xff]
        %v3510 = vld [vmem:[%s2807 + $0x8] sm:$0xff]
        %v3511 = vld [vmem:[%s2807 + $0x18] sm:$0xff]
        %v3512 = vld [vmem:[%s2807 + $0x20] sm:$0xff]
        %v3513 = vld [vmem:[%s2807 + $0x30] sm:$0xff]
        %v3514 = vld [vmem:[%s2807 + $0x38] sm:$0xff]
        %v3515 = vld [vmem:[%s2807 + $0x48] sm:$0xff]
        %v3516 = vld [vmem:[%s2807 + $0x50] sm:$0xff]
        %v3517 = vld [vmem:[%s2807 + $0x60] sm:$0xff]
        %v3518 = vld [vmem:[%s2807 + $0x68] sm:$0xff]
        %v3519 = vld [vmem:[%s2807 + $0x78] sm:$0xff]
        %v3520 = vld [vmem:[%s2807 + $0x80] sm:$0xff]
        %v3521 = vld [vmem:[%s2807 + $0x90] sm:$0xff]
        %v3522 = vld [vmem:[%s2807 + $0x98] sm:$0xff]
        %v3523 = vld [vmem:[%s2807 + $0xa8] sm:$0xff]
        %v3524 = vld [vmem:[%s2807 + $0xb0] sm:$0xff]
        %v3525 = vld [vmem:[%s2807 + $0xc0] sm:$0xff]
        %v3526 = vld [vmem:[%s2807 + $0xc8] sm:$0xff]
        %v3527 = vld [vmem:[%s2807 + $0xd8] sm:$0xff]
        %v3528 = vld [vmem:[%s2807 + $0xe0] sm:$0xff]
        %v3529 = vld [vmem:[%s2807 + $0xf0] sm:$0xff]
        %v3530 = vld [vmem:[%s2807 + $0xf8] sm:$0xff]
        %v3531 = vld [vmem:[%s2807 + $0x108] sm:$0xff]
        %v3532 = vld [vmem:[%s2807 + $0x110] sm:$0xff]
        %v3533 = vld [vmem:[%s2807 + $0x120] sm:$0xff]
        %v3534 = vld [vmem:[%s2807 + $0x128] sm:$0xff]
        %v3535 = vld [vmem:[%s2807 + $0x138] sm:$0xff]
        %v3536 = vld [vmem:[%s2807 + $0x140] sm:$0xff]
        %v3537 = vld [vmem:[%s2807 + $0x150] sm:$0xff]
        %v3538 = vld [vmem:[%s2807 + $0x158] sm:$0xff]
        %v3539 = vld [vmem:[%s2807 + $0x168] sm:$0xff]
        %v3540 = vld [vmem:[%s2807 + $0x170] sm:$0xff]
        %v3541 = vpack.c.bf16 %v3510, %v3509
        %v3542 = vpack.c.bf16 %v3512, %v3511
        %v3543 = vpack.c.bf16 %v3514, %v3513
        %v3544 = vpack.c.bf16 %v3516, %v3515
        %v3545 = vpack.c.bf16 %v3518, %v3517
        %v3546 = vpack.c.bf16 %v3520, %v3519
        %v3547 = vpack.c.bf16 %v3522, %v3521
        %v3548 = vpack.c.bf16 %v3524, %v3523
        %v3549 = vpack.c.bf16 %v3526, %v3525
        %v3550 = vpack.c.bf16 %v3528, %v3527
        %v3551 = vpack.c.bf16 %v3530, %v3529
        %v3552 = vpack.c.bf16 %v3532, %v3531
        %v3553 = vpack.c.bf16 %v3534, %v3533
        %v3554 = vpack.c.bf16 %v3536, %v3535
        %v3555 = vpack.c.bf16 %v3538, %v3537
        %v3556 = vpack.c.bf16 %v3540, %v3539
        %s3557 = scalar_lea.vmem %s4, 192
        %v3558 = vld [vmem:[%s3557] sm:$0xf]
        %v3559 = vld [vmem:[%s3557 + $0x4] sm:$0xf]
        %v3560 = vld [vmem:[%s3557 + $0x8] sm:$0xf]
        %v3561 = vld [vmem:[%s3557 + $0xc] sm:$0xf]
        %v3562 = vld [vmem:[%s3557 + $0x10] sm:$0xf]
        %v3563 = vld [vmem:[%s3557 + $0x14] sm:$0xf]
        %v3564 = vld [vmem:[%s3557 + $0x18] sm:$0xf]
        %v3565 = vld [vmem:[%s3557 + $0x1c] sm:$0xf]
        %v3566 = vld [vmem:[%s3557 + $0x20] sm:$0xf]
        %v3567 = vld [vmem:[%s3557 + $0x24] sm:$0xf]
        %v3568 = vld [vmem:[%s3557 + $0x28] sm:$0xf]
        %v3569 = vld [vmem:[%s3557 + $0x2c] sm:$0xf]
        %v3570 = vld [vmem:[%s3557 + $0x30] sm:$0xf]
        %v3571 = vld [vmem:[%s3557 + $0x34] sm:$0xf]
        %v3572 = vld [vmem:[%s3557 + $0x38] sm:$0xf]
        %v3573 = vld [vmem:[%s3557 + $0x3c] sm:$0xf]
        %v3590 = vunpack.c.l.b16 %v3558
        %v3591 = vunpack.c.l.b16 %v3559
        %v3592 = vunpack.c.l.b16 %v3560
        %v3593 = vunpack.c.l.b16 %v3561
        %v3594 = vunpack.c.l.b16 %v3562
        %v3595 = vunpack.c.l.b16 %v3563
        %v3596 = vunpack.c.l.b16 %v3564
        %v3597 = vunpack.c.l.b16 %v3565
        %v3598 = vunpack.c.l.b16 %v3566
        %v3599 = vunpack.c.l.b16 %v3567
        %v3600 = vunpack.c.l.b16 %v3568
        %v3601 = vunpack.c.l.b16 %v3569
        %v3602 = vunpack.c.l.b16 %v3570
        %v3603 = vunpack.c.l.b16 %v3571
        %v3604 = vunpack.c.l.b16 %v3572
        %v3605 = vunpack.c.l.b16 %v3573
        %v3606 = vpack.c.b16 %v3591, %v3590
        %v3607 = vpack.c.b16 %v3593, %v3592
        %v3608 = vpack.c.b16 %v3595, %v3594
        %v3609 = vpack.c.b16 %v3597, %v3596
        %v3610 = vpack.c.b16 %v3599, %v3598
        %v3611 = vpack.c.b16 %v3601, %v3600
        %v3612 = vpack.c.b16 %v3603, %v3602
        %v3613 = vpack.c.b16 %v3605, %v3604
        %3622 = vmatpush.bf16.msra.mxu0 %v3613
        %3623 = vmatpush.bf16.msra.mxu0 %v3612
        %3624 = vmatpush.bf16.msra.mxu0 %v3611
        %3625 = vmatpush.bf16.msra.mxu0 %v3610
        %3626 = vmatpush.bf16.msra.mxu0 %v3609
        %3627 = vmatpush.bf16.msra.mxu0 %v3608
        %3628 = vmatpush.bf16.msra.mxu0 %v3607
        %3629 = vmatpush.bf16.msra.mxu0 %v3606
        %3630 = vmatmul.bf16.gmra.mxu0 %v3541
        %v3631 = vpop.f32.mrf.mxu0
        %v3632 = vadd.f32 0.0, %v3631
        %v3633 = vpop.f32.mrf.mxu0
        %v3634 = vadd.f32 0.0, %v3633
        %3635 = vmatmul.bf16.gmra.mxu0 %v3542
        %v3636 = vpop.f32.mrf.mxu0
        %v3637 = vadd.f32 0.0, %v3636
        %v3638 = vpop.f32.mrf.mxu0
        %v3639 = vadd.f32 0.0, %v3638
        %3640 = vmatmul.bf16.gmra.mxu0 %v3543
        %v3641 = vpop.f32.mrf.mxu0
        %v3642 = vadd.f32 0.0, %v3641
        %v3643 = vpop.f32.mrf.mxu0
        %v3644 = vadd.f32 0.0, %v3643
        %3645 = vmatmul.bf16.gmra.mxu0 %v3544
        %v3646 = vpop.f32.mrf.mxu0
        %v3647 = vadd.f32 0.0, %v3646
        %v3648 = vpop.f32.mrf.mxu0
        %v3649 = vadd.f32 0.0, %v3648
        %3650 = vmatmul.bf16.gmra.mxu0 %v3545
        %v3651 = vpop.f32.mrf.mxu0
        %v3652 = vadd.f32 0.0, %v3651
        %v3653 = vpop.f32.mrf.mxu0
        %v3654 = vadd.f32 0.0, %v3653
        %3655 = vmatmul.bf16.gmra.mxu0 %v3546
        %v3656 = vpop.f32.mrf.mxu0
        %v3657 = vadd.f32 0.0, %v3656
        %v3658 = vpop.f32.mrf.mxu0
        %v3659 = vadd.f32 0.0, %v3658
        %3660 = vmatmul.bf16.gmra.mxu0 %v3547
        %v3661 = vpop.f32.mrf.mxu0
        %v3662 = vadd.f32 0.0, %v3661
        %v3663 = vpop.f32.mrf.mxu0
        %v3664 = vadd.f32 0.0, %v3663
        %3665 = vmatmul.bf16.gmra.mxu0 %v3548
        %v3666 = vpop.f32.mrf.mxu0
        %v3667 = vadd.f32 0.0, %v3666
        %v3668 = vpop.f32.mrf.mxu0
        %v3669 = vadd.f32 0.0, %v3668
        %3670 = vmatmul.bf16.gmra.mxu0 %v3549
        %v3671 = vpop.f32.mrf.mxu0
        %v3672 = vadd.f32 0.0, %v3671
        %v3673 = vpop.f32.mrf.mxu0
        %v3674 = vadd.f32 0.0, %v3673
        %3675 = vmatmul.bf16.gmra.mxu0 %v3550
        %v3676 = vpop.f32.mrf.mxu0
        %v3677 = vadd.f32 0.0, %v3676
        %v3678 = vpop.f32.mrf.mxu0
        %v3679 = vadd.f32 0.0, %v3678
        %3680 = vmatmul.bf16.gmra.mxu0 %v3551
        %v3681 = vpop.f32.mrf.mxu0
        %v3682 = vadd.f32 0.0, %v3681
        %v3683 = vpop.f32.mrf.mxu0
        %v3684 = vadd.f32 0.0, %v3683
        %3685 = vmatmul.bf16.gmra.mxu0 %v3552
        %v3686 = vpop.f32.mrf.mxu0
        %v3687 = vadd.f32 0.0, %v3686
        %v3688 = vpop.f32.mrf.mxu0
        %v3689 = vadd.f32 0.0, %v3688
        %3690 = vmatmul.bf16.gmra.mxu0 %v3553
        %v3691 = vpop.f32.mrf.mxu0
        %v3692 = vadd.f32 0.0, %v3691
        %v3693 = vpop.f32.mrf.mxu0
        %v3694 = vadd.f32 0.0, %v3693
        %3695 = vmatmul.bf16.gmra.mxu0 %v3554
        %v3696 = vpop.f32.mrf.mxu0
        %v3697 = vadd.f32 0.0, %v3696
        %v3698 = vpop.f32.mrf.mxu0
        %v3699 = vadd.f32 0.0, %v3698
        %3700 = vmatmul.bf16.gmra.mxu0 %v3555
        %v3701 = vpop.f32.mrf.mxu0
        %v3702 = vadd.f32 0.0, %v3701
        %v3703 = vpop.f32.mrf.mxu0
        %v3704 = vadd.f32 0.0, %v3703
        %3705 = vmatmul.bf16.gmra.mxu0 %v3556
        %v3706 = vpop.f32.mrf.mxu0
        %v3707 = vadd.f32 0.0, %v3706
        %v3708 = vpop.f32.mrf.mxu0
        %v3709 = vadd.f32 0.0, %v3708
        %3710 = vdwg.mxu0
        %v3711 = vadd.f32 %v3477, %v3632
        %v3712 = vadd.f32 %v3478, %v3634
        %v3713 = vadd.f32 %v3479, %v3637
        %v3714 = vadd.f32 %v3480, %v3639
        %v3715 = vadd.f32 %v3481, %v3642
        %v3716 = vadd.f32 %v3482, %v3644
        %v3717 = vadd.f32 %v3483, %v3647
        %v3718 = vadd.f32 %v3484, %v3649
        %v3719 = vadd.f32 %v3485, %v3652
        %v3720 = vadd.f32 %v3486, %v3654
        %v3721 = vadd.f32 %v3487, %v3657
        %v3722 = vadd.f32 %v3488, %v3659
        %v3723 = vadd.f32 %v3489, %v3662
        %v3724 = vadd.f32 %v3490, %v3664
        %v3725 = vadd.f32 %v3491, %v3667
        %v3726 = vadd.f32 %v3492, %v3669
        %v3727 = vadd.f32 %v3493, %v3672
        %v3728 = vadd.f32 %v3494, %v3674
        %v3729 = vadd.f32 %v3495, %v3677
        %v3730 = vadd.f32 %v3496, %v3679
        %v3731 = vadd.f32 %v3497, %v3682
        %v3732 = vadd.f32 %v3498, %v3684
        %v3733 = vadd.f32 %v3499, %v3687
        %v3734 = vadd.f32 %v3500, %v3689
        %v3735 = vadd.f32 %v3501, %v3692
        %v3736 = vadd.f32 %v3502, %v3694
        %v3737 = vadd.f32 %v3503, %v3697
        %v3738 = vadd.f32 %v3504, %v3699
        %v3739 = vadd.f32 %v3505, %v3702
        %v3740 = vadd.f32 %v3506, %v3704
        %v3741 = vadd.f32 %v3507, %v3707
        %v3742 = vadd.f32 %v3508, %v3709
        %v3743 = vld [vmem:[%s2807 + $0x1] sm:$0xff]
        %v3744 = vld [vmem:[%s2807 + $0x9] sm:$0xff]
        %v3745 = vld [vmem:[%s2807 + $0x19] sm:$0xff]
        %v3746 = vld [vmem:[%s2807 + $0x21] sm:$0xff]
        %v3747 = vld [vmem:[%s2807 + $0x31] sm:$0xff]
        %v3748 = vld [vmem:[%s2807 + $0x39] sm:$0xff]
        %v3749 = vld [vmem:[%s2807 + $0x49] sm:$0xff]
        %v3750 = vld [vmem:[%s2807 + $0x51] sm:$0xff]
        %v3751 = vld [vmem:[%s2807 + $0x61] sm:$0xff]
        %v3752 = vld [vmem:[%s2807 + $0x69] sm:$0xff]
        %v3753 = vld [vmem:[%s2807 + $0x79] sm:$0xff]
        %v3754 = vld [vmem:[%s2807 + $0x81] sm:$0xff]
        %v3755 = vld [vmem:[%s2807 + $0x91] sm:$0xff]
        %v3756 = vld [vmem:[%s2807 + $0x99] sm:$0xff]
        %v3757 = vld [vmem:[%s2807 + $0xa9] sm:$0xff]
        %v3758 = vld [vmem:[%s2807 + $0xb1] sm:$0xff]
        %v3759 = vld [vmem:[%s2807 + $0xc1] sm:$0xff]
        %v3760 = vld [vmem:[%s2807 + $0xc9] sm:$0xff]
        %v3761 = vld [vmem:[%s2807 + $0xd9] sm:$0xff]
        %v3762 = vld [vmem:[%s2807 + $0xe1] sm:$0xff]
        %v3763 = vld [vmem:[%s2807 + $0xf1] sm:$0xff]
        %v3764 = vld [vmem:[%s2807 + $0xf9] sm:$0xff]
        %v3765 = vld [vmem:[%s2807 + $0x109] sm:$0xff]
        %v3766 = vld [vmem:[%s2807 + $0x111] sm:$0xff]
        %v3767 = vld [vmem:[%s2807 + $0x121] sm:$0xff]
        %v3768 = vld [vmem:[%s2807 + $0x129] sm:$0xff]
        %v3769 = vld [vmem:[%s2807 + $0x139] sm:$0xff]
        %v3770 = vld [vmem:[%s2807 + $0x141] sm:$0xff]
        %v3771 = vld [vmem:[%s2807 + $0x151] sm:$0xff]
        %v3772 = vld [vmem:[%s2807 + $0x159] sm:$0xff]
        %v3773 = vld [vmem:[%s2807 + $0x169] sm:$0xff]
        %v3774 = vld [vmem:[%s2807 + $0x171] sm:$0xff]
        %v3775 = vpack.c.bf16 %v3744, %v3743
        %v3776 = vpack.c.bf16 %v3746, %v3745
        %v3777 = vpack.c.bf16 %v3748, %v3747
        %v3778 = vpack.c.bf16 %v3750, %v3749
        %v3779 = vpack.c.bf16 %v3752, %v3751
        %v3780 = vpack.c.bf16 %v3754, %v3753
        %v3781 = vpack.c.bf16 %v3756, %v3755
        %v3782 = vpack.c.bf16 %v3758, %v3757
        %v3783 = vpack.c.bf16 %v3760, %v3759
        %v3784 = vpack.c.bf16 %v3762, %v3761
        %v3785 = vpack.c.bf16 %v3764, %v3763
        %v3786 = vpack.c.bf16 %v3766, %v3765
        %v3787 = vpack.c.bf16 %v3768, %v3767
        %v3788 = vpack.c.bf16 %v3770, %v3769
        %v3789 = vpack.c.bf16 %v3772, %v3771
        %v3790 = vpack.c.bf16 %v3774, %v3773
        %s3791 = scalar_lea.vmem %s4, 256
        %v3792 = vld [vmem:[%s3791] sm:$0xf]
        %v3793 = vld [vmem:[%s3791 + $0x4] sm:$0xf]
        %v3794 = vld [vmem:[%s3791 + $0x8] sm:$0xf]
        %v3795 = vld [vmem:[%s3791 + $0xc] sm:$0xf]
        %v3796 = vld [vmem:[%s3791 + $0x10] sm:$0xf]
        %v3797 = vld [vmem:[%s3791 + $0x14] sm:$0xf]
        %v3798 = vld [vmem:[%s3791 + $0x18] sm:$0xf]
        %v3799 = vld [vmem:[%s3791 + $0x1c] sm:$0xf]
        %v3800 = vld [vmem:[%s3791 + $0x20] sm:$0xf]
        %v3801 = vld [vmem:[%s3791 + $0x24] sm:$0xf]
        %v3802 = vld [vmem:[%s3791 + $0x28] sm:$0xf]
        %v3803 = vld [vmem:[%s3791 + $0x2c] sm:$0xf]
        %v3804 = vld [vmem:[%s3791 + $0x30] sm:$0xf]
        %v3805 = vld [vmem:[%s3791 + $0x34] sm:$0xf]
        %v3806 = vld [vmem:[%s3791 + $0x38] sm:$0xf]
        %v3807 = vld [vmem:[%s3791 + $0x3c] sm:$0xf]
        %v3824 = vunpack.c.l.b16 %v3792
        %v3825 = vunpack.c.l.b16 %v3793
        %v3826 = vunpack.c.l.b16 %v3794
        %v3827 = vunpack.c.l.b16 %v3795
        %v3828 = vunpack.c.l.b16 %v3796
        %v3829 = vunpack.c.l.b16 %v3797
        %v3830 = vunpack.c.l.b16 %v3798
        %v3831 = vunpack.c.l.b16 %v3799
        %v3832 = vunpack.c.l.b16 %v3800
        %v3833 = vunpack.c.l.b16 %v3801
        %v3834 = vunpack.c.l.b16 %v3802
        %v3835 = vunpack.c.l.b16 %v3803
        %v3836 = vunpack.c.l.b16 %v3804
        %v3837 = vunpack.c.l.b16 %v3805
        %v3838 = vunpack.c.l.b16 %v3806
        %v3839 = vunpack.c.l.b16 %v3807
        %v3840 = vpack.c.b16 %v3825, %v3824
        %v3841 = vpack.c.b16 %v3827, %v3826
        %v3842 = vpack.c.b16 %v3829, %v3828
        %v3843 = vpack.c.b16 %v3831, %v3830
        %v3844 = vpack.c.b16 %v3833, %v3832
        %v3845 = vpack.c.b16 %v3835, %v3834
        %v3846 = vpack.c.b16 %v3837, %v3836
        %v3847 = vpack.c.b16 %v3839, %v3838
        %3856 = vmatpush.bf16.msra.mxu0 %v3847
        %3857 = vmatpush.bf16.msra.mxu0 %v3846
        %3858 = vmatpush.bf16.msra.mxu0 %v3845
        %3859 = vmatpush.bf16.msra.mxu0 %v3844
        %3860 = vmatpush.bf16.msra.mxu0 %v3843
        %3861 = vmatpush.bf16.msra.mxu0 %v3842
        %3862 = vmatpush.bf16.msra.mxu0 %v3841
        %3863 = vmatpush.bf16.msra.mxu0 %v3840
        %3864 = vmatmul.bf16.gmra.mxu0 %v3775
        %v3865 = vpop.f32.mrf.mxu0
        %v3866 = vadd.f32 0.0, %v3865
        %v3867 = vpop.f32.mrf.mxu0
        %v3868 = vadd.f32 0.0, %v3867
        %3869 = vmatmul.bf16.gmra.mxu0 %v3776
        %v3870 = vpop.f32.mrf.mxu0
        %v3871 = vadd.f32 0.0, %v3870
        %v3872 = vpop.f32.mrf.mxu0
        %v3873 = vadd.f32 0.0, %v3872
        %3874 = vmatmul.bf16.gmra.mxu0 %v3777
        %v3875 = vpop.f32.mrf.mxu0
        %v3876 = vadd.f32 0.0, %v3875
        %v3877 = vpop.f32.mrf.mxu0
        %v3878 = vadd.f32 0.0, %v3877
        %3879 = vmatmul.bf16.gmra.mxu0 %v3778
        %v3880 = vpop.f32.mrf.mxu0
        %v3881 = vadd.f32 0.0, %v3880
        %v3882 = vpop.f32.mrf.mxu0
        %v3883 = vadd.f32 0.0, %v3882
        %3884 = vmatmul.bf16.gmra.mxu0 %v3779
        %v3885 = vpop.f32.mrf.mxu0
        %v3886 = vadd.f32 0.0, %v3885
        %v3887 = vpop.f32.mrf.mxu0
        %v3888 = vadd.f32 0.0, %v3887
        %3889 = vmatmul.bf16.gmra.mxu0 %v3780
        %v3890 = vpop.f32.mrf.mxu0
        %v3891 = vadd.f32 0.0, %v3890
        %v3892 = vpop.f32.mrf.mxu0
        %v3893 = vadd.f32 0.0, %v3892
        %3894 = vmatmul.bf16.gmra.mxu0 %v3781
        %v3895 = vpop.f32.mrf.mxu0
        %v3896 = vadd.f32 0.0, %v3895
        %v3897 = vpop.f32.mrf.mxu0
        %v3898 = vadd.f32 0.0, %v3897
        %3899 = vmatmul.bf16.gmra.mxu0 %v3782
        %v3900 = vpop.f32.mrf.mxu0
        %v3901 = vadd.f32 0.0, %v3900
        %v3902 = vpop.f32.mrf.mxu0
        %v3903 = vadd.f32 0.0, %v3902
        %3904 = vmatmul.bf16.gmra.mxu0 %v3783
        %v3905 = vpop.f32.mrf.mxu0
        %v3906 = vadd.f32 0.0, %v3905
        %v3907 = vpop.f32.mrf.mxu0
        %v3908 = vadd.f32 0.0, %v3907
        %3909 = vmatmul.bf16.gmra.mxu0 %v3784
        %v3910 = vpop.f32.mrf.mxu0
        %v3911 = vadd.f32 0.0, %v3910
        %v3912 = vpop.f32.mrf.mxu0
        %v3913 = vadd.f32 0.0, %v3912
        %3914 = vmatmul.bf16.gmra.mxu0 %v3785
        %v3915 = vpop.f32.mrf.mxu0
        %v3916 = vadd.f32 0.0, %v3915
        %v3917 = vpop.f32.mrf.mxu0
        %v3918 = vadd.f32 0.0, %v3917
        %3919 = vmatmul.bf16.gmra.mxu0 %v3786
        %v3920 = vpop.f32.mrf.mxu0
        %v3921 = vadd.f32 0.0, %v3920
        %v3922 = vpop.f32.mrf.mxu0
        %v3923 = vadd.f32 0.0, %v3922
        %3924 = vmatmul.bf16.gmra.mxu0 %v3787
        %v3925 = vpop.f32.mrf.mxu0
        %v3926 = vadd.f32 0.0, %v3925
        %v3927 = vpop.f32.mrf.mxu0
        %v3928 = vadd.f32 0.0, %v3927
        %3929 = vmatmul.bf16.gmra.mxu0 %v3788
        %v3930 = vpop.f32.mrf.mxu0
        %v3931 = vadd.f32 0.0, %v3930
        %v3932 = vpop.f32.mrf.mxu0
        %v3933 = vadd.f32 0.0, %v3932
        %3934 = vmatmul.bf16.gmra.mxu0 %v3789
        %v3935 = vpop.f32.mrf.mxu0
        %v3936 = vadd.f32 0.0, %v3935
        %v3937 = vpop.f32.mrf.mxu0
        %v3938 = vadd.f32 0.0, %v3937
        %3939 = vmatmul.bf16.gmra.mxu0 %v3790
        %v3940 = vpop.f32.mrf.mxu0
        %v3941 = vadd.f32 0.0, %v3940
        %v3942 = vpop.f32.mrf.mxu0
        %v3943 = vadd.f32 0.0, %v3942
        %3944 = vdwg.mxu0
        %v3945 = vadd.f32 %v3711, %v3866
        %v3946 = vadd.f32 %v3712, %v3868
        %v3947 = vadd.f32 %v3713, %v3871
        %v3948 = vadd.f32 %v3714, %v3873
        %v3949 = vadd.f32 %v3715, %v3876
        %v3950 = vadd.f32 %v3716, %v3878
        %v3951 = vadd.f32 %v3717, %v3881
        %v3952 = vadd.f32 %v3718, %v3883
        %v3953 = vadd.f32 %v3719, %v3886
        %v3954 = vadd.f32 %v3720, %v3888
        %v3955 = vadd.f32 %v3721, %v3891
        %v3956 = vadd.f32 %v3722, %v3893
        %v3957 = vadd.f32 %v3723, %v3896
        %v3958 = vadd.f32 %v3724, %v3898
        %v3959 = vadd.f32 %v3725, %v3901
        %v3960 = vadd.f32 %v3726, %v3903
        %v3961 = vadd.f32 %v3727, %v3906
        %v3962 = vadd.f32 %v3728, %v3908
        %v3963 = vadd.f32 %v3729, %v3911
        %v3964 = vadd.f32 %v3730, %v3913
        %v3965 = vadd.f32 %v3731, %v3916
        %v3966 = vadd.f32 %v3732, %v3918
        %v3967 = vadd.f32 %v3733, %v3921
        %v3968 = vadd.f32 %v3734, %v3923
        %v3969 = vadd.f32 %v3735, %v3926
        %v3970 = vadd.f32 %v3736, %v3928
        %v3971 = vadd.f32 %v3737, %v3931
        %v3972 = vadd.f32 %v3738, %v3933
        %v3973 = vadd.f32 %v3739, %v3936
        %v3974 = vadd.f32 %v3740, %v3938
        %v3975 = vadd.f32 %v3741, %v3941
        %v3976 = vadd.f32 %v3742, %v3943
        %v3977 = vld [vmem:[%s2807 + $0x2] sm:$0xff]
        %v3978 = vld [vmem:[%s2807 + $0xa] sm:$0xff]
        %v3979 = vld [vmem:[%s2807 + $0x1a] sm:$0xff]
        %v3980 = vld [vmem:[%s2807 + $0x22] sm:$0xff]
        %v3981 = vld [vmem:[%s2807 + $0x32] sm:$0xff]
        %v3982 = vld [vmem:[%s2807 + $0x3a] sm:$0xff]
        %v3983 = vld [vmem:[%s2807 + $0x4a] sm:$0xff]
        %v3984 = vld [vmem:[%s2807 + $0x52] sm:$0xff]
        %v3985 = vld [vmem:[%s2807 + $0x62] sm:$0xff]
        %v3986 = vld [vmem:[%s2807 + $0x6a] sm:$0xff]
        %v3987 = vld [vmem:[%s2807 + $0x7a] sm:$0xff]
        %v3988 = vld [vmem:[%s2807 + $0x82] sm:$0xff]
        %v3989 = vld [vmem:[%s2807 + $0x92] sm:$0xff]
        %v3990 = vld [vmem:[%s2807 + $0x9a] sm:$0xff]
        %v3991 = vld [vmem:[%s2807 + $0xaa] sm:$0xff]
        %v3992 = vld [vmem:[%s2807 + $0xb2] sm:$0xff]
        %v3993 = vld [vmem:[%s2807 + $0xc2] sm:$0xff]
        %v3994 = vld [vmem:[%s2807 + $0xca] sm:$0xff]
        %v3995 = vld [vmem:[%s2807 + $0xda] sm:$0xff]
        %v3996 = vld [vmem:[%s2807 + $0xe2] sm:$0xff]
        %v3997 = vld [vmem:[%s2807 + $0xf2] sm:$0xff]
        %v3998 = vld [vmem:[%s2807 + $0xfa] sm:$0xff]
        %v3999 = vld [vmem:[%s2807 + $0x10a] sm:$0xff]
        %v4000 = vld [vmem:[%s2807 + $0x112] sm:$0xff]
        %v4001 = vld [vmem:[%s2807 + $0x122] sm:$0xff]
        %v4002 = vld [vmem:[%s2807 + $0x12a] sm:$0xff]
        %v4003 = vld [vmem:[%s2807 + $0x13a] sm:$0xff]
        %v4004 = vld [vmem:[%s2807 + $0x142] sm:$0xff]
        %v4005 = vld [vmem:[%s2807 + $0x152] sm:$0xff]
        %v4006 = vld [vmem:[%s2807 + $0x15a] sm:$0xff]
        %v4007 = vld [vmem:[%s2807 + $0x16a] sm:$0xff]
        %v4008 = vld [vmem:[%s2807 + $0x172] sm:$0xff]
        %v4009 = vpack.c.bf16 %v3978, %v3977
        %v4010 = vpack.c.bf16 %v3980, %v3979
        %v4011 = vpack.c.bf16 %v3982, %v3981
        %v4012 = vpack.c.bf16 %v3984, %v3983
        %v4013 = vpack.c.bf16 %v3986, %v3985
        %v4014 = vpack.c.bf16 %v3988, %v3987
        %v4015 = vpack.c.bf16 %v3990, %v3989
        %v4016 = vpack.c.bf16 %v3992, %v3991
        %v4017 = vpack.c.bf16 %v3994, %v3993
        %v4018 = vpack.c.bf16 %v3996, %v3995
        %v4019 = vpack.c.bf16 %v3998, %v3997
        %v4020 = vpack.c.bf16 %v4000, %v3999
        %v4021 = vpack.c.bf16 %v4002, %v4001
        %v4022 = vpack.c.bf16 %v4004, %v4003
        %v4023 = vpack.c.bf16 %v4006, %v4005
        %v4024 = vpack.c.bf16 %v4008, %v4007
        %s4025 = scalar_lea.vmem %s4, 320
        %v4026 = vld [vmem:[%s4025] sm:$0xf]
        %v4027 = vld [vmem:[%s4025 + $0x4] sm:$0xf]
        %v4028 = vld [vmem:[%s4025 + $0x8] sm:$0xf]
        %v4029 = vld [vmem:[%s4025 + $0xc] sm:$0xf]
        %v4030 = vld [vmem:[%s4025 + $0x10] sm:$0xf]
        %v4031 = vld [vmem:[%s4025 + $0x14] sm:$0xf]
        %v4032 = vld [vmem:[%s4025 + $0x18] sm:$0xf]
        %v4033 = vld [vmem:[%s4025 + $0x1c] sm:$0xf]
        %v4034 = vld [vmem:[%s4025 + $0x20] sm:$0xf]
        %v4035 = vld [vmem:[%s4025 + $0x24] sm:$0xf]
        %v4036 = vld [vmem:[%s4025 + $0x28] sm:$0xf]
        %v4037 = vld [vmem:[%s4025 + $0x2c] sm:$0xf]
        %v4038 = vld [vmem:[%s4025 + $0x30] sm:$0xf]
        %v4039 = vld [vmem:[%s4025 + $0x34] sm:$0xf]
        %v4040 = vld [vmem:[%s4025 + $0x38] sm:$0xf]
        %v4041 = vld [vmem:[%s4025 + $0x3c] sm:$0xf]
        %v4058 = vunpack.c.l.b16 %v4026
        %v4059 = vunpack.c.l.b16 %v4027
        %v4060 = vunpack.c.l.b16 %v4028
        %v4061 = vunpack.c.l.b16 %v4029
        %v4062 = vunpack.c.l.b16 %v4030
        %v4063 = vunpack.c.l.b16 %v4031
        %v4064 = vunpack.c.l.b16 %v4032
        %v4065 = vunpack.c.l.b16 %v4033
        %v4066 = vunpack.c.l.b16 %v4034
        %v4067 = vunpack.c.l.b16 %v4035
        %v4068 = vunpack.c.l.b16 %v4036
        %v4069 = vunpack.c.l.b16 %v4037
        %v4070 = vunpack.c.l.b16 %v4038
        %v4071 = vunpack.c.l.b16 %v4039
        %v4072 = vunpack.c.l.b16 %v4040
        %v4073 = vunpack.c.l.b16 %v4041
        %v4074 = vpack.c.b16 %v4059, %v4058
        %v4075 = vpack.c.b16 %v4061, %v4060
        %v4076 = vpack.c.b16 %v4063, %v4062
        %v4077 = vpack.c.b16 %v4065, %v4064
        %v4078 = vpack.c.b16 %v4067, %v4066
        %v4079 = vpack.c.b16 %v4069, %v4068
        %v4080 = vpack.c.b16 %v4071, %v4070
        %v4081 = vpack.c.b16 %v4073, %v4072
        %4090 = vmatpush.bf16.msra.mxu0 %v4081
        %4091 = vmatpush.bf16.msra.mxu0 %v4080
        %4092 = vmatpush.bf16.msra.mxu0 %v4079
        %4093 = vmatpush.bf16.msra.mxu0 %v4078
        %4094 = vmatpush.bf16.msra.mxu0 %v4077
        %4095 = vmatpush.bf16.msra.mxu0 %v4076
        %4096 = vmatpush.bf16.msra.mxu0 %v4075
        %4097 = vmatpush.bf16.msra.mxu0 %v4074
        %4098 = vmatmul.bf16.gmra.mxu0 %v4009
        %v4099 = vpop.f32.mrf.mxu0
        %v4100 = vadd.f32 0.0, %v4099
        %v4101 = vpop.f32.mrf.mxu0
        %v4102 = vadd.f32 0.0, %v4101
        %4103 = vmatmul.bf16.gmra.mxu0 %v4010
        %v4104 = vpop.f32.mrf.mxu0
        %v4105 = vadd.f32 0.0, %v4104
        %v4106 = vpop.f32.mrf.mxu0
        %v4107 = vadd.f32 0.0, %v4106
        %4108 = vmatmul.bf16.gmra.mxu0 %v4011
        %v4109 = vpop.f32.mrf.mxu0
        %v4110 = vadd.f32 0.0, %v4109
        %v4111 = vpop.f32.mrf.mxu0
        %v4112 = vadd.f32 0.0, %v4111
        %4113 = vmatmul.bf16.gmra.mxu0 %v4012
        %v4114 = vpop.f32.mrf.mxu0
        %v4115 = vadd.f32 0.0, %v4114
        %v4116 = vpop.f32.mrf.mxu0
        %v4117 = vadd.f32 0.0, %v4116
        %4118 = vmatmul.bf16.gmra.mxu0 %v4013
        %v4119 = vpop.f32.mrf.mxu0
        %v4120 = vadd.f32 0.0, %v4119
        %v4121 = vpop.f32.mrf.mxu0
        %v4122 = vadd.f32 0.0, %v4121
        %4123 = vmatmul.bf16.gmra.mxu0 %v4014
        %v4124 = vpop.f32.mrf.mxu0
        %v4125 = vadd.f32 0.0, %v4124
        %v4126 = vpop.f32.mrf.mxu0
        %v4127 = vadd.f32 0.0, %v4126
        %4128 = vmatmul.bf16.gmra.mxu0 %v4015
        %v4129 = vpop.f32.mrf.mxu0
        %v4130 = vadd.f32 0.0, %v4129
        %v4131 = vpop.f32.mrf.mxu0
        %v4132 = vadd.f32 0.0, %v4131
        %4133 = vmatmul.bf16.gmra.mxu0 %v4016
        %v4134 = vpop.f32.mrf.mxu0
        %v4135 = vadd.f32 0.0, %v4134
        %v4136 = vpop.f32.mrf.mxu0
        %v4137 = vadd.f32 0.0, %v4136
        %4138 = vmatmul.bf16.gmra.mxu0 %v4017
        %v4139 = vpop.f32.mrf.mxu0
        %v4140 = vadd.f32 0.0, %v4139
        %v4141 = vpop.f32.mrf.mxu0
        %v4142 = vadd.f32 0.0, %v4141
        %4143 = vmatmul.bf16.gmra.mxu0 %v4018
        %v4144 = vpop.f32.mrf.mxu0
        %v4145 = vadd.f32 0.0, %v4144
        %v4146 = vpop.f32.mrf.mxu0
        %v4147 = vadd.f32 0.0, %v4146
        %4148 = vmatmul.bf16.gmra.mxu0 %v4019
        %v4149 = vpop.f32.mrf.mxu0
        %v4150 = vadd.f32 0.0, %v4149
        %v4151 = vpop.f32.mrf.mxu0
        %v4152 = vadd.f32 0.0, %v4151
        %4153 = vmatmul.bf16.gmra.mxu0 %v4020
        %v4154 = vpop.f32.mrf.mxu0
        %v4155 = vadd.f32 0.0, %v4154
        %v4156 = vpop.f32.mrf.mxu0
        %v4157 = vadd.f32 0.0, %v4156
        %4158 = vmatmul.bf16.gmra.mxu0 %v4021
        %v4159 = vpop.f32.mrf.mxu0
        %v4160 = vadd.f32 0.0, %v4159
        %v4161 = vpop.f32.mrf.mxu0
        %v4162 = vadd.f32 0.0, %v4161
        %4163 = vmatmul.bf16.gmra.mxu0 %v4022
        %v4164 = vpop.f32.mrf.mxu0
        %v4165 = vadd.f32 0.0, %v4164
        %v4166 = vpop.f32.mrf.mxu0
        %v4167 = vadd.f32 0.0, %v4166
        %4168 = vmatmul.bf16.gmra.mxu0 %v4023
        %v4169 = vpop.f32.mrf.mxu0
        %v4170 = vadd.f32 0.0, %v4169
        %v4171 = vpop.f32.mrf.mxu0
        %v4172 = vadd.f32 0.0, %v4171
        %4173 = vmatmul.bf16.gmra.mxu0 %v4024
        %v4174 = vpop.f32.mrf.mxu0
        %v4175 = vadd.f32 0.0, %v4174
        %v4176 = vpop.f32.mrf.mxu0
        %v4177 = vadd.f32 0.0, %v4176
        %4178 = vdwg.mxu0
        %v4179 = vadd.f32 %v3945, %v4100
        %v4180 = vadd.f32 %v3946, %v4102
        %v4181 = vadd.f32 %v3947, %v4105
        %v4182 = vadd.f32 %v3948, %v4107
        %v4183 = vadd.f32 %v3949, %v4110
        %v4184 = vadd.f32 %v3950, %v4112
        %v4185 = vadd.f32 %v3951, %v4115
        %v4186 = vadd.f32 %v3952, %v4117
        %v4187 = vadd.f32 %v3953, %v4120
        %v4188 = vadd.f32 %v3954, %v4122
        %v4189 = vadd.f32 %v3955, %v4125
        %v4190 = vadd.f32 %v3956, %v4127
        %v4191 = vadd.f32 %v3957, %v4130
        %v4192 = vadd.f32 %v3958, %v4132
        %v4193 = vadd.f32 %v3959, %v4135
        %v4194 = vadd.f32 %v3960, %v4137
        %v4195 = vadd.f32 %v3961, %v4140
        %v4196 = vadd.f32 %v3962, %v4142
        %v4197 = vadd.f32 %v3963, %v4145
        %v4198 = vadd.f32 %v3964, %v4147
        %v4199 = vadd.f32 %v3965, %v4150
        %v4200 = vadd.f32 %v3966, %v4152
        %v4201 = vadd.f32 %v3967, %v4155
        %v4202 = vadd.f32 %v3968, %v4157
        %v4203 = vadd.f32 %v3969, %v4160
        %v4204 = vadd.f32 %v3970, %v4162
        %v4205 = vadd.f32 %v3971, %v4165
        %v4206 = vadd.f32 %v3972, %v4167
        %v4207 = vadd.f32 %v3973, %v4170
        %v4208 = vadd.f32 %v3974, %v4172
        %v4209 = vadd.f32 %v3975, %v4175
        %v4210 = vadd.f32 %v3976, %v4177
        %s4211 = scalar_lea.vmem [#allocation3], 48
        %v4212 = vld [vmem:[%s4211] sm:$0xff]
        %v4213 = vld [vmem:[%s4211 + $0x8] sm:$0xff]
        %v4214 = vld [vmem:[%s4211 + $0x18] sm:$0xff]
        %v4215 = vld [vmem:[%s4211 + $0x20] sm:$0xff]
        %v4216 = vld [vmem:[%s4211 + $0x30] sm:$0xff]
        %v4217 = vld [vmem:[%s4211 + $0x38] sm:$0xff]
        %v4218 = vld [vmem:[%s4211 + $0x48] sm:$0xff]
        %v4219 = vld [vmem:[%s4211 + $0x50] sm:$0xff]
        %v4220 = vld [vmem:[%s4211 + $0x60] sm:$0xff]
        %v4221 = vld [vmem:[%s4211 + $0x68] sm:$0xff]
        %v4222 = vld [vmem:[%s4211 + $0x78] sm:$0xff]
        %v4223 = vld [vmem:[%s4211 + $0x80] sm:$0xff]
        %v4224 = vld [vmem:[%s4211 + $0x90] sm:$0xff]
        %v4225 = vld [vmem:[%s4211 + $0x98] sm:$0xff]
        %v4226 = vld [vmem:[%s4211 + $0xa8] sm:$0xff]
        %v4227 = vld [vmem:[%s4211 + $0xb0] sm:$0xff]
        %v4228 = vld [vmem:[%s4211 + $0xc0] sm:$0xff]
        %v4229 = vld [vmem:[%s4211 + $0xc8] sm:$0xff]
        %v4230 = vld [vmem:[%s4211 + $0xd8] sm:$0xff]
        %v4231 = vld [vmem:[%s4211 + $0xe0] sm:$0xff]
        %v4232 = vld [vmem:[%s4211 + $0xf0] sm:$0xff]
        %v4233 = vld [vmem:[%s4211 + $0xf8] sm:$0xff]
        %v4234 = vld [vmem:[%s4211 + $0x108] sm:$0xff]
        %v4235 = vld [vmem:[%s4211 + $0x110] sm:$0xff]
        %v4236 = vld [vmem:[%s4211 + $0x120] sm:$0xff]
        %v4237 = vld [vmem:[%s4211 + $0x128] sm:$0xff]
        %v4238 = vld [vmem:[%s4211 + $0x138] sm:$0xff]
        %v4239 = vld [vmem:[%s4211 + $0x140] sm:$0xff]
        %v4240 = vld [vmem:[%s4211 + $0x150] sm:$0xff]
        %v4241 = vld [vmem:[%s4211 + $0x158] sm:$0xff]
        %v4242 = vld [vmem:[%s4211 + $0x168] sm:$0xff]
        %v4243 = vld [vmem:[%s4211 + $0x170] sm:$0xff]
        %v4244 = vpack.c.bf16 %v4213, %v4212
        %v4245 = vpack.c.bf16 %v4215, %v4214
        %v4246 = vpack.c.bf16 %v4217, %v4216
        %v4247 = vpack.c.bf16 %v4219, %v4218
        %v4248 = vpack.c.bf16 %v4221, %v4220
        %v4249 = vpack.c.bf16 %v4223, %v4222
        %v4250 = vpack.c.bf16 %v4225, %v4224
        %v4251 = vpack.c.bf16 %v4227, %v4226
        %v4252 = vpack.c.bf16 %v4229, %v4228
        %v4253 = vpack.c.bf16 %v4231, %v4230
        %v4254 = vpack.c.bf16 %v4233, %v4232
        %v4255 = vpack.c.bf16 %v4235, %v4234
        %v4256 = vpack.c.bf16 %v4237, %v4236
        %v4257 = vpack.c.bf16 %v4239, %v4238
        %v4258 = vpack.c.bf16 %v4241, %v4240
        %v4259 = vpack.c.bf16 %v4243, %v4242
        %s4260 = scalar_lea.vmem %s4, 384
        %v4261 = vld [vmem:[%s4260] sm:$0xf]
        %v4262 = vld [vmem:[%s4260 + $0x4] sm:$0xf]
        %v4263 = vld [vmem:[%s4260 + $0x8] sm:$0xf]
        %v4264 = vld [vmem:[%s4260 + $0xc] sm:$0xf]
        %v4265 = vld [vmem:[%s4260 + $0x10] sm:$0xf]
        %v4266 = vld [vmem:[%s4260 + $0x14] sm:$0xf]
        %v4267 = vld [vmem:[%s4260 + $0x18] sm:$0xf]
        %v4268 = vld [vmem:[%s4260 + $0x1c] sm:$0xf]
        %v4269 = vld [vmem:[%s4260 + $0x20] sm:$0xf]
        %v4270 = vld [vmem:[%s4260 + $0x24] sm:$0xf]
        %v4271 = vld [vmem:[%s4260 + $0x28] sm:$0xf]
        %v4272 = vld [vmem:[%s4260 + $0x2c] sm:$0xf]
        %v4273 = vld [vmem:[%s4260 + $0x30] sm:$0xf]
        %v4274 = vld [vmem:[%s4260 + $0x34] sm:$0xf]
        %v4275 = vld [vmem:[%s4260 + $0x38] sm:$0xf]
        %v4276 = vld [vmem:[%s4260 + $0x3c] sm:$0xf]
        %v4293 = vunpack.c.l.b16 %v4261
        %v4294 = vunpack.c.l.b16 %v4262
        %v4295 = vunpack.c.l.b16 %v4263
        %v4296 = vunpack.c.l.b16 %v4264
        %v4297 = vunpack.c.l.b16 %v4265
        %v4298 = vunpack.c.l.b16 %v4266
        %v4299 = vunpack.c.l.b16 %v4267
        %v4300 = vunpack.c.l.b16 %v4268
        %v4301 = vunpack.c.l.b16 %v4269
        %v4302 = vunpack.c.l.b16 %v4270
        %v4303 = vunpack.c.l.b16 %v4271
        %v4304 = vunpack.c.l.b16 %v4272
        %v4305 = vunpack.c.l.b16 %v4273
        %v4306 = vunpack.c.l.b16 %v4274
        %v4307 = vunpack.c.l.b16 %v4275
        %v4308 = vunpack.c.l.b16 %v4276
        %v4309 = vpack.c.b16 %v4294, %v4293
        %v4310 = vpack.c.b16 %v4296, %v4295
        %v4311 = vpack.c.b16 %v4298, %v4297
        %v4312 = vpack.c.b16 %v4300, %v4299
        %v4313 = vpack.c.b16 %v4302, %v4301
        %v4314 = vpack.c.b16 %v4304, %v4303
        %v4315 = vpack.c.b16 %v4306, %v4305
        %v4316 = vpack.c.b16 %v4308, %v4307
        %4325 = vmatpush.bf16.msra.mxu0 %v4316
        %4326 = vmatpush.bf16.msra.mxu0 %v4315
        %4327 = vmatpush.bf16.msra.mxu0 %v4314
        %4328 = vmatpush.bf16.msra.mxu0 %v4313
        %4329 = vmatpush.bf16.msra.mxu0 %v4312
        %4330 = vmatpush.bf16.msra.mxu0 %v4311
        %4331 = vmatpush.bf16.msra.mxu0 %v4310
        %4332 = vmatpush.bf16.msra.mxu0 %v4309
        %4333 = vmatmul.bf16.gmra.mxu0 %v4244
        %v4334 = vpop.f32.mrf.mxu0
        %v4335 = vadd.f32 0.0, %v4334
        %v4336 = vpop.f32.mrf.mxu0
        %v4337 = vadd.f32 0.0, %v4336
        %4338 = vmatmul.bf16.gmra.mxu0 %v4245
        %v4339 = vpop.f32.mrf.mxu0
        %v4340 = vadd.f32 0.0, %v4339
        %v4341 = vpop.f32.mrf.mxu0
        %v4342 = vadd.f32 0.0, %v4341
        %4343 = vmatmul.bf16.gmra.mxu0 %v4246
        %v4344 = vpop.f32.mrf.mxu0
        %v4345 = vadd.f32 0.0, %v4344
        %v4346 = vpop.f32.mrf.mxu0
        %v4347 = vadd.f32 0.0, %v4346
        %4348 = vmatmul.bf16.gmra.mxu0 %v4247
        %v4349 = vpop.f32.mrf.mxu0
        %v4350 = vadd.f32 0.0, %v4349
        %v4351 = vpop.f32.mrf.mxu0
        %v4352 = vadd.f32 0.0, %v4351
        %4353 = vmatmul.bf16.gmra.mxu0 %v4248
        %v4354 = vpop.f32.mrf.mxu0
        %v4355 = vadd.f32 0.0, %v4354
        %v4356 = vpop.f32.mrf.mxu0
        %v4357 = vadd.f32 0.0, %v4356
        %4358 = vmatmul.bf16.gmra.mxu0 %v4249
        %v4359 = vpop.f32.mrf.mxu0
        %v4360 = vadd.f32 0.0, %v4359
        %v4361 = vpop.f32.mrf.mxu0
        %v4362 = vadd.f32 0.0, %v4361
        %4363 = vmatmul.bf16.gmra.mxu0 %v4250
        %v4364 = vpop.f32.mrf.mxu0
        %v4365 = vadd.f32 0.0, %v4364
        %v4366 = vpop.f32.mrf.mxu0
        %v4367 = vadd.f32 0.0, %v4366
        %4368 = vmatmul.bf16.gmra.mxu0 %v4251
        %v4369 = vpop.f32.mrf.mxu0
        %v4370 = vadd.f32 0.0, %v4369
        %v4371 = vpop.f32.mrf.mxu0
        %v4372 = vadd.f32 0.0, %v4371
        %4373 = vmatmul.bf16.gmra.mxu0 %v4252
        %v4374 = vpop.f32.mrf.mxu0
        %v4375 = vadd.f32 0.0, %v4374
        %v4376 = vpop.f32.mrf.mxu0
        %v4377 = vadd.f32 0.0, %v4376
        %4378 = vmatmul.bf16.gmra.mxu0 %v4253
        %v4379 = vpop.f32.mrf.mxu0
        %v4380 = vadd.f32 0.0, %v4379
        %v4381 = vpop.f32.mrf.mxu0
        %v4382 = vadd.f32 0.0, %v4381
        %4383 = vmatmul.bf16.gmra.mxu0 %v4254
        %v4384 = vpop.f32.mrf.mxu0
        %v4385 = vadd.f32 0.0, %v4384
        %v4386 = vpop.f32.mrf.mxu0
        %v4387 = vadd.f32 0.0, %v4386
        %4388 = vmatmul.bf16.gmra.mxu0 %v4255
        %v4389 = vpop.f32.mrf.mxu0
        %v4390 = vadd.f32 0.0, %v4389
        %v4391 = vpop.f32.mrf.mxu0
        %v4392 = vadd.f32 0.0, %v4391
        %4393 = vmatmul.bf16.gmra.mxu0 %v4256
        %v4394 = vpop.f32.mrf.mxu0
        %v4395 = vadd.f32 0.0, %v4394
        %v4396 = vpop.f32.mrf.mxu0
        %v4397 = vadd.f32 0.0, %v4396
        %4398 = vmatmul.bf16.gmra.mxu0 %v4257
        %v4399 = vpop.f32.mrf.mxu0
        %v4400 = vadd.f32 0.0, %v4399
        %v4401 = vpop.f32.mrf.mxu0
        %v4402 = vadd.f32 0.0, %v4401
        %4403 = vmatmul.bf16.gmra.mxu0 %v4258
        %v4404 = vpop.f32.mrf.mxu0
        %v4405 = vadd.f32 0.0, %v4404
        %v4406 = vpop.f32.mrf.mxu0
        %v4407 = vadd.f32 0.0, %v4406
        %4408 = vmatmul.bf16.gmra.mxu0 %v4259
        %v4409 = vpop.f32.mrf.mxu0
        %v4410 = vadd.f32 0.0, %v4409
        %v4411 = vpop.f32.mrf.mxu0
        %v4412 = vadd.f32 0.0, %v4411
        %4413 = vdwg.mxu0
        %v4414 = vadd.f32 %v4179, %v4335
        %v4415 = vadd.f32 %v4180, %v4337
        %v4416 = vadd.f32 %v4181, %v4340
        %v4417 = vadd.f32 %v4182, %v4342
        %v4418 = vadd.f32 %v4183, %v4345
        %v4419 = vadd.f32 %v4184, %v4347
        %v4420 = vadd.f32 %v4185, %v4350
        %v4421 = vadd.f32 %v4186, %v4352
        %v4422 = vadd.f32 %v4187, %v4355
        %v4423 = vadd.f32 %v4188, %v4357
        %v4424 = vadd.f32 %v4189, %v4360
        %v4425 = vadd.f32 %v4190, %v4362
        %v4426 = vadd.f32 %v4191, %v4365
        %v4427 = vadd.f32 %v4192, %v4367
        %v4428 = vadd.f32 %v4193, %v4370
        %v4429 = vadd.f32 %v4194, %v4372
        %v4430 = vadd.f32 %v4195, %v4375
        %v4431 = vadd.f32 %v4196, %v4377
        %v4432 = vadd.f32 %v4197, %v4380
        %v4433 = vadd.f32 %v4198, %v4382
        %v4434 = vadd.f32 %v4199, %v4385
        %v4435 = vadd.f32 %v4200, %v4387
        %v4436 = vadd.f32 %v4201, %v4390
        %v4437 = vadd.f32 %v4202, %v4392
        %v4438 = vadd.f32 %v4203, %v4395
        %v4439 = vadd.f32 %v4204, %v4397
        %v4440 = vadd.f32 %v4205, %v4400
        %v4441 = vadd.f32 %v4206, %v4402
        %v4442 = vadd.f32 %v4207, %v4405
        %v4443 = vadd.f32 %v4208, %v4407
        %v4444 = vadd.f32 %v4209, %v4410
        %v4445 = vadd.f32 %v4210, %v4412
        %v4446 = vld [vmem:[%s4211 + $0x1] sm:$0xff]
        %v4447 = vld [vmem:[%s4211 + $0x9] sm:$0xff]
        %v4448 = vld [vmem:[%s4211 + $0x19] sm:$0xff]
        %v4449 = vld [vmem:[%s4211 + $0x21] sm:$0xff]
        %v4450 = vld [vmem:[%s4211 + $0x31] sm:$0xff]
        %v4451 = vld [vmem:[%s4211 + $0x39] sm:$0xff]
        %v4452 = vld [vmem:[%s4211 + $0x49] sm:$0xff]
        %v4453 = vld [vmem:[%s4211 + $0x51] sm:$0xff]
        %v4454 = vld [vmem:[%s4211 + $0x61] sm:$0xff]
        %v4455 = vld [vmem:[%s4211 + $0x69] sm:$0xff]
        %v4456 = vld [vmem:[%s4211 + $0x79] sm:$0xff]
        %v4457 = vld [vmem:[%s4211 + $0x81] sm:$0xff]
        %v4458 = vld [vmem:[%s4211 + $0x91] sm:$0xff]
        %v4459 = vld [vmem:[%s4211 + $0x99] sm:$0xff]
        %v4460 = vld [vmem:[%s4211 + $0xa9] sm:$0xff]
        %v4461 = vld [vmem:[%s4211 + $0xb1] sm:$0xff]
        %v4462 = vld [vmem:[%s4211 + $0xc1] sm:$0xff]
        %v4463 = vld [vmem:[%s4211 + $0xc9] sm:$0xff]
        %v4464 = vld [vmem:[%s4211 + $0xd9] sm:$0xff]
        %v4465 = vld [vmem:[%s4211 + $0xe1] sm:$0xff]
        %v4466 = vld [vmem:[%s4211 + $0xf1] sm:$0xff]
        %v4467 = vld [vmem:[%s4211 + $0xf9] sm:$0xff]
        %v4468 = vld [vmem:[%s4211 + $0x109] sm:$0xff]
        %v4469 = vld [vmem:[%s4211 + $0x111] sm:$0xff]
        %v4470 = vld [vmem:[%s4211 + $0x121] sm:$0xff]
        %v4471 = vld [vmem:[%s4211 + $0x129] sm:$0xff]
        %v4472 = vld [vmem:[%s4211 + $0x139] sm:$0xff]
        %v4473 = vld [vmem:[%s4211 + $0x141] sm:$0xff]
        %v4474 = vld [vmem:[%s4211 + $0x151] sm:$0xff]
        %v4475 = vld [vmem:[%s4211 + $0x159] sm:$0xff]
        %v4476 = vld [vmem:[%s4211 + $0x169] sm:$0xff]
        %v4477 = vld [vmem:[%s4211 + $0x171] sm:$0xff]
        %v4478 = vpack.c.bf16 %v4447, %v4446
        %v4479 = vpack.c.bf16 %v4449, %v4448
        %v4480 = vpack.c.bf16 %v4451, %v4450
        %v4481 = vpack.c.bf16 %v4453, %v4452
        %v4482 = vpack.c.bf16 %v4455, %v4454
        %v4483 = vpack.c.bf16 %v4457, %v4456
        %v4484 = vpack.c.bf16 %v4459, %v4458
        %v4485 = vpack.c.bf16 %v4461, %v4460
        %v4486 = vpack.c.bf16 %v4463, %v4462
        %v4487 = vpack.c.bf16 %v4465, %v4464
        %v4488 = vpack.c.bf16 %v4467, %v4466
        %v4489 = vpack.c.bf16 %v4469, %v4468
        %v4490 = vpack.c.bf16 %v4471, %v4470
        %v4491 = vpack.c.bf16 %v4473, %v4472
        %v4492 = vpack.c.bf16 %v4475, %v4474
        %v4493 = vpack.c.bf16 %v4477, %v4476
        %s4494 = scalar_lea.vmem %s4, 448
        %v4495 = vld [vmem:[%s4494] sm:$0xf]
        %v4496 = vld [vmem:[%s4494 + $0x4] sm:$0xf]
        %v4497 = vld [vmem:[%s4494 + $0x8] sm:$0xf]
        %v4498 = vld [vmem:[%s4494 + $0xc] sm:$0xf]
        %v4499 = vld [vmem:[%s4494 + $0x10] sm:$0xf]
        %v4500 = vld [vmem:[%s4494 + $0x14] sm:$0xf]
        %v4501 = vld [vmem:[%s4494 + $0x18] sm:$0xf]
        %v4502 = vld [vmem:[%s4494 + $0x1c] sm:$0xf]
        %v4503 = vld [vmem:[%s4494 + $0x20] sm:$0xf]
        %v4504 = vld [vmem:[%s4494 + $0x24] sm:$0xf]
        %v4505 = vld [vmem:[%s4494 + $0x28] sm:$0xf]
        %v4506 = vld [vmem:[%s4494 + $0x2c] sm:$0xf]
        %v4507 = vld [vmem:[%s4494 + $0x30] sm:$0xf]
        %v4508 = vld [vmem:[%s4494 + $0x34] sm:$0xf]
        %v4509 = vld [vmem:[%s4494 + $0x38] sm:$0xf]
        %v4510 = vld [vmem:[%s4494 + $0x3c] sm:$0xf]
        %v4527 = vunpack.c.l.b16 %v4495
        %v4528 = vunpack.c.l.b16 %v4496
        %v4529 = vunpack.c.l.b16 %v4497
        %v4530 = vunpack.c.l.b16 %v4498
        %v4531 = vunpack.c.l.b16 %v4499
        %v4532 = vunpack.c.l.b16 %v4500
        %v4533 = vunpack.c.l.b16 %v4501
        %v4534 = vunpack.c.l.b16 %v4502
        %v4535 = vunpack.c.l.b16 %v4503
        %v4536 = vunpack.c.l.b16 %v4504
        %v4537 = vunpack.c.l.b16 %v4505
        %v4538 = vunpack.c.l.b16 %v4506
        %v4539 = vunpack.c.l.b16 %v4507
        %v4540 = vunpack.c.l.b16 %v4508
        %v4541 = vunpack.c.l.b16 %v4509
        %v4542 = vunpack.c.l.b16 %v4510
        %v4543 = vpack.c.b16 %v4528, %v4527
        %v4544 = vpack.c.b16 %v4530, %v4529
        %v4545 = vpack.c.b16 %v4532, %v4531
        %v4546 = vpack.c.b16 %v4534, %v4533
        %v4547 = vpack.c.b16 %v4536, %v4535
        %v4548 = vpack.c.b16 %v4538, %v4537
        %v4549 = vpack.c.b16 %v4540, %v4539
        %v4550 = vpack.c.b16 %v4542, %v4541
        %4559 = vmatpush.bf16.msra.mxu0 %v4550
        %4560 = vmatpush.bf16.msra.mxu0 %v4549
        %4561 = vmatpush.bf16.msra.mxu0 %v4548
        %4562 = vmatpush.bf16.msra.mxu0 %v4547
        %4563 = vmatpush.bf16.msra.mxu0 %v4546
        %4564 = vmatpush.bf16.msra.mxu0 %v4545
        %4565 = vmatpush.bf16.msra.mxu0 %v4544
        %4566 = vmatpush.bf16.msra.mxu0 %v4543
        %4567 = vmatmul.bf16.gmra.mxu0 %v4478
        %v4568 = vpop.f32.mrf.mxu0
        %v4569 = vadd.f32 0.0, %v4568
        %v4570 = vpop.f32.mrf.mxu0
        %v4571 = vadd.f32 0.0, %v4570
        %4572 = vmatmul.bf16.gmra.mxu0 %v4479
        %v4573 = vpop.f32.mrf.mxu0
        %v4574 = vadd.f32 0.0, %v4573
        %v4575 = vpop.f32.mrf.mxu0
        %v4576 = vadd.f32 0.0, %v4575
        %4577 = vmatmul.bf16.gmra.mxu0 %v4480
        %v4578 = vpop.f32.mrf.mxu0
        %v4579 = vadd.f32 0.0, %v4578
        %v4580 = vpop.f32.mrf.mxu0
        %v4581 = vadd.f32 0.0, %v4580
        %4582 = vmatmul.bf16.gmra.mxu0 %v4481
        %v4583 = vpop.f32.mrf.mxu0
        %v4584 = vadd.f32 0.0, %v4583
        %v4585 = vpop.f32.mrf.mxu0
        %v4586 = vadd.f32 0.0, %v4585
        %4587 = vmatmul.bf16.gmra.mxu0 %v4482
        %v4588 = vpop.f32.mrf.mxu0
        %v4589 = vadd.f32 0.0, %v4588
        %v4590 = vpop.f32.mrf.mxu0
        %v4591 = vadd.f32 0.0, %v4590
        %4592 = vmatmul.bf16.gmra.mxu0 %v4483
        %v4593 = vpop.f32.mrf.mxu0
        %v4594 = vadd.f32 0.0, %v4593
        %v4595 = vpop.f32.mrf.mxu0
        %v4596 = vadd.f32 0.0, %v4595
        %4597 = vmatmul.bf16.gmra.mxu0 %v4484
        %v4598 = vpop.f32.mrf.mxu0
        %v4599 = vadd.f32 0.0, %v4598
        %v4600 = vpop.f32.mrf.mxu0
        %v4601 = vadd.f32 0.0, %v4600
        %4602 = vmatmul.bf16.gmra.mxu0 %v4485
        %v4603 = vpop.f32.mrf.mxu0
        %v4604 = vadd.f32 0.0, %v4603
        %v4605 = vpop.f32.mrf.mxu0
        %v4606 = vadd.f32 0.0, %v4605
        %4607 = vmatmul.bf16.gmra.mxu0 %v4486
        %v4608 = vpop.f32.mrf.mxu0
        %v4609 = vadd.f32 0.0, %v4608
        %v4610 = vpop.f32.mrf.mxu0
        %v4611 = vadd.f32 0.0, %v4610
        %4612 = vmatmul.bf16.gmra.mxu0 %v4487
        %v4613 = vpop.f32.mrf.mxu0
        %v4614 = vadd.f32 0.0, %v4613
        %v4615 = vpop.f32.mrf.mxu0
        %v4616 = vadd.f32 0.0, %v4615
        %4617 = vmatmul.bf16.gmra.mxu0 %v4488
        %v4618 = vpop.f32.mrf.mxu0
        %v4619 = vadd.f32 0.0, %v4618
        %v4620 = vpop.f32.mrf.mxu0
        %v4621 = vadd.f32 0.0, %v4620
        %4622 = vmatmul.bf16.gmra.mxu0 %v4489
        %v4623 = vpop.f32.mrf.mxu0
        %v4624 = vadd.f32 0.0, %v4623
        %v4625 = vpop.f32.mrf.mxu0
        %v4626 = vadd.f32 0.0, %v4625
        %4627 = vmatmul.bf16.gmra.mxu0 %v4490
        %v4628 = vpop.f32.mrf.mxu0
        %v4629 = vadd.f32 0.0, %v4628
        %v4630 = vpop.f32.mrf.mxu0
        %v4631 = vadd.f32 0.0, %v4630
        %4632 = vmatmul.bf16.gmra.mxu0 %v4491
        %v4633 = vpop.f32.mrf.mxu0
        %v4634 = vadd.f32 0.0, %v4633
        %v4635 = vpop.f32.mrf.mxu0
        %v4636 = vadd.f32 0.0, %v4635
        %4637 = vmatmul.bf16.gmra.mxu0 %v4492
        %v4638 = vpop.f32.mrf.mxu0
        %v4639 = vadd.f32 0.0, %v4638
        %v4640 = vpop.f32.mrf.mxu0
        %v4641 = vadd.f32 0.0, %v4640
        %4642 = vmatmul.bf16.gmra.mxu0 %v4493
        %v4643 = vpop.f32.mrf.mxu0
        %v4644 = vadd.f32 0.0, %v4643
        %v4645 = vpop.f32.mrf.mxu0
        %v4646 = vadd.f32 0.0, %v4645
        %4647 = vdwg.mxu0
        %v4648 = vadd.f32 %v4414, %v4569
        %v4649 = vadd.f32 %v4415, %v4571
        %v4650 = vadd.f32 %v4416, %v4574
        %v4651 = vadd.f32 %v4417, %v4576
        %v4652 = vadd.f32 %v4418, %v4579
        %v4653 = vadd.f32 %v4419, %v4581
        %v4654 = vadd.f32 %v4420, %v4584
        %v4655 = vadd.f32 %v4421, %v4586
        %v4656 = vadd.f32 %v4422, %v4589
        %v4657 = vadd.f32 %v4423, %v4591
        %v4658 = vadd.f32 %v4424, %v4594
        %v4659 = vadd.f32 %v4425, %v4596
        %v4660 = vadd.f32 %v4426, %v4599
        %v4661 = vadd.f32 %v4427, %v4601
        %v4662 = vadd.f32 %v4428, %v4604
        %v4663 = vadd.f32 %v4429, %v4606
        %v4664 = vadd.f32 %v4430, %v4609
        %v4665 = vadd.f32 %v4431, %v4611
        %v4666 = vadd.f32 %v4432, %v4614
        %v4667 = vadd.f32 %v4433, %v4616
        %v4668 = vadd.f32 %v4434, %v4619
        %v4669 = vadd.f32 %v4435, %v4621
        %v4670 = vadd.f32 %v4436, %v4624
        %v4671 = vadd.f32 %v4437, %v4626
        %v4672 = vadd.f32 %v4438, %v4629
        %v4673 = vadd.f32 %v4439, %v4631
        %v4674 = vadd.f32 %v4440, %v4634
        %v4675 = vadd.f32 %v4441, %v4636
        %v4676 = vadd.f32 %v4442, %v4639
        %v4677 = vadd.f32 %v4443, %v4641
        %v4678 = vadd.f32 %v4444, %v4644
        %v4679 = vadd.f32 %v4445, %v4646
        %v4680 = vld [vmem:[%s4211 + $0x2] sm:$0xff]
        %v4681 = vld [vmem:[%s4211 + $0xa] sm:$0xff]
        %v4682 = vld [vmem:[%s4211 + $0x1a] sm:$0xff]
        %v4683 = vld [vmem:[%s4211 + $0x22] sm:$0xff]
        %v4684 = vld [vmem:[%s4211 + $0x32] sm:$0xff]
        %v4685 = vld [vmem:[%s4211 + $0x3a] sm:$0xff]
        %v4686 = vld [vmem:[%s4211 + $0x4a] sm:$0xff]
        %v4687 = vld [vmem:[%s4211 + $0x52] sm:$0xff]
        %v4688 = vld [vmem:[%s4211 + $0x62] sm:$0xff]
        %v4689 = vld [vmem:[%s4211 + $0x6a] sm:$0xff]
        %v4690 = vld [vmem:[%s4211 + $0x7a] sm:$0xff]
        %v4691 = vld [vmem:[%s4211 + $0x82] sm:$0xff]
        %v4692 = vld [vmem:[%s4211 + $0x92] sm:$0xff]
        %v4693 = vld [vmem:[%s4211 + $0x9a] sm:$0xff]
        %v4694 = vld [vmem:[%s4211 + $0xaa] sm:$0xff]
        %v4695 = vld [vmem:[%s4211 + $0xb2] sm:$0xff]
        %v4696 = vld [vmem:[%s4211 + $0xc2] sm:$0xff]
        %v4697 = vld [vmem:[%s4211 + $0xca] sm:$0xff]
        %v4698 = vld [vmem:[%s4211 + $0xda] sm:$0xff]
        %v4699 = vld [vmem:[%s4211 + $0xe2] sm:$0xff]
        %v4700 = vld [vmem:[%s4211 + $0xf2] sm:$0xff]
        %v4701 = vld [vmem:[%s4211 + $0xfa] sm:$0xff]
        %v4702 = vld [vmem:[%s4211 + $0x10a] sm:$0xff]
        %v4703 = vld [vmem:[%s4211 + $0x112] sm:$0xff]
        %v4704 = vld [vmem:[%s4211 + $0x122] sm:$0xff]
        %v4705 = vld [vmem:[%s4211 + $0x12a] sm:$0xff]
        %v4706 = vld [vmem:[%s4211 + $0x13a] sm:$0xff]
        %v4707 = vld [vmem:[%s4211 + $0x142] sm:$0xff]
        %v4708 = vld [vmem:[%s4211 + $0x152] sm:$0xff]
        %v4709 = vld [vmem:[%s4211 + $0x15a] sm:$0xff]
        %v4710 = vld [vmem:[%s4211 + $0x16a] sm:$0xff]
        %v4711 = vld [vmem:[%s4211 + $0x172] sm:$0xff]
        %v4712 = vpack.c.bf16 %v4681, %v4680
        %v4713 = vpack.c.bf16 %v4683, %v4682
        %v4714 = vpack.c.bf16 %v4685, %v4684
        %v4715 = vpack.c.bf16 %v4687, %v4686
        %v4716 = vpack.c.bf16 %v4689, %v4688
        %v4717 = vpack.c.bf16 %v4691, %v4690
        %v4718 = vpack.c.bf16 %v4693, %v4692
        %v4719 = vpack.c.bf16 %v4695, %v4694
        %v4720 = vpack.c.bf16 %v4697, %v4696
        %v4721 = vpack.c.bf16 %v4699, %v4698
        %v4722 = vpack.c.bf16 %v4701, %v4700
        %v4723 = vpack.c.bf16 %v4703, %v4702
        %v4724 = vpack.c.bf16 %v4705, %v4704
        %v4725 = vpack.c.bf16 %v4707, %v4706
        %v4726 = vpack.c.bf16 %v4709, %v4708
        %v4727 = vpack.c.bf16 %v4711, %v4710
        %s4728 = scalar_lea.vmem %s4, 512
        %v4729 = vld [vmem:[%s4728] sm:$0xf]
        %v4730 = vld [vmem:[%s4728 + $0x4] sm:$0xf]
        %v4731 = vld [vmem:[%s4728 + $0x8] sm:$0xf]
        %v4732 = vld [vmem:[%s4728 + $0xc] sm:$0xf]
        %v4733 = vld [vmem:[%s4728 + $0x10] sm:$0xf]
        %v4734 = vld [vmem:[%s4728 + $0x14] sm:$0xf]
        %v4735 = vld [vmem:[%s4728 + $0x18] sm:$0xf]
        %v4736 = vld [vmem:[%s4728 + $0x1c] sm:$0xf]
        %v4737 = vld [vmem:[%s4728 + $0x20] sm:$0xf]
        %v4738 = vld [vmem:[%s4728 + $0x24] sm:$0xf]
        %v4739 = vld [vmem:[%s4728 + $0x28] sm:$0xf]
        %v4740 = vld [vmem:[%s4728 + $0x2c] sm:$0xf]
        %v4741 = vld [vmem:[%s4728 + $0x30] sm:$0xf]
        %v4742 = vld [vmem:[%s4728 + $0x34] sm:$0xf]
        %v4743 = vld [vmem:[%s4728 + $0x38] sm:$0xf]
        %v4744 = vld [vmem:[%s4728 + $0x3c] sm:$0xf]
        %v4761 = vunpack.c.l.b16 %v4729
        %v4762 = vunpack.c.l.b16 %v4730
        %v4763 = vunpack.c.l.b16 %v4731
        %v4764 = vunpack.c.l.b16 %v4732
        %v4765 = vunpack.c.l.b16 %v4733
        %v4766 = vunpack.c.l.b16 %v4734
        %v4767 = vunpack.c.l.b16 %v4735
        %v4768 = vunpack.c.l.b16 %v4736
        %v4769 = vunpack.c.l.b16 %v4737
        %v4770 = vunpack.c.l.b16 %v4738
        %v4771 = vunpack.c.l.b16 %v4739
        %v4772 = vunpack.c.l.b16 %v4740
        %v4773 = vunpack.c.l.b16 %v4741
        %v4774 = vunpack.c.l.b16 %v4742
        %v4775 = vunpack.c.l.b16 %v4743
        %v4776 = vunpack.c.l.b16 %v4744
        %v4777 = vpack.c.b16 %v4762, %v4761
        %v4778 = vpack.c.b16 %v4764, %v4763
        %v4779 = vpack.c.b16 %v4766, %v4765
        %v4780 = vpack.c.b16 %v4768, %v4767
        %v4781 = vpack.c.b16 %v4770, %v4769
        %v4782 = vpack.c.b16 %v4772, %v4771
        %v4783 = vpack.c.b16 %v4774, %v4773
        %v4784 = vpack.c.b16 %v4776, %v4775
        %4793 = vmatpush.bf16.msra.mxu0 %v4784
        %4794 = vmatpush.bf16.msra.mxu0 %v4783
        %4795 = vmatpush.bf16.msra.mxu0 %v4782
        %4796 = vmatpush.bf16.msra.mxu0 %v4781
        %4797 = vmatpush.bf16.msra.mxu0 %v4780
        %4798 = vmatpush.bf16.msra.mxu0 %v4779
        %4799 = vmatpush.bf16.msra.mxu0 %v4778
        %4800 = vmatpush.bf16.msra.mxu0 %v4777
        %4801 = vmatmul.bf16.gmra.mxu0 %v4712
        %v4802 = vpop.f32.mrf.mxu0
        %v4803 = vadd.f32 0.0, %v4802
        %v4804 = vpop.f32.mrf.mxu0
        %v4805 = vadd.f32 0.0, %v4804
        %4806 = vmatmul.bf16.gmra.mxu0 %v4713
        %v4807 = vpop.f32.mrf.mxu0
        %v4808 = vadd.f32 0.0, %v4807
        %v4809 = vpop.f32.mrf.mxu0
        %v4810 = vadd.f32 0.0, %v4809
        %4811 = vmatmul.bf16.gmra.mxu0 %v4714
        %v4812 = vpop.f32.mrf.mxu0
        %v4813 = vadd.f32 0.0, %v4812
        %v4814 = vpop.f32.mrf.mxu0
        %v4815 = vadd.f32 0.0, %v4814
        %4816 = vmatmul.bf16.gmra.mxu0 %v4715
        %v4817 = vpop.f32.mrf.mxu0
        %v4818 = vadd.f32 0.0, %v4817
        %v4819 = vpop.f32.mrf.mxu0
        %v4820 = vadd.f32 0.0, %v4819
        %4821 = vmatmul.bf16.gmra.mxu0 %v4716
        %v4822 = vpop.f32.mrf.mxu0
        %v4823 = vadd.f32 0.0, %v4822
        %v4824 = vpop.f32.mrf.mxu0
        %v4825 = vadd.f32 0.0, %v4824
        %4826 = vmatmul.bf16.gmra.mxu0 %v4717
        %v4827 = vpop.f32.mrf.mxu0
        %v4828 = vadd.f32 0.0, %v4827
        %v4829 = vpop.f32.mrf.mxu0
        %v4830 = vadd.f32 0.0, %v4829
        %4831 = vmatmul.bf16.gmra.mxu0 %v4718
        %v4832 = vpop.f32.mrf.mxu0
        %v4833 = vadd.f32 0.0, %v4832
        %v4834 = vpop.f32.mrf.mxu0
        %v4835 = vadd.f32 0.0, %v4834
        %4836 = vmatmul.bf16.gmra.mxu0 %v4719
        %v4837 = vpop.f32.mrf.mxu0
        %v4838 = vadd.f32 0.0, %v4837
        %v4839 = vpop.f32.mrf.mxu0
        %v4840 = vadd.f32 0.0, %v4839
        %4841 = vmatmul.bf16.gmra.mxu0 %v4720
        %v4842 = vpop.f32.mrf.mxu0
        %v4843 = vadd.f32 0.0, %v4842
        %v4844 = vpop.f32.mrf.mxu0
        %v4845 = vadd.f32 0.0, %v4844
        %4846 = vmatmul.bf16.gmra.mxu0 %v4721
        %v4847 = vpop.f32.mrf.mxu0
        %v4848 = vadd.f32 0.0, %v4847
        %v4849 = vpop.f32.mrf.mxu0
        %v4850 = vadd.f32 0.0, %v4849
        %4851 = vmatmul.bf16.gmra.mxu0 %v4722
        %v4852 = vpop.f32.mrf.mxu0
        %v4853 = vadd.f32 0.0, %v4852
        %v4854 = vpop.f32.mrf.mxu0
        %v4855 = vadd.f32 0.0, %v4854
        %4856 = vmatmul.bf16.gmra.mxu0 %v4723
        %v4857 = vpop.f32.mrf.mxu0
        %v4858 = vadd.f32 0.0, %v4857
        %v4859 = vpop.f32.mrf.mxu0
        %v4860 = vadd.f32 0.0, %v4859
        %4861 = vmatmul.bf16.gmra.mxu0 %v4724
        %v4862 = vpop.f32.mrf.mxu0
        %v4863 = vadd.f32 0.0, %v4862
        %v4864 = vpop.f32.mrf.mxu0
        %v4865 = vadd.f32 0.0, %v4864
        %4866 = vmatmul.bf16.gmra.mxu0 %v4725
        %v4867 = vpop.f32.mrf.mxu0
        %v4868 = vadd.f32 0.0, %v4867
        %v4869 = vpop.f32.mrf.mxu0
        %v4870 = vadd.f32 0.0, %v4869
        %4871 = vmatmul.bf16.gmra.mxu0 %v4726
        %v4872 = vpop.f32.mrf.mxu0
        %v4873 = vadd.f32 0.0, %v4872
        %v4874 = vpop.f32.mrf.mxu0
        %v4875 = vadd.f32 0.0, %v4874
        %4876 = vmatmul.bf16.gmra.mxu0 %v4727
        %v4877 = vpop.f32.mrf.mxu0
        %v4878 = vadd.f32 0.0, %v4877
        %v4879 = vpop.f32.mrf.mxu0
        %v4880 = vadd.f32 0.0, %v4879
        %4881 = vdwg.mxu0
        %v4882 = vadd.f32 %v4648, %v4803
        %v4883 = vadd.f32 %v4649, %v4805
        %v4884 = vadd.f32 %v4650, %v4808
        %v4885 = vadd.f32 %v4651, %v4810
        %v4886 = vadd.f32 %v4652, %v4813
        %v4887 = vadd.f32 %v4653, %v4815
        %v4888 = vadd.f32 %v4654, %v4818
        %v4889 = vadd.f32 %v4655, %v4820
        %v4890 = vadd.f32 %v4656, %v4823
        %v4891 = vadd.f32 %v4657, %v4825
        %v4892 = vadd.f32 %v4658, %v4828
        %v4893 = vadd.f32 %v4659, %v4830
        %v4894 = vadd.f32 %v4660, %v4833
        %v4895 = vadd.f32 %v4661, %v4835
        %v4896 = vadd.f32 %v4662, %v4838
        %v4897 = vadd.f32 %v4663, %v4840
        %v4898 = vadd.f32 %v4664, %v4843
        %v4899 = vadd.f32 %v4665, %v4845
        %v4900 = vadd.f32 %v4666, %v4848
        %v4901 = vadd.f32 %v4667, %v4850
        %v4902 = vadd.f32 %v4668, %v4853
        %v4903 = vadd.f32 %v4669, %v4855
        %v4904 = vadd.f32 %v4670, %v4858
        %v4905 = vadd.f32 %v4671, %v4860
        %v4906 = vadd.f32 %v4672, %v4863
        %v4907 = vadd.f32 %v4673, %v4865
        %v4908 = vadd.f32 %v4674, %v4868
        %v4909 = vadd.f32 %v4675, %v4870
        %v4910 = vadd.f32 %v4676, %v4873
        %v4911 = vadd.f32 %v4677, %v4875
        %v4912 = vadd.f32 %v4678, %v4878
        %v4913 = vadd.f32 %v4679, %v4880
        %v4914 = vld [vmem:[%s5] sm:$0x1]
        %v4915 = vld [vmem:[%s6] sm:$0x1]
        %v4916 = vadd.f32 %v4882, %v4883
        %v4917 = vadd.f32 %v4916, %v4884
        %v4918 = vadd.f32 %v4917, %v4885
        %v4919 = vadd.f32 %v4918, %v4886
        %v4920 = vadd.f32 %v4919, %v4887
        %v4921 = vadd.f32 %v4920, %v4888
        %v4922 = vadd.f32 %v4921, %v4889
        %v4923 = vadd.f32 %v4922, %v4890
        %v4924 = vadd.f32 %v4923, %v4891
        %v4925 = vadd.f32 %v4924, %v4892
        %v4926 = vadd.f32 %v4925, %v4893
        %v4927 = vadd.f32 %v4926, %v4894
        %v4928 = vadd.f32 %v4927, %v4895
        %v4929 = vadd.f32 %v4928, %v4896
        %v4930 = vadd.f32 %v4929, %v4897
        %v4931 = vadd.f32 %v4930, %v4898
        %v4932 = vadd.f32 %v4931, %v4899
        %v4933 = vadd.f32 %v4932, %v4900
        %v4934 = vadd.f32 %v4933, %v4901
        %v4935 = vadd.f32 %v4934, %v4902
        %v4936 = vadd.f32 %v4935, %v4903
        %v4937 = vadd.f32 %v4936, %v4904
        %v4938 = vadd.f32 %v4937, %v4905
        %v4939 = vadd.f32 %v4938, %v4906
        %v4940 = vadd.f32 %v4939, %v4907
        %v4941 = vadd.f32 %v4940, %v4908
        %v4942 = vadd.f32 %v4941, %v4909
        %v4943 = vadd.f32 %v4942, %v4910
        %v4944 = vadd.f32 %v4943, %v4911
        %v4945 = vadd.f32 %v4944, %v4912
        %v4946 = vadd.f32 %v4945, %v4913
        %v4947 = vrot.slane %v4946, 4
        %v4948 = vadd.f32 %v4946, %v4947
        %v4949 = vrot.slane %v4948, 2
        %v4950 = vadd.f32 %v4948, %v4949
        %v4951 = vrot.slane %v4950, 1
        %v4952 = vadd.f32 %v4950, %v4951
        %v4953 = vmul.f32 %v4882, %v4882
        %v4954 = vmul.f32 %v4883, %v4883
        %v4955 = vmul.f32 %v4884, %v4884
        %v4956 = vmul.f32 %v4885, %v4885
        %v4957 = vmul.f32 %v4886, %v4886
        %v4958 = vmul.f32 %v4887, %v4887
        %v4959 = vmul.f32 %v4888, %v4888
        %v4960 = vmul.f32 %v4889, %v4889
        %v4961 = vmul.f32 %v4890, %v4890
        %v4962 = vmul.f32 %v4891, %v4891
        %v4963 = vmul.f32 %v4892, %v4892
        %v4964 = vmul.f32 %v4893, %v4893
        %v4965 = vmul.f32 %v4894, %v4894
        %v4966 = vmul.f32 %v4895, %v4895
        %v4967 = vmul.f32 %v4896, %v4896
        %v4968 = vmul.f32 %v4897, %v4897
        %v4969 = vmul.f32 %v4898, %v4898
        %v4970 = vmul.f32 %v4899, %v4899
        %v4971 = vmul.f32 %v4900, %v4900
        %v4972 = vmul.f32 %v4901, %v4901
        %v4973 = vmul.f32 %v4902, %v4902
        %v4974 = vmul.f32 %v4903, %v4903
        %v4975 = vmul.f32 %v4904, %v4904
        %v4976 = vmul.f32 %v4905, %v4905
        %v4977 = vmul.f32 %v4906, %v4906
        %v4978 = vmul.f32 %v4907, %v4907
        %v4979 = vmul.f32 %v4908, %v4908
        %v4980 = vmul.f32 %v4909, %v4909
        %v4981 = vmul.f32 %v4910, %v4910
        %v4982 = vmul.f32 %v4911, %v4911
        %v4983 = vmul.f32 %v4912, %v4912
        %v4984 = vmul.f32 %v4913, %v4913
        %v4985 = vadd.f32 %v4953, %v4954
        %v4986 = vadd.f32 %v4985, %v4955
        %v4987 = vadd.f32 %v4986, %v4956
        %v4988 = vadd.f32 %v4987, %v4957
        %v4989 = vadd.f32 %v4988, %v4958
        %v4990 = vadd.f32 %v4989, %v4959
        %v4991 = vadd.f32 %v4990, %v4960
        %v4992 = vadd.f32 %v4991, %v4961
        %v4993 = vadd.f32 %v4992, %v4962
        %v4994 = vadd.f32 %v4993, %v4963
        %v4995 = vadd.f32 %v4994, %v4964
        %v4996 = vadd.f32 %v4995, %v4965
        %v4997 = vadd.f32 %v4996, %v4966
        %v4998 = vadd.f32 %v4997, %v4967
        %v4999 = vadd.f32 %v4998, %v4968
        %v5000 = vadd.f32 %v4999, %v4969
        %v5001 = vadd.f32 %v5000, %v4970
        %v5002 = vadd.f32 %v5001, %v4971
        %v5003 = vadd.f32 %v5002, %v4972
        %v5004 = vadd.f32 %v5003, %v4973
        %v5005 = vadd.f32 %v5004, %v4974
        %v5006 = vadd.f32 %v5005, %v4975
        %v5007 = vadd.f32 %v5006, %v4976
        %v5008 = vadd.f32 %v5007, %v4977
        %v5009 = vadd.f32 %v5008, %v4978
        %v5010 = vadd.f32 %v5009, %v4979
        %v5011 = vadd.f32 %v5010, %v4980
        %v5012 = vadd.f32 %v5011, %v4981
        %v5013 = vadd.f32 %v5012, %v4982
        %v5014 = vadd.f32 %v5013, %v4983
        %v5015 = vadd.f32 %v5014, %v4984
        %v5016 = vrot.slane %v5015, 4
        %v5017 = vadd.f32 %v5015, %v5016
        %v5018 = vrot.slane %v5017, 2
        %v5019 = vadd.f32 %v5017, %v5018
        %v5020 = vrot.slane %v5019, 1
        %v5021 = vadd.f32 %v5019, %v5020
        %v5022 = vsel %vm2629, %v4952, %v5021
        %5023 = vmatpush.msra.mxu0 %v462
        %5024 = vmatpush.msra.mxu0 %v461
        %5025 = vmatpush.msra.mxu0 %v460
        %5026 = vmatpush.msra.mxu0 %v459
        %5027 = vmatpush.msra.mxu0 %v458
        %5028 = vmatpush.msra.mxu0 %v457
        %5029 = vmatpush.msra.mxu0 %v456
        %5030 = vmatpush.msra.mxu0 %v455
        %5031 = vmatpush.msra.mxu0 %v454
        %5032 = vmatpush.msra.mxu0 %v453
        %5033 = vmatpush.msra.mxu0 %v452
        %5034 = vmatpush.msra.mxu0 %v451
        %5035 = vmatpush.msra.mxu0 %v450
        %5036 = vmatpush.msra.mxu0 %v449
        %5037 = vmatpush.msra.mxu0 %v448
        %5038 = vmatpush.msra.mxu0 %v447
        %5039 = vmatmul.f32.gmra.mxu0 %v5022
        %v5040 = vpop.f32.mrf.mxu0
        %v5041 = vadd.f32 0.0, %v5040
        %5042 = vdwg.mxu0
        %v5043 = vmul.f32 %v5041, 0.0009765625
        %v5044 = vmul.f32 %v5043, %v5043
        %v5046 = vrot.slane %v5044, 7
        %v5048 = vsub.f32 %v5043, %v5046
        %v5049 = vmax.f32 %v5048, 0.0
        %v5050 = vadd.f32 %v5049, 1e-05
        %v5051 = vrsqrt.pop %v5050
        %v5052 = vmul.f32 %v5051, %v5050
        %v5053 = vmul.f32 %v5052, %v5051
        %v5054 = vmul.f32 0.5, %v5053
        %v5055 = vsub.f32 1.5, %v5054
        %v5056 = vmul.f32 %v5051, %v5055
        %vm5057 = vweird.f32 %v5050
        %vm5058 = vweird.f32 %v5051
        %vm5059 = vmor %vm5057, %vm5058
        %v5060 = vsel %vm5059, %v5051, %v5056
        %v5061 = vsel %vm2629, %v5043, %v5060
        %5062 = vmatpush.msra.mxu0 %v478
        %5063 = vmatpush.msra.mxu0 %v477
        %5064 = vmatpush.msra.mxu0 %v476
        %5065 = vmatpush.msra.mxu0 %v475
        %5066 = vmatpush.msra.mxu0 %v474
        %5067 = vmatpush.msra.mxu0 %v473
        %5068 = vmatpush.msra.mxu0 %v472
        %5069 = vmatpush.msra.mxu0 %v471
        %5070 = vmatpush.msra.mxu0 %v470
        %5071 = vmatpush.msra.mxu0 %v469
        %5072 = vmatpush.msra.mxu0 %v468
        %5073 = vmatpush.msra.mxu0 %v467
        %5074 = vmatpush.msra.mxu0 %v466
        %5075 = vmatpush.msra.mxu0 %v465
        %5076 = vmatpush.msra.mxu0 %v464
        %5077 = vmatpush.msra.mxu0 %v463
        %5078 = vmatmul.f32.gmra.mxu0 %v5061
        %v5079 = vpop.f32.mrf.mxu0
        %v5080 = vadd.f32 0.0, %v5079
        %5081 = vdwg.mxu0
        %5083 = vst [vmem:[#allocation1] sm:$0xff] %v5080
        %s5084 = scalar_lea.vmem [#allocation1], 1
        %v5085 = vld [vmem:[%s5084] ss:$9 sm:$0xff]
        %v5087 = vmul.f32 %v4914, %v5085
        %v5088 = vmul.f32 %v5080, %v5087
        %v5089 = vsub.f32 %v4915, %v5088
        %v5091 = vperm.slane %v5087, 0
        %v5093 = vmul.f32 %v4882, %v5091
        %v5094 = vmul.f32 %v4883, %v5091
        %v5095 = vmul.f32 %v4884, %v5091
        %v5096 = vmul.f32 %v4885, %v5091
        %v5097 = vmul.f32 %v4886, %v5091
        %v5098 = vmul.f32 %v4887, %v5091
        %v5099 = vmul.f32 %v4888, %v5091
        %v5100 = vmul.f32 %v4889, %v5091
        %v5101 = vmul.f32 %v4890, %v5091
        %v5102 = vmul.f32 %v4891, %v5091
        %v5103 = vmul.f32 %v4892, %v5091
        %v5104 = vmul.f32 %v4893, %v5091
        %v5105 = vmul.f32 %v4894, %v5091
        %v5106 = vmul.f32 %v4895, %v5091
        %v5107 = vmul.f32 %v4896, %v5091
        %v5108 = vmul.f32 %v4897, %v5091
        %v5109 = vmul.f32 %v4898, %v5091
        %v5110 = vmul.f32 %v4899, %v5091
        %v5111 = vmul.f32 %v4900, %v5091
        %v5112 = vmul.f32 %v4901, %v5091
        %v5113 = vmul.f32 %v4902, %v5091
        %v5114 = vmul.f32 %v4903, %v5091
        %v5115 = vmul.f32 %v4904, %v5091
        %v5116 = vmul.f32 %v4905, %v5091
        %v5117 = vmul.f32 %v4906, %v5091
        %v5118 = vmul.f32 %v4907, %v5091
        %v5119 = vmul.f32 %v4908, %v5091
        %v5120 = vmul.f32 %v4909, %v5091
        %v5121 = vmul.f32 %v4910, %v5091
        %v5122 = vmul.f32 %v4911, %v5091
        %v5123 = vmul.f32 %v4912, %v5091
        %v5124 = vmul.f32 %v4913, %v5091
        %v5126 = vperm.slane %v5089, 0
        %v5128 = vadd.f32 %v5093, %v5126
        %v5129 = vadd.f32 %v5094, %v5126
        %v5130 = vadd.f32 %v5095, %v5126
        %v5131 = vadd.f32 %v5096, %v5126
        %v5132 = vadd.f32 %v5097, %v5126
        %v5133 = vadd.f32 %v5098, %v5126
        %v5134 = vadd.f32 %v5099, %v5126
        %v5135 = vadd.f32 %v5100, %v5126
        %v5136 = vadd.f32 %v5101, %v5126
        %v5137 = vadd.f32 %v5102, %v5126
        %v5138 = vadd.f32 %v5103, %v5126
        %v5139 = vadd.f32 %v5104, %v5126
        %v5140 = vadd.f32 %v5105, %v5126
        %v5141 = vadd.f32 %v5106, %v5126
        %v5142 = vadd.f32 %v5107, %v5126
        %v5143 = vadd.f32 %v5108, %v5126
        %v5144 = vadd.f32 %v5109, %v5126
        %v5145 = vadd.f32 %v5110, %v5126
        %v5146 = vadd.f32 %v5111, %v5126
        %v5147 = vadd.f32 %v5112, %v5126
        %v5148 = vadd.f32 %v5113, %v5126
        %v5149 = vadd.f32 %v5114, %v5126
        %v5150 = vadd.f32 %v5115, %v5126
        %v5151 = vadd.f32 %v5116, %v5126
        %v5152 = vadd.f32 %v5117, %v5126
        %v5153 = vadd.f32 %v5118, %v5126
        %v5154 = vadd.f32 %v5119, %v5126
        %v5155 = vadd.f32 %v5120, %v5126
        %v5156 = vadd.f32 %v5121, %v5126
        %v5157 = vadd.f32 %v5122, %v5126
        %v5158 = vadd.f32 %v5123, %v5126
        %v5159 = vadd.f32 %v5124, %v5126
        %v5160 = vpack.c.bf16 %v480, %v479
        %v5161 = vpack.c.bf16 %v482, %v481
        %v5162 = vpack.c.bf16 %v484, %v483
        %v5163 = vpack.c.bf16 %v486, %v485
        %v5164 = vpack.c.bf16 %v488, %v487
        %v5165 = vpack.c.bf16 %v490, %v489
        %v5166 = vpack.c.bf16 %v492, %v491
        %v5167 = vpack.c.bf16 %v494, %v493
        %v5168 = vpack.c.bf16 %v496, %v495
        %v5169 = vpack.c.bf16 %v498, %v497
        %v5170 = vpack.c.bf16 %v500, %v499
        %v5171 = vpack.c.bf16 %v502, %v501
        %v5172 = vpack.c.bf16 %v504, %v503
        %v5173 = vpack.c.bf16 %v506, %v505
        %v5174 = vpack.c.bf16 %v508, %v507
        %v5175 = vpack.c.bf16 %v510, %v509
        %v5176 = vld [vmem:[%s9] sm:$0x3]
        %v5178 = vsel %vm511, %v5160, 0
        %v5181 = vsel %vm511, %v5161, 0
        %v5184 = vsel %vm511, %v5162, 0
        %v5187 = vsel %vm511, %v5163, 0
        %v5190 = vsel %vm511, %v5164, 0
        %v5193 = vsel %vm511, %v5165, 0
        %v5196 = vsel %vm511, %v5166, 0
        %v5199 = vsel %vm511, %v5167, 0
        %v5202 = vsel %vm511, %v5168, 0
        %v5205 = vsel %vm511, %v5169, 0
        %v5208 = vsel %vm511, %v5170, 0
        %v5211 = vsel %vm511, %v5171, 0
        %v5214 = vsel %vm511, %v5172, 0
        %v5217 = vsel %vm511, %v5173, 0
        %v5220 = vsel %vm511, %v5174, 0
        %v5223 = vsel %vm511, %v5175, 0
        %v5226 = vsel %vm733, %v5176, 0
        %5228 = vmatpush.bf16.msra.mxu0 0
        %5229 = vmatpush.bf16.msra.mxu0 0
        %5230 = vmatpush.bf16.msra.mxu0 0
        %5231 = vmatpush.bf16.msra.mxu0 0
        %5232 = vmatpush.bf16.msra.mxu0 0
        %5233 = vmatpush.bf16.msra.mxu0 0
        %5234 = vmatpush.bf16.msra.mxu0 0
        %5235 = vmatpush.bf16.msra.mxu0 %v5226
        %5236 = vmatmul.bf16.gmra.mxu0 %v5178
        %v5237 = vpop.f32.mrf.mxu0
        %v5238 = vadd.f32 0.0, %v5237
        %v5239 = vpop.f32.mrf.mxu0
        %v5240 = vadd.f32 0.0, %v5239
        %5241 = vmatmul.bf16.gmra.mxu0 %v5181
        %v5242 = vpop.f32.mrf.mxu0
        %v5243 = vadd.f32 0.0, %v5242
        %v5244 = vpop.f32.mrf.mxu0
        %v5245 = vadd.f32 0.0, %v5244
        %5246 = vmatmul.bf16.gmra.mxu0 %v5184
        %v5247 = vpop.f32.mrf.mxu0
        %v5248 = vadd.f32 0.0, %v5247
        %v5249 = vpop.f32.mrf.mxu0
        %v5250 = vadd.f32 0.0, %v5249
        %5251 = vmatmul.bf16.gmra.mxu0 %v5187
        %v5252 = vpop.f32.mrf.mxu0
        %v5253 = vadd.f32 0.0, %v5252
        %v5254 = vpop.f32.mrf.mxu0
        %v5255 = vadd.f32 0.0, %v5254
        %5256 = vmatmul.bf16.gmra.mxu0 %v5190
        %v5257 = vpop.f32.mrf.mxu0
        %v5258 = vadd.f32 0.0, %v5257
        %v5259 = vpop.f32.mrf.mxu0
        %v5260 = vadd.f32 0.0, %v5259
        %5261 = vmatmul.bf16.gmra.mxu0 %v5193
        %v5262 = vpop.f32.mrf.mxu0
        %v5263 = vadd.f32 0.0, %v5262
        %v5264 = vpop.f32.mrf.mxu0
        %v5265 = vadd.f32 0.0, %v5264
        %5266 = vmatmul.bf16.gmra.mxu0 %v5196
        %v5267 = vpop.f32.mrf.mxu0
        %v5268 = vadd.f32 0.0, %v5267
        %v5269 = vpop.f32.mrf.mxu0
        %v5270 = vadd.f32 0.0, %v5269
        %5271 = vmatmul.bf16.gmra.mxu0 %v5199
        %v5272 = vpop.f32.mrf.mxu0
        %v5273 = vadd.f32 0.0, %v5272
        %v5274 = vpop.f32.mrf.mxu0
        %v5275 = vadd.f32 0.0, %v5274
        %5276 = vmatmul.bf16.gmra.mxu0 %v5202
        %v5277 = vpop.f32.mrf.mxu0
        %v5278 = vadd.f32 0.0, %v5277
        %v5279 = vpop.f32.mrf.mxu0
        %v5280 = vadd.f32 0.0, %v5279
        %5281 = vmatmul.bf16.gmra.mxu0 %v5205
        %v5282 = vpop.f32.mrf.mxu0
        %v5283 = vadd.f32 0.0, %v5282
        %v5284 = vpop.f32.mrf.mxu0
        %v5285 = vadd.f32 0.0, %v5284
        %5286 = vmatmul.bf16.gmra.mxu0 %v5208
        %v5287 = vpop.f32.mrf.mxu0
        %v5288 = vadd.f32 0.0, %v5287
        %v5289 = vpop.f32.mrf.mxu0
        %v5290 = vadd.f32 0.0, %v5289
        %5291 = vmatmul.bf16.gmra.mxu0 %v5211
        %v5292 = vpop.f32.mrf.mxu0
        %v5293 = vadd.f32 0.0, %v5292
        %v5294 = vpop.f32.mrf.mxu0
        %v5295 = vadd.f32 0.0, %v5294
        %5296 = vmatmul.bf16.gmra.mxu0 %v5214
        %v5297 = vpop.f32.mrf.mxu0
        %v5298 = vadd.f32 0.0, %v5297
        %v5299 = vpop.f32.mrf.mxu0
        %v5300 = vadd.f32 0.0, %v5299
        %5301 = vmatmul.bf16.gmra.mxu0 %v5217
        %v5302 = vpop.f32.mrf.mxu0
        %v5303 = vadd.f32 0.0, %v5302
        %v5304 = vpop.f32.mrf.mxu0
        %v5305 = vadd.f32 0.0, %v5304
        %5306 = vmatmul.bf16.gmra.mxu0 %v5220
        %v5307 = vpop.f32.mrf.mxu0
        %v5308 = vadd.f32 0.0, %v5307
        %v5309 = vpop.f32.mrf.mxu0
        %v5310 = vadd.f32 0.0, %v5309
        %5311 = vmatmul.bf16.gmra.mxu0 %v5223
        %v5312 = vpop.f32.mrf.mxu0
        %v5313 = vadd.f32 0.0, %v5312
        %v5314 = vpop.f32.mrf.mxu0
        %v5315 = vadd.f32 0.0, %v5314
        %5316 = vdwg.mxu0
        %v5317 = vld [vmem:[%s10] sm:$0x1]
        %v5318 = vld [vmem:[%s11] sm:$0x1]
        %v5319 = vadd.f32 %v5238, %v5240
        %v5320 = vadd.f32 %v5319, %v5243
        %v5321 = vadd.f32 %v5320, %v5245
        %v5322 = vadd.f32 %v5321, %v5248
        %v5323 = vadd.f32 %v5322, %v5250
        %v5324 = vadd.f32 %v5323, %v5253
        %v5325 = vadd.f32 %v5324, %v5255
        %v5326 = vadd.f32 %v5325, %v5258
        %v5327 = vadd.f32 %v5326, %v5260
        %v5328 = vadd.f32 %v5327, %v5263
        %v5329 = vadd.f32 %v5328, %v5265
        %v5330 = vadd.f32 %v5329, %v5268
        %v5331 = vadd.f32 %v5330, %v5270
        %v5332 = vadd.f32 %v5331, %v5273
        %v5333 = vadd.f32 %v5332, %v5275
        %v5334 = vadd.f32 %v5333, %v5278
        %v5335 = vadd.f32 %v5334, %v5280
        %v5336 = vadd.f32 %v5335, %v5283
        %v5337 = vadd.f32 %v5336, %v5285
        %v5338 = vadd.f32 %v5337, %v5288
        %v5339 = vadd.f32 %v5338, %v5290
        %v5340 = vadd.f32 %v5339, %v5293
        %v5341 = vadd.f32 %v5340, %v5295
        %v5342 = vadd.f32 %v5341, %v5298
        %v5343 = vadd.f32 %v5342, %v5300
        %v5344 = vadd.f32 %v5343, %v5303
        %v5345 = vadd.f32 %v5344, %v5305
        %v5346 = vadd.f32 %v5345, %v5308
        %v5347 = vadd.f32 %v5346, %v5310
        %v5348 = vadd.f32 %v5347, %v5313
        %v5349 = vadd.f32 %v5348, %v5315
        %v5350 = vrot.slane %v5349, 4
        %v5351 = vadd.f32 %v5349, %v5350
        %v5352 = vrot.slane %v5351, 2
        %v5353 = vadd.f32 %v5351, %v5352
        %v5354 = vrot.slane %v5353, 1
        %v5355 = vadd.f32 %v5353, %v5354
        %v5356 = vmul.f32 %v5238, %v5238
        %v5357 = vmul.f32 %v5240, %v5240
        %v5358 = vmul.f32 %v5243, %v5243
        %v5359 = vmul.f32 %v5245, %v5245
        %v5360 = vmul.f32 %v5248, %v5248
        %v5361 = vmul.f32 %v5250, %v5250
        %v5362 = vmul.f32 %v5253, %v5253
        %v5363 = vmul.f32 %v5255, %v5255
        %v5364 = vmul.f32 %v5258, %v5258
        %v5365 = vmul.f32 %v5260, %v5260
        %v5366 = vmul.f32 %v5263, %v5263
        %v5367 = vmul.f32 %v5265, %v5265
        %v5368 = vmul.f32 %v5268, %v5268
        %v5369 = vmul.f32 %v5270, %v5270
        %v5370 = vmul.f32 %v5273, %v5273
        %v5371 = vmul.f32 %v5275, %v5275
        %v5372 = vmul.f32 %v5278, %v5278
        %v5373 = vmul.f32 %v5280, %v5280
        %v5374 = vmul.f32 %v5283, %v5283
        %v5375 = vmul.f32 %v5285, %v5285
        %v5376 = vmul.f32 %v5288, %v5288
        %v5377 = vmul.f32 %v5290, %v5290
        %v5378 = vmul.f32 %v5293, %v5293
        %v5379 = vmul.f32 %v5295, %v5295
        %v5380 = vmul.f32 %v5298, %v5298
        %v5381 = vmul.f32 %v5300, %v5300
        %v5382 = vmul.f32 %v5303, %v5303
        %v5383 = vmul.f32 %v5305, %v5305
        %v5384 = vmul.f32 %v5308, %v5308
        %v5385 = vmul.f32 %v5310, %v5310
        %v5386 = vmul.f32 %v5313, %v5313
        %v5387 = vmul.f32 %v5315, %v5315
        %v5388 = vadd.f32 %v5356, %v5357
        %v5389 = vadd.f32 %v5388, %v5358
        %v5390 = vadd.f32 %v5389, %v5359
        %v5391 = vadd.f32 %v5390, %v5360
        %v5392 = vadd.f32 %v5391, %v5361
        %v5393 = vadd.f32 %v5392, %v5362
        %v5394 = vadd.f32 %v5393, %v5363
        %v5395 = vadd.f32 %v5394, %v5364
        %v5396 = vadd.f32 %v5395, %v5365
        %v5397 = vadd.f32 %v5396, %v5366
        %v5398 = vadd.f32 %v5397, %v5367
        %v5399 = vadd.f32 %v5398, %v5368
        %v5400 = vadd.f32 %v5399, %v5369
        %v5401 = vadd.f32 %v5400, %v5370
        %v5402 = vadd.f32 %v5401, %v5371
        %v5403 = vadd.f32 %v5402, %v5372
        %v5404 = vadd.f32 %v5403, %v5373
        %v5405 = vadd.f32 %v5404, %v5374
        %v5406 = vadd.f32 %v5405, %v5375
        %v5407 = vadd.f32 %v5406, %v5376
        %v5408 = vadd.f32 %v5407, %v5377
        %v5409 = vadd.f32 %v5408, %v5378
        %v5410 = vadd.f32 %v5409, %v5379
        %v5411 = vadd.f32 %v5410, %v5380
        %v5412 = vadd.f32 %v5411, %v5381
        %v5413 = vadd.f32 %v5412, %v5382
        %v5414 = vadd.f32 %v5413, %v5383
        %v5415 = vadd.f32 %v5414, %v5384
        %v5416 = vadd.f32 %v5415, %v5385
        %v5417 = vadd.f32 %v5416, %v5386
        %v5418 = vadd.f32 %v5417, %v5387
        %v5419 = vrot.slane %v5418, 4
        %v5420 = vadd.f32 %v5418, %v5419
        %v5421 = vrot.slane %v5420, 2
        %v5422 = vadd.f32 %v5420, %v5421
        %v5423 = vrot.slane %v5422, 1
        %v5424 = vadd.f32 %v5422, %v5423
        %v5425 = vsel %vm2629, %v5355, %v5424
        %5426 = vmatpush.msra.mxu0 %v462
        %5427 = vmatpush.msra.mxu0 %v461
        %5428 = vmatpush.msra.mxu0 %v460
        %5429 = vmatpush.msra.mxu0 %v459
        %5430 = vmatpush.msra.mxu0 %v458
        %5431 = vmatpush.msra.mxu0 %v457
        %5432 = vmatpush.msra.mxu0 %v456
        %5433 = vmatpush.msra.mxu0 %v455
        %5434 = vmatpush.msra.mxu0 %v454
        %5435 = vmatpush.msra.mxu0 %v453
        %5436 = vmatpush.msra.mxu0 %v452
        %5437 = vmatpush.msra.mxu0 %v451
        %5438 = vmatpush.msra.mxu0 %v450
        %5439 = vmatpush.msra.mxu0 %v449
        %5440 = vmatpush.msra.mxu0 %v448
        %5441 = vmatpush.msra.mxu0 %v447
        %5442 = vmatmul.f32.gmra.mxu0 %v5425
        %v5443 = vpop.f32.mrf.mxu0
        %v5444 = vadd.f32 0.0, %v5443
        %5445 = vdwg.mxu0
        %v5446 = vmul.f32 %v5444, 0.0009765625
        %v5447 = vmul.f32 %v5446, %v5446
        %v5449 = vrot.slane %v5447, 7
        %v5451 = vsub.f32 %v5446, %v5449
        %v5452 = vmax.f32 %v5451, 0.0
        %v5453 = vadd.f32 %v5452, 1e-05
        %v5454 = vrsqrt.pop %v5453
        %v5455 = vmul.f32 %v5454, %v5453
        %v5456 = vmul.f32 %v5455, %v5454
        %v5457 = vmul.f32 0.5, %v5456
        %v5458 = vsub.f32 1.5, %v5457
        %v5459 = vmul.f32 %v5454, %v5458
        %vm5460 = vweird.f32 %v5453
        %vm5461 = vweird.f32 %v5454
        %vm5462 = vmor %vm5460, %vm5461
        %v5463 = vsel %vm5462, %v5454, %v5459
        %v5464 = vsel %vm2629, %v5446, %v5463
        %5465 = vmatpush.msra.mxu0 %v478
        %5466 = vmatpush.msra.mxu0 %v477
        %5467 = vmatpush.msra.mxu0 %v476
        %5468 = vmatpush.msra.mxu0 %v475
        %5469 = vmatpush.msra.mxu0 %v474
        %5470 = vmatpush.msra.mxu0 %v473
        %5471 = vmatpush.msra.mxu0 %v472
        %5472 = vmatpush.msra.mxu0 %v471
        %5473 = vmatpush.msra.mxu0 %v470
        %5474 = vmatpush.msra.mxu0 %v469
        %5475 = vmatpush.msra.mxu0 %v468
        %5476 = vmatpush.msra.mxu0 %v467
        %5477 = vmatpush.msra.mxu0 %v466
        %5478 = vmatpush.msra.mxu0 %v465
        %5479 = vmatpush.msra.mxu0 %v464
        %5480 = vmatpush.msra.mxu0 %v463
        %5481 = vmatmul.f32.gmra.mxu0 %v5464
        %v5482 = vpop.f32.mrf.mxu0
        %v5483 = vadd.f32 0.0, %v5482
        %5484 = vdwg.mxu0
        %5486 = vst [vmem:[#allocation1] sm:$0xff] %v5483
        %s5487 = scalar_lea.vmem [#allocation1], 1
        %v5488 = vld [vmem:[%s5487] ss:$9 sm:$0xff]
        %v5490 = vmul.f32 %v5317, %v5488
        %v5491 = vmul.f32 %v5483, %v5490
        %v5492 = vsub.f32 %v5318, %v5491
        %v5494 = vperm.slane %v5490, 0
        %v5496 = vmul.f32 %v5238, %v5494
        %v5497 = vmul.f32 %v5240, %v5494
        %v5498 = vmul.f32 %v5243, %v5494
        %v5499 = vmul.f32 %v5245, %v5494
        %v5500 = vmul.f32 %v5248, %v5494
        %v5501 = vmul.f32 %v5250, %v5494
        %v5502 = vmul.f32 %v5253, %v5494
        %v5503 = vmul.f32 %v5255, %v5494
        %v5504 = vmul.f32 %v5258, %v5494
        %v5505 = vmul.f32 %v5260, %v5494
        %v5506 = vmul.f32 %v5263, %v5494
        %v5507 = vmul.f32 %v5265, %v5494
        %v5508 = vmul.f32 %v5268, %v5494
        %v5509 = vmul.f32 %v5270, %v5494
        %v5510 = vmul.f32 %v5273, %v5494
        %v5511 = vmul.f32 %v5275, %v5494
        %v5512 = vmul.f32 %v5278, %v5494
        %v5513 = vmul.f32 %v5280, %v5494
        %v5514 = vmul.f32 %v5283, %v5494
        %v5515 = vmul.f32 %v5285, %v5494
        %v5516 = vmul.f32 %v5288, %v5494
        %v5517 = vmul.f32 %v5290, %v5494
        %v5518 = vmul.f32 %v5293, %v5494
        %v5519 = vmul.f32 %v5295, %v5494
        %v5520 = vmul.f32 %v5298, %v5494
        %v5521 = vmul.f32 %v5300, %v5494
        %v5522 = vmul.f32 %v5303, %v5494
        %v5523 = vmul.f32 %v5305, %v5494
        %v5524 = vmul.f32 %v5308, %v5494
        %v5525 = vmul.f32 %v5310, %v5494
        %v5526 = vmul.f32 %v5313, %v5494
        %v5527 = vmul.f32 %v5315, %v5494
        %v5529 = vperm.slane %v5492, 0
        %v5531 = vadd.f32 %v5496, %v5529
        %v5532 = vadd.f32 %v5497, %v5529
        %v5533 = vadd.f32 %v5498, %v5529
        %v5534 = vadd.f32 %v5499, %v5529
        %v5535 = vadd.f32 %v5500, %v5529
        %v5536 = vadd.f32 %v5501, %v5529
        %v5537 = vadd.f32 %v5502, %v5529
        %v5538 = vadd.f32 %v5503, %v5529
        %v5539 = vadd.f32 %v5504, %v5529
        %v5540 = vadd.f32 %v5505, %v5529
        %v5541 = vadd.f32 %v5506, %v5529
        %v5542 = vadd.f32 %v5507, %v5529
        %v5543 = vadd.f32 %v5508, %v5529
        %v5544 = vadd.f32 %v5509, %v5529
        %v5545 = vadd.f32 %v5510, %v5529
        %v5546 = vadd.f32 %v5511, %v5529
        %v5547 = vadd.f32 %v5512, %v5529
        %v5548 = vadd.f32 %v5513, %v5529
        %v5549 = vadd.f32 %v5514, %v5529
        %v5550 = vadd.f32 %v5515, %v5529
        %v5551 = vadd.f32 %v5516, %v5529
        %v5552 = vadd.f32 %v5517, %v5529
        %v5553 = vadd.f32 %v5518, %v5529
        %v5554 = vadd.f32 %v5519, %v5529
        %v5555 = vadd.f32 %v5520, %v5529
        %v5556 = vadd.f32 %v5521, %v5529
        %v5557 = vadd.f32 %v5522, %v5529
        %v5558 = vadd.f32 %v5523, %v5529
        %v5559 = vadd.f32 %v5524, %v5529
        %v5560 = vadd.f32 %v5525, %v5529
        %v5561 = vadd.f32 %v5526, %v5529
        %v5562 = vadd.f32 %v5527, %v5529
        %v5563 = vadd.f32 %v5128, %v5531
        %v5564 = vadd.f32 %v5129, %v5532
        %v5565 = vadd.f32 %v5130, %v5533
        %v5566 = vadd.f32 %v5131, %v5534
        %v5567 = vadd.f32 %v5132, %v5535
        %v5568 = vadd.f32 %v5133, %v5536
        %v5569 = vadd.f32 %v5134, %v5537
        %v5570 = vadd.f32 %v5135, %v5538
        %v5571 = vadd.f32 %v5136, %v5539
        %v5572 = vadd.f32 %v5137, %v5540
        %v5573 = vadd.f32 %v5138, %v5541
        %v5574 = vadd.f32 %v5139, %v5542
        %v5575 = vadd.f32 %v5140, %v5543
        %v5576 = vadd.f32 %v5141, %v5544
        %v5577 = vadd.f32 %v5142, %v5545
        %v5578 = vadd.f32 %v5143, %v5546
        %v5579 = vadd.f32 %v5144, %v5547
        %v5580 = vadd.f32 %v5145, %v5548
        %v5581 = vadd.f32 %v5146, %v5549
        %v5582 = vadd.f32 %v5147, %v5550
        %v5583 = vadd.f32 %v5148, %v5551
        %v5584 = vadd.f32 %v5149, %v5552
        %v5585 = vadd.f32 %v5150, %v5553
        %v5586 = vadd.f32 %v5151, %v5554
        %v5587 = vadd.f32 %v5152, %v5555
        %v5588 = vadd.f32 %v5153, %v5556
        %v5589 = vadd.f32 %v5154, %v5557
        %v5590 = vadd.f32 %v5155, %v5558
        %v5591 = vadd.f32 %v5156, %v5559
        %v5592 = vadd.f32 %v5157, %v5560
        %v5593 = vadd.f32 %v5158, %v5561
        %v5594 = vadd.f32 %v5159, %v5562
        %v5595 = vmax.f32 %v5563, 0.0
        %v5596 = vmax.f32 %v5564, 0.0
        %v5597 = vmax.f32 %v5565, 0.0
        %v5598 = vmax.f32 %v5566, 0.0
        %v5599 = vmax.f32 %v5567, 0.0
        %v5600 = vmax.f32 %v5568, 0.0
        %v5601 = vmax.f32 %v5569, 0.0
        %v5602 = vmax.f32 %v5570, 0.0
        %v5603 = vmax.f32 %v5571, 0.0
        %v5604 = vmax.f32 %v5572, 0.0
        %v5605 = vmax.f32 %v5573, 0.0
        %v5606 = vmax.f32 %v5574, 0.0
        %v5607 = vmax.f32 %v5575, 0.0
        %v5608 = vmax.f32 %v5576, 0.0
        %v5609 = vmax.f32 %v5577, 0.0
        %v5610 = vmax.f32 %v5578, 0.0
        %v5611 = vmax.f32 %v5579, 0.0
        %v5612 = vmax.f32 %v5580, 0.0
        %v5613 = vmax.f32 %v5581, 0.0
        %v5614 = vmax.f32 %v5582, 0.0
        %v5615 = vmax.f32 %v5583, 0.0
        %v5616 = vmax.f32 %v5584, 0.0
        %v5617 = vmax.f32 %v5585, 0.0
        %v5618 = vmax.f32 %v5586, 0.0
        %v5619 = vmax.f32 %v5587, 0.0
        %v5620 = vmax.f32 %v5588, 0.0
        %v5621 = vmax.f32 %v5589, 0.0
        %v5622 = vmax.f32 %v5590, 0.0
        %v5623 = vmax.f32 %v5591, 0.0
        %v5624 = vmax.f32 %v5592, 0.0
        %v5625 = vmax.f32 %v5593, 0.0
        %v5626 = vmax.f32 %v5594, 0.0
        %vm5627 = vcmask 261120
        %5628 = vst.msk [vmem:[%s440] sm:$0xff] %vm5627, %v5595
        %5629 = vst.msk [vmem:[%s440 + $0x8] sm:$0xff] %vm5627, %v5596
        %5630 = vst.msk [vmem:[%s440 + $0x10] sm:$0xff] %vm5627, %v5597
        %5631 = vst.msk [vmem:[%s440 + $0x18] sm:$0xff] %vm5627, %v5598
        %5632 = vst.msk [vmem:[%s440 + $0x20] sm:$0xff] %vm5627, %v5599
        %5633 = vst.msk [vmem:[%s440 + $0x28] sm:$0xff] %vm5627, %v5600
        %5634 = vst.msk [vmem:[%s440 + $0x30] sm:$0xff] %vm5627, %v5601
        %5635 = vst.msk [vmem:[%s440 + $0x38] sm:$0xff] %vm5627, %v5602
        %5636 = vst.msk [vmem:[%s440 + $0x40] sm:$0xff] %vm5627, %v5603
        %5637 = vst.msk [vmem:[%s440 + $0x48] sm:$0xff] %vm5627, %v5604
        %5638 = vst.msk [vmem:[%s440 + $0x50] sm:$0xff] %vm5627, %v5605
        %5639 = vst.msk [vmem:[%s440 + $0x58] sm:$0xff] %vm5627, %v5606
        %5640 = vst.msk [vmem:[%s440 + $0x60] sm:$0xff] %vm5627, %v5607
        %5641 = vst.msk [vmem:[%s440 + $0x68] sm:$0xff] %vm5627, %v5608
        %5642 = vst.msk [vmem:[%s440 + $0x70] sm:$0xff] %vm5627, %v5609
        %5643 = vst.msk [vmem:[%s440 + $0x78] sm:$0xff] %vm5627, %v5610
        %5644 = vst.msk [vmem:[%s440 + $0x80] sm:$0xff] %vm5627, %v5611
        %5645 = vst.msk [vmem:[%s440 + $0x88] sm:$0xff] %vm5627, %v5612
        %5646 = vst.msk [vmem:[%s440 + $0x90] sm:$0xff] %vm5627, %v5613
        %5647 = vst.msk [vmem:[%s440 + $0x98] sm:$0xff] %vm5627, %v5614
        %5648 = vst.msk [vmem:[%s440 + $0xa0] sm:$0xff] %vm5627, %v5615
        %5649 = vst.msk [vmem:[%s440 + $0xa8] sm:$0xff] %vm5627, %v5616
        %5650 = vst.msk [vmem:[%s440 + $0xb0] sm:$0xff] %vm5627, %v5617
        %5651 = vst.msk [vmem:[%s440 + $0xb8] sm:$0xff] %vm5627, %v5618
        %5652 = vst.msk [vmem:[%s440 + $0xc0] sm:$0xff] %vm5627, %v5619
        %5653 = vst.msk [vmem:[%s440 + $0xc8] sm:$0xff] %vm5627, %v5620
        %5654 = vst.msk [vmem:[%s440 + $0xd0] sm:$0xff] %vm5627, %v5621
        %5655 = vst.msk [vmem:[%s440 + $0xd8] sm:$0xff] %vm5627, %v5622
        %5656 = vst.msk [vmem:[%s440 + $0xe0] sm:$0xff] %vm5627, %v5623
        %5657 = vst.msk [vmem:[%s440 + $0xe8] sm:$0xff] %vm5627, %v5624
        %5658 = vst.msk [vmem:[%s440 + $0xf0] sm:$0xff] %vm5627, %v5625
        %5659 = vst.msk [vmem:[%s440 + $0xf8] sm:$0xff] %vm5627, %v5626
        %s5660 = sand.u32 %s293, 1
        %s5661 = scalar_lea.sflag [#allocation6], %s5660
        %s5662 = sand.u32 %s293, 1
        %s5663 = smul.addr %s5662, 256
        %s5664 = scalar_lea.vmem [#allocation9], %s5663
        // Predicated region
        $region77: #{tpu_custom_call.1} parent=67 // pred_check
          %p5665 = pneg %p303
        $region78: #{tpu_custom_call.1} parent=67 // pred_check_branch
          %5667 = sbr.rel (%p5665) target = $region80
        $region79: #{tpu_custom_call.1} parent=67 // pred_region
          %5669 = vsyncadd %s5661, 0
          %s5670 = smul.addr %s28, 32
          %s5671 = smul.addr %s5670, 8
          %s5672 = scalar_lea.hbm %s12, %s5671
          %s5673 = sshll.u32 %s5664, 4
          %s5674 = int_to_ptr.vmem [resolvable:$true] %s5673
          %s5675 = sshll.u32 %s5672, 4
          %s5676 = int_to_ptr.hbm [resolvable:$true] %s5675
          %5681 = dma.vmem_to_hbm [thread:$0]  %s5674, 4096, %s5676, %s5661, 128, 128, 8
        $region80: #{tpu_custom_call.1} parent=67 // pred_fallthru
          _
      $region68: #{tpu_custom_call.1} parent=5 // pred_fallthru
        _
      %p5682 = scmp.le.s32.totalorder 2, %s23
      // Predicated region
      $region81: #{tpu_custom_call.1} parent=5 // pred_check
        %p5683 = pneg %p5682
      $region82: #{tpu_custom_call.1} parent=5 // pred_check_branch
        %5685 = sbr.rel (%p5683) target = $region84
      $region83: #{tpu_custom_call.1} parent=5 // pred_region
        %s5686 = ssub.s32 %s23, 2
        // Predicated region
        $region85: #{tpu_custom_call.1} parent=83 // pred_check
          %p5687 = pneg %p309
        $region86: #{tpu_custom_call.1} parent=83 // pred_check_branch
          %5689 = sbr.rel (%p5687) target = $region88
        $region87: #{tpu_custom_call.1} parent=83 // pred_region
          %s5690 = sand.u32 %s294, 1
          %s5691 = scalar_lea.sflag [#allocation6], %s5690
          %s5692 = sand.u32 %s294, 1
          %s5693 = smul.addr %s5692, 256
          %s5694 = scalar_lea.vmem [#allocation9], %s5693
          %5696 = dma.done %s5691, 4096
        $region88: #{tpu_custom_call.1} parent=83 // pred_fallthru
          _
      $region84: #{tpu_custom_call.1} parent=5 // pred_fallthru
        _
    $region6: #{tpu_custom_call.1} parent=1 // loop_footer
      %s27 = sadd.s32 1, %s23
    $region7: #{tpu_custom_call.1} parent=1 // loop_footer_branch
      %22 = sbr.rel target = $region3
    $region8: #{tpu_custom_call.1} parent=1 // loop_exit
      _
    %5697 = vsyncpa [#allocation5], 1
    %s5698 = scalar_lea.sflag [#allocation5], 1
    %5699 = vsyncpa %s5698, 1
    %5700 = vsyncpa [#allocation8], 1
    %5701 = vsyncpa [#allocation6], 1
    %s5702 = scalar_lea.sflag [#allocation6], 1
    %5703 = vsyncpa %s5702, 1

</llo_original>
